<compile_context>
chip_gen: v7x
topology: tpu7x:2x2x1
jax: 0.10.0
libtpu: 0.0.40
codegen_flags: <defaults>
</compile_context>

<pallas_src>
import math
import functools

import jax
import jax.numpy as jnp
from jax.experimental import pallas as pl
from jax.experimental.pallas import tpu as pltpu

# ----------------------------- config (AttentionConfig) -----------------------------
HIDDEN_DIM = 32
NUM_HEADS = 4
HEAD_DIM = HIDDEN_DIM // NUM_HEADS
FF_DIM = 64
NUM_LAYERS = 2
LN_EPS = 1e-5
NEG_INF = -1e9

# bf16 operands at the MXU boundary, f32 accumulation / elementwise math.
MXU_DTYPE = jnp.bfloat16


# ----------------------------- in-kernel helpers -----------------------------
def _add_norm(x, y, gamma, beta):
    """LayerNorm(x + y) over the last axis (f32). gamma/beta: (1, H)."""
    z = x + y
    mu = jnp.mean(z, axis=-1, keepdims=True)
    var = jnp.mean(jnp.square(z - mu), axis=-1, keepdims=True)
    return (z - mu) * jax.lax.rsqrt(var + LN_EPS) * gamma + beta


def _attention(q, k, v, bias):
    """Head-batched attention with column-block-padded q/k/v.

    q: (NH, S, H), k/v: (NH, N, H); head h's data lives only in columns
    h*HD:(h+1)*HD (zeros elsewhere), so the full-width dot equals the per-head
    dot and the sum over heads of the outputs equals the head concat — no lane
    slicing / concat / transpose needed.  Softmax scale is folded into the
    Q / encoder-K projection weights.  bias: (S, N) or (1, N) additive f32.
    """
    s = jnp.einsum('hqf,hkf->hqk', q.astype(MXU_DTYPE), k.astype(MXU_DTYPE),
                   preferred_element_type=jnp.float32)
    s = s + bias                                        # f32 masking
    s = s - jnp.max(s, axis=-1, keepdims=True)
    p = jnp.exp(s)
    p = p * pl.reciprocal(jnp.sum(p, axis=-1, keepdims=True), approx=True)
    o = jnp.einsum('hqk,hkf->hqf', p.astype(MXU_DTYPE), v.astype(MXU_DTYPE),
                   preferred_element_type=jnp.float32)  # (NH, S, H)
    return jnp.sum(o, axis=0)                           # head merge for free


# ----------------------------- the fused Pallas kernel -----------------------------
def _decoder_stack_kernel(x_ref, tmask_ref, imask_ref, ekv_ref,
                          wqkv_ref, bqkv_ref, wf1_ref, bf1_ref,
                          wf2_ref, bf2_ref, ln_ref, out_ref):
    num_layers = wqkv_ref.shape[0]
    S = x_ref.shape[0]
    NH = NUM_HEADS

    x = x_ref[...]                                      # (S, H) f32

    # Layer-invariant masks, built once per batch block from iota + keep vectors
    # (no materialised O((B*S)^2) bias matrices).
    rows = jax.lax.broadcasted_iota(jnp.int32, (S, S), 0)
    cols = jax.lax.broadcasted_iota(jnp.int32, (S, S), 1)
    self_bias = jnp.where((rows >= cols) & (tmask_ref[...] > 0.5),
                          0.0, NEG_INF).astype(jnp.float32)     # (S, S)
    cross_bias = jnp.where(imask_ref[...] > 0.5,
                           0.0, NEG_INF).astype(jnp.float32)    # (1, T)

    def mxu(a, w):  # bf16 operands, f32 accumulation
        return jnp.dot(a.astype(MXU_DTYPE), w, preferred_element_type=jnp.float32)

    # Static unroll over layers (L is tiny; all weights already resident in VMEM).
    for l in range(num_layers):
        wqkv = wqkv_ref[l]                              # (3*NH, H, H) bf16, head-padded
        bqkv = bqkv_ref[l]                              # (3*NH, 1, H) f32, head-padded
        wf1, bf1 = wf1_ref[l], bf1_ref[l]               # (H, FF) bf16, (1, FF) f32
        wf2, bf2 = wf2_ref[l], bf2_ref[l]               # (FF, H) bf16, (1, H) f32
        ln = ln_ref[l]                                  # (6, H) f32: [g1,g2,g3,b1,b2,b3]

        # ---- masked causal self-attention (heads batched, scale folded in Wq) ----
        xb = jnp.broadcast_to(x.astype(MXU_DTYPE), (3 * NH,) + x.shape)
        qkv = jnp.einsum('gsd,gdf->gsf', xb, wqkv,
                         preferred_element_type=jnp.float32) + bqkv   # (3NH, S, H)
        attn = _attention(qkv[0:NH], qkv[NH:2 * NH], qkv[2 * NH:3 * NH], self_bias)
        h1 = _add_norm(x, attn, ln[0:1], ln[3:4])

        # ---- cross-attention: query = h1 (no projection, per the reference);
        #      encoder K/V precomputed in the wrapper (layer-invariant, K pre-scaled).
        ek = ekv_ref[pl.ds(2 * NH * l, NH)]             # (NH, T, H) bf16
        ev = ekv_ref[pl.ds(2 * NH * l + NH, NH)]        # (NH, T, H) bf16
        h1b = jnp.broadcast_to(h1.astype(MXU_DTYPE), (NH,) + h1.shape)
        cross = _attention(h1b, ek, ev, cross_bias)
        h2 = _add_norm(h1, cross, ln[1:2], ln[4:5])

        # ---- feed-forward ----
        ffh = jnp.maximum(mxu(h2, wf1) + bf1, 0.0)
        ff = mxu(ffh, wf2) + bf2
        x = _add_norm(h2, ff, ln[2:3], ln[5:6])

    out_ref[...] = x.astype(out_ref.dtype)


# ----------------------------- wrapper -----------------------------
def transformer_decoder(target_x, target_mask, encoder_attention, input_mask, params):
    """Whole decoder stack in a single pallas_call (grid parallel over batch)."""
    wqkv, bqkv, wekv, bekv, wf1, bf1, wf2, bf2, ln = params
    B, S, H = target_x.shape
    T = encoder_attention.shape[1]
    L = wqkv.shape[0]
    NH = NUM_HEADS

    x = target_x.astype(jnp.float32)
    tmask = target_mask.reshape(B, 1, S).astype(jnp.float32)
    imask = input_mask.reshape(B, 1, T).astype(jnp.float32)

    # Hoisted, layer-invariant encoder K/V projection: one batched XLA einsum
    # over (batch, layer, head-group); weights are head-block-padded and the K
    # part is pre-scaled by 1/sqrt(HEAD_DIM) at init.
    ekv = jnp.einsum('btd,lgdf->blgtf',
                     encoder_attention.astype(jnp.float32), wekv) + bekv[None]
    ekv = ekv.astype(MXU_DTYPE).reshape(B, L * 2 * NH, T, H)   # (B, L*2NH, T, H)

    out = pl.pallas_call(
        _decoder_stack_kernel,
        out_shape=jax.ShapeDtypeStruct((B, S, H), jnp.float32),
        grid_spec=pltpu.PrefetchScalarGridSpec(
            num_scalar_prefetch=0,
            grid=(B,),
            in_specs=[
                pl.BlockSpec((pl.Squeezed(), S, H), lambda b: (b, 0, 0)),          # target_x
                pl.BlockSpec((pl.Squeezed(), 1, S), lambda b: (b, 0, 0)),          # target_mask
                pl.BlockSpec((pl.Squeezed(), 1, T), lambda b: (b, 0, 0)),          # input_mask
                pl.BlockSpec((pl.Squeezed(), L * 2 * NH, T, H),
                             lambda b: (b, 0, 0, 0)),                              # enc K/V (hoisted)
                pl.BlockSpec((L, 3 * NH, H, H), lambda b: (0, 0, 0, 0)),           # Wqkv (all layers)
                pl.BlockSpec((L, 3 * NH, 1, H), lambda b: (0, 0, 0, 0)),           # bqkv
                pl.BlockSpec((L, H, FF_DIM), lambda b: (0, 0, 0)),                 # Wff1
                pl.BlockSpec((L, 1, FF_DIM), lambda b: (0, 0, 0)),                 # bff1
                pl.BlockSpec((L, FF_DIM, H), lambda b: (0, 0, 0)),                 # Wff2
                pl.BlockSpec((L, 1, H), lambda b: (0, 0, 0)),                      # bff2
                pl.BlockSpec((L, 6, H), lambda b: (0, 0, 0)),                      # LN gamma/beta
            ],
            out_specs=pl.BlockSpec((pl.Squeezed(), S, H), lambda b: (b, 0, 0)),
        ),
        compiler_params=pltpu.CompilerParams(dimension_semantics=("parallel",)),
    )(x, tmask, imask, ekv, wqkv, bqkv, wf1, bf1, wf2, bf2, ln)

    return out


# ----------------------------- deterministic parameter init -----------------------------
def _init_linear(key, d_in, d_out):
    k_w, k_b = jax.random.split(key)
    bound = 1.0 / math.sqrt(d_in)
    w = jax.random.uniform(k_w, (d_in, d_out), jnp.float32, -bound, bound)  # (in,out)=W.T
    b = jax.random.uniform(k_b, (1, d_out), jnp.float32, -bound, bound)
    return w, b


def init_params(key, num_layers=NUM_LAYERS, hidden=HIDDEN_DIM, ff=FF_DIM):
    """Per-layer weights, head-block-padded / head-leading, stacked on a layer axis."""
    H, HD, NH = hidden, hidden // NUM_HEADS, NUM_HEADS
    scale = 1.0 / math.sqrt(HD)

    # headmask[h, f] = 1 iff column f belongs to head h
    headmask = (jnp.arange(H)[None, :] // HD
                == jnp.arange(NH)[:, None]).astype(jnp.float32)          # (NH, H)

    def pad_heads(w, b):
        """(H,H),(1,H) -> (NH,H,H),(NH,1,H): head h keeps only its column block."""
        return (w[None, :, :] * headmask[:, None, :],
                b[None, :, :] * headmask[:, None, :])

    wqkv_l, bqkv_l, wekv_l, bekv_l = [], [], [], []
    wf1_l, bf1_l, wf2_l, bf2_l, ln_l = [], [], [], [], []
    for layer in range(num_layers):
        keys = jax.random.split(jax.random.fold_in(key, layer), 7)
        wq, bq = _init_linear(keys[0], H, H)
        wk, bk = _init_linear(keys[1], H, H)
        wv, bv = _init_linear(keys[2], H, H)
        wek, bek = _init_linear(keys[3], H, H)
        wev, bev = _init_linear(keys[4], H, H)
        wf1, bf1 = _init_linear(keys[5], H, ff)
        wf2, bf2 = _init_linear(keys[6], ff, H)

        # fold 1/sqrt(HD) into the self-attn Q and the encoder-K projections
        wq, bq = wq * scale, bq * scale
        wek, bek = wek * scale, bek * scale

        wq_p, bq_p = pad_heads(wq, bq)
        wk_p, bk_p = pad_heads(wk, bk)
        wv_p, bv_p = pad_heads(wv, bv)
        wek_p, bek_p = pad_heads(wek, bek)
        wev_p, bev_p = pad_heads(wev, bev)

        wqkv_l.append(jnp.concatenate([wq_p, wk_p, wv_p], axis=0))       # (3NH, H, H)
        bqkv_l.append(jnp.concatenate([bq_p, bk_p, bv_p], axis=0))       # (3NH, 1, H)
        wekv_l.append(jnp.concatenate([wek_p, wev_p], axis=0))           # (2NH, H, H)
        bekv_l.append(jnp.concatenate([bek_p, bev_p], axis=0))           # (2NH, 1, H)
        wf1_l.append(wf1); bf1_l.append(bf1)
        wf2_l.append(wf2); bf2_l.append(bf2)
        ln_l.append(jnp.concatenate([jnp.ones((3, H), jnp.float32),      # gammas ln1..3
                                     jnp.zeros((3, H), jnp.float32)],    # betas  ln1..3
                                    axis=0))                             # (6, H)

    return (jnp.stack(wqkv_l).astype(MXU_DTYPE),   # bf16 once, at init
            jnp.stack(bqkv_l),
            jnp.stack(wekv_l),                     # f32: consumed by the wrapper einsum
            jnp.stack(bekv_l),
            jnp.stack(wf1_l).astype(MXU_DTYPE),
            jnp.stack(bf1_l),
            jnp.stack(wf2_l).astype(MXU_DTYPE),
            jnp.stack(bf2_l),
            jnp.stack(ln_l))


# ----------------------------- pure-JAX reference (f32, per-head slicing) -----------------------------
def _ref_mha(q2d, k2d, v2d, bias):
    outs = []
    for h in range(NUM_HEADS):
        sl = slice(h * HEAD_DIM, (h + 1) * HEAD_DIM)
        s = q2d[:, sl] @ k2d[:, sl].T + bias
        p = jax.nn.softmax(s, axis=-1)
        outs.append(p @ v2d[:, sl])
    return jnp.concatenate(outs, axis=-1)


def _ref_addnorm(x, y, gamma, beta):
    z = x + y
    mu = z.mean(-1, keepdims=True)
    var = ((z - mu) ** 2).mean(-1, keepdims=True)
    return (z - mu) / jnp.sqrt(var + LN_EPS) * gamma + beta


def reference_decoder(target_x, target_mask, encoder_attention, input_mask, params):
    wqkv, bqkv, wekv, bekv, wf1, bf1, wf2, bf2, ln = params
    wqkv = wqkv.astype(jnp.float32)
    wf1 = wf1.astype(jnp.float32)
    wf2 = wf2.astype(jnp.float32)
    B, S, _ = target_x.shape
    NH = NUM_HEADS
    outs = []
    for b in range(B):
        x = target_x[b].astype(jnp.float32)
        enc = encoder_attention[b].astype(jnp.float32)
        rows = jnp.arange(S)[:, None]
        cols = jnp.arange(S)[None, :]
        sbias = jnp.where((rows >= cols) & (target_mask[b][None, :] > 0.5), 0.0, NEG_INF)
        cbias = jnp.where(input_mask[b][None, :] > 0.5, 0.0, NEG_INF)
        for l in range(wqkv.shape[0]):
            wq, bq = wqkv[l, 0:NH].sum(0), bqkv[l, 0:NH].sum(0)
            wk, bk = wqkv[l, NH:2 * NH].sum(0), bqkv[l, NH:2 * NH].sum(0)
            wv, bv = wqkv[l, 2 * NH:].sum(0), bqkv[l, 2 * NH:].sum(0)
            wek, bek = wekv[l, 0:NH].sum(0), bekv[l, 0:NH].sum(0)
            wev, bev = wekv[l, NH:].sum(0), bekv[l, NH:].sum(0)
            attn = _ref_mha(x @ wq + bq, x @ wk + bk, x @ wv + bv, sbias)
            h1 = _ref_addnorm(x, attn, ln[l, 0:1], ln[l, 3:4])
            cross = _ref_mha(h1, enc @ wek + bek, enc @ wev + bev, cbias)
            h2 = _ref_addnorm(h1, cross, ln[l, 1:2], ln[l, 4:5])
            ff = jnp.maximum(h2 @ wf1[l] + bf1[l], 0.0) @ wf2[l] + bf2[l]
            x = _ref_addnorm(h2, ff, ln[l, 2:3], ln[l, 5:6])
        outs.append(x)
    return jnp.stack(outs)


# ----------------------------- main -----------------------------
if __name__ == "__main__":
    B, S, T, H = 2, 8, 8, HIDDEN_DIM

    key = jax.random.PRNGKey(0)
    k_x, k_enc, k_p = jax.random.split(key, 3)

    target_x = jax.random.normal(k_x, (B, S, H), jnp.float32)
    encoder_attention = jax.random.normal(k_enc, (B, T, H), jnp.float32)

    # masks: 1.0 = attend, 0.0 = padding; pad last 2 target tokens / last input
    # token of batch element 1 to exercise masking.
    target_mask = jnp.ones((B, S), jnp.float32).at[1, -2:].set(0.0)
    input_mask = jnp.ones((B, T), jnp.float32).at[1, -1:].set(0.0)

    params = init_params(k_p)

    run = jax.jit(functools.partial(transformer_decoder, params=params))
    out = jax.block_until_ready(run(target_x, target_mask, encoder_attention, input_mask))

    assert out.shape == (B, S, H) and out.dtype == jnp.float32
    assert bool(jnp.all(jnp.isfinite(out)))

    # Loose-tolerance check against the f32 per-head-slicing reference
    # (kernel uses bf16 MXU operands + approx reciprocal -> ~1e-2 level drift).
    ref = reference_decoder(target_x, target_mask, encoder_attention, input_mask, params)
    assert float(jnp.max(jnp.abs(out - ref))) < 0.25

    print("KERNEL_OK")
</pallas_src>

<mosaic_0001>
module attributes {stable_mosaic.version = 11 : i64} {
  func.func @_decoder_stack_kernel(%arg0: i32, %arg1: memref<1x8x32xf32, #tpu.memory_space<vmem>>, %arg2: memref<1x1x8xf32, #tpu.memory_space<vmem>>, %arg3: memref<1x1x8xf32, #tpu.memory_space<vmem>>, %arg4: memref<1x16x8x32xbf16, #tpu.memory_space<vmem>>, %arg5: memref<2x12x32x32xbf16, #tpu.memory_space<vmem>>, %arg6: memref<2x12x1x32xf32, #tpu.memory_space<vmem>>, %arg7: memref<2x32x64xbf16, #tpu.memory_space<vmem>>, %arg8: memref<2x1x64xf32, #tpu.memory_space<vmem>>, %arg9: memref<2x64x32xbf16, #tpu.memory_space<vmem>>, %arg10: memref<2x1x32xf32, #tpu.memory_space<vmem>>, %arg11: memref<2x6x32xf32, #tpu.memory_space<vmem>>, %arg12: memref<1x8x32xf32, #tpu.memory_space<vmem>>) attributes {dimension_semantics = [#tpu.dimension_semantics<parallel>], iteration_bounds = array<i64: 2>, scalar_prefetch = 0 : i64, scratch_operands = 0 : i64, tpu.core_type = #tpu.core_type<tc>, window_params = [{transform_indices = @transform_0, window_bounds = array<i64: 1, 8, 32>}, {transform_indices = @transform_1, window_bounds = array<i64: 1, 1, 8>}, {transform_indices = @transform_2, window_bounds = array<i64: 1, 1, 8>}, {transform_indices = @transform_3, window_bounds = array<i64: 1, 16, 8, 32>}, {pipeline_mode = #tpu.pipeline_mode<synchronous>, transform_indices = @transform_4, window_bounds = array<i64: 2, 12, 32, 32>}, {pipeline_mode = #tpu.pipeline_mode<synchronous>, transform_indices = @transform_5, window_bounds = array<i64: 2, 12, 1, 32>}, {pipeline_mode = #tpu.pipeline_mode<synchronous>, transform_indices = @transform_6, window_bounds = array<i64: 2, 32, 64>}, {pipeline_mode = #tpu.pipeline_mode<synchronous>, transform_indices = @transform_7, window_bounds = array<i64: 2, 1, 64>}, {pipeline_mode = #tpu.pipeline_mode<synchronous>, transform_indices = @transform_8, window_bounds = array<i64: 2, 64, 32>}, {pipeline_mode = #tpu.pipeline_mode<synchronous>, transform_indices = @transform_9, window_bounds = array<i64: 2, 1, 32>}, {pipeline_mode = #tpu.pipeline_mode<synchronous>, transform_indices = @transform_10, window_bounds = array<i64: 2, 6, 32>}, {transform_indices = @transform_11, window_bounds = array<i64: 1, 8, 32>}]} {
    %c0 = arith.constant 0 : index
    %c0_0 = arith.constant 0 : index
    %c0_1 = arith.constant 0 : index
    %0 = vector.load %arg1[%c0, %c0_0, %c0_1] : memref<1x8x32xf32, #tpu.memory_space<vmem>>, vector<1x8x32xf32>
    %1 = vector.shape_cast %0 : vector<1x8x32xf32> to vector<8x32xf32>
    %2 = tpu.iota {dimensions = array<i32: 0>} : vector<8x8xi32>
    %3 = tpu.iota {dimensions = array<i32: 1>} : vector<8x8xi32>
    %4 = arith.cmpi sge, %2, %3 : vector<8x8xi32>
    %c0_2 = arith.constant 0 : index
    %c0_3 = arith.constant 0 : index
    %c0_4 = arith.constant 0 : index
    %5 = vector.load %arg2[%c0_2, %c0_3, %c0_4] : memref<1x1x8xf32, #tpu.memory_space<vmem>>, vector<1x1x8xf32>
    %6 = vector.shape_cast %5 : vector<1x1x8xf32> to vector<1x8xf32>
    %cst = arith.constant 5.000000e-01 : f32
    %7 = vector.broadcast %cst : f32 to vector<1x8xf32>
    %8 = arith.cmpf ogt, %6, %7 : vector<1x8xf32>
    %9 = vector.broadcast %8 : vector<1x8xi1> to vector<8x8xi1>
    %10 = arith.andi %4, %9 : vector<8x8xi1>
    %cst_5 = arith.constant 0.000000e+00 : f32
    %cst_6 = arith.constant -1.000000e+09 : f32
    %11 = vector.broadcast %cst_5 : f32 to vector<8x8xf32>
    %12 = vector.broadcast %cst_6 : f32 to vector<8x8xf32>
    %13 = arith.select %10, %11, %12 : vector<8x8xi1>, vector<8x8xf32>
    %c0_7 = arith.constant 0 : index
    %c0_8 = arith.constant 0 : index
    %c0_9 = arith.constant 0 : index
    %14 = vector.load %arg3[%c0_7, %c0_8, %c0_9] : memref<1x1x8xf32, #tpu.memory_space<vmem>>, vector<1x1x8xf32>
    %15 = vector.shape_cast %14 : vector<1x1x8xf32> to vector<1x8xf32>
    %cst_10 = arith.constant 5.000000e-01 : f32
    %16 = vector.broadcast %cst_10 : f32 to vector<1x8xf32>
    %17 = arith.cmpf ogt, %15, %16 : vector<1x8xf32>
    %cst_11 = arith.constant 0.000000e+00 : f32
    %cst_12 = arith.constant -1.000000e+09 : f32
    %18 = vector.broadcast %cst_11 : f32 to vector<1x8xf32>
    %19 = vector.broadcast %cst_12 : f32 to vector<1x8xf32>
    %20 = arith.select %17, %18, %19 : vector<1x8xi1>, vector<1x8xf32>
    %c0_13 = arith.constant 0 : index
    %c0_14 = arith.constant 0 : index
    %c0_15 = arith.constant 0 : index
    %c0_16 = arith.constant 0 : index
    %21 = vector.load %arg5[%c0_13, %c0_14, %c0_15, %c0_16] : memref<2x12x32x32xbf16, #tpu.memory_space<vmem>>, vector<1x12x32x32xbf16>
    %22 = vector.shape_cast %21 : vector<1x12x32x32xbf16> to vector<12x32x32xbf16>
    %c0_17 = arith.constant 0 : index
    %c0_18 = arith.constant 0 : index
    %c0_19 = arith.constant 0 : index
    %c0_20 = arith.constant 0 : index
    %23 = vector.load %arg6[%c0_17, %c0_18, %c0_19, %c0_20] : memref<2x12x1x32xf32, #tpu.memory_space<vmem>>, vector<1x12x1x32xf32>
    %24 = vector.shape_cast %23 : vector<1x12x1x32xf32> to vector<12x1x32xf32>
    %c0_21 = arith.constant 0 : index
    %c0_22 = arith.constant 0 : index
    %c0_23 = arith.constant 0 : index
    %25 = vector.load %arg7[%c0_21, %c0_22, %c0_23] : memref<2x32x64xbf16, #tpu.memory_space<vmem>>, vector<1x32x64xbf16>
    %26 = vector.shape_cast %25 : vector<1x32x64xbf16> to vector<32x64xbf16>
    %c0_24 = arith.constant 0 : index
    %c0_25 = arith.constant 0 : index
    %c0_26 = arith.constant 0 : index
    %27 = vector.load %arg8[%c0_24, %c0_25, %c0_26] : memref<2x1x64xf32, #tpu.memory_space<vmem>>, vector<1x1x64xf32>
    %28 = vector.shape_cast %27 : vector<1x1x64xf32> to vector<1x64xf32>
    %c0_27 = arith.constant 0 : index
    %c0_28 = arith.constant 0 : index
    %c0_29 = arith.constant 0 : index
    %29 = vector.load %arg9[%c0_27, %c0_28, %c0_29] : memref<2x64x32xbf16, #tpu.memory_space<vmem>>, vector<1x64x32xbf16>
    %30 = vector.shape_cast %29 : vector<1x64x32xbf16> to vector<64x32xbf16>
    %c0_30 = arith.constant 0 : index
    %c0_31 = arith.constant 0 : index
    %c0_32 = arith.constant 0 : index
    %31 = vector.load %arg10[%c0_30, %c0_31, %c0_32] : memref<2x1x32xf32, #tpu.memory_space<vmem>>, vector<1x1x32xf32>
    %32 = vector.shape_cast %31 : vector<1x1x32xf32> to vector<1x32xf32>
    %c0_33 = arith.constant 0 : index
    %c0_34 = arith.constant 0 : index
    %c0_35 = arith.constant 0 : index
    %33 = vector.load %arg11[%c0_33, %c0_34, %c0_35] : memref<2x6x32xf32, #tpu.memory_space<vmem>>, vector<1x6x32xf32>
    %34 = vector.shape_cast %33 : vector<1x6x32xf32> to vector<6x32xf32>
    %35 = arith.truncf %1 : vector<8x32xf32> to vector<8x32xbf16>
    %36 = vector.shape_cast %35 : vector<8x32xbf16> to vector<1x8x32xbf16>
    %37 = vector.broadcast %36 : vector<1x8x32xbf16> to vector<12x8x32xbf16>
    "tpu.trace_start"() <{level = 10 : i32, message = "gsd,gdf->gsf"}> : () -> ()
    %cst_36 = arith.constant dense<0.000000e+00> : vector<12x8x32xf32>
    %38 = tpu.matmul %37, %22, %cst_36 {dimension_numbers = #tpu.dot_dimension_numbers<[2], [1], [1], [2], [0, 0, 0, 1, 1, 2], [0], [0]>} : vector<12x8x32xbf16>, vector<12x32x32xbf16>, vector<12x8x32xf32> -> vector<12x8x32xf32>
    "tpu.trace_stop"() : () -> ()
    %39 = vector.broadcast %24 : vector<12x1x32xf32> to vector<12x8x32xf32>
    %40 = arith.addf %38, %39 : vector<12x8x32xf32>
    %41 = vector.extract_strided_slice %40 {offsets = [0, 0, 0], sizes = [4, 8, 32], strides = [1, 1, 1]} : vector<12x8x32xf32> to vector<4x8x32xf32>
    %42 = vector.extract_strided_slice %40 {offsets = [4, 0, 0], sizes = [4, 8, 32], strides = [1, 1, 1]} : vector<12x8x32xf32> to vector<4x8x32xf32>
    %43 = vector.extract_strided_slice %40 {offsets = [8, 0, 0], sizes = [4, 8, 32], strides = [1, 1, 1]} : vector<12x8x32xf32> to vector<4x8x32xf32>
    %44 = arith.truncf %41 : vector<4x8x32xf32> to vector<4x8x32xbf16>
    %45 = arith.truncf %42 : vector<4x8x32xf32> to vector<4x8x32xbf16>
    "tpu.trace_start"() <{level = 10 : i32, message = "hqf,hkf->hqk"}> : () -> ()
    %cst_37 = arith.constant dense<0.000000e+00> : vector<4x8x8xf32>
    %46 = tpu.matmul %44, %45, %cst_37 {dimension_numbers = #tpu.dot_dimension_numbers<[2], [2], [1], [1], [0, 0, 0, 1, 1, 1], [0], [0]>} : vector<4x8x32xbf16>, vector<4x8x32xbf16>, vector<4x8x8xf32> -> vector<4x8x8xf32>
    "tpu.trace_stop"() : () -> ()
    %47 = vector.shape_cast %13 : vector<8x8xf32> to vector<1x8x8xf32>
    %48 = vector.broadcast %47 : vector<1x8x8xf32> to vector<4x8x8xf32>
    %49 = arith.addf %46, %48 : vector<4x8x8xf32>
    %cst_38 = arith.constant dense<0xFF800000> : vector<4x8xf32>
    %50 = vector.multi_reduction <maximumf>, %49, %cst_38 [2] : vector<4x8x8xf32> to vector<4x8xf32>
    %51 = vector.shape_cast %50 : vector<4x8xf32> to vector<4x8x1xf32>
    %52 = vector.broadcast %51 : vector<4x8x1xf32> to vector<4x8x8xf32>
    %53 = arith.subf %49, %52 : vector<4x8x8xf32>
    %54 = math.exp %53 : vector<4x8x8xf32>
    %cst_39 = arith.constant dense<0.000000e+00> : vector<4x8xf32>
    %55 = vector.multi_reduction <add>, %54, %cst_39 [2] : vector<4x8x8xf32> to vector<4x8xf32>
    %56 = vector.shape_cast %55 : vector<4x8xf32> to vector<4x8x1xf32>
    %57 = tpu.reciprocal %56 {approx = true} : vector<4x8x1xf32> -> vector<4x8x1xf32>
    %58 = vector.broadcast %57 : vector<4x8x1xf32> to vector<4x8x8xf32>
    %59 = arith.mulf %54, %58 : vector<4x8x8xf32>
    %60 = arith.truncf %59 : vector<4x8x8xf32> to vector<4x8x8xbf16>
    %61 = arith.truncf %43 : vector<4x8x32xf32> to vector<4x8x32xbf16>
    "tpu.trace_start"() <{level = 10 : i32, message = "hqk,hkf->hqf"}> : () -> ()
    %cst_40 = arith.constant dense<0.000000e+00> : vector<4x8x32xf32>
    %62 = tpu.matmul %60, %61, %cst_40 {dimension_numbers = #tpu.dot_dimension_numbers<[2], [1], [1], [2], [0, 0, 0, 1, 1, 2], [0], [0]>} : vector<4x8x8xbf16>, vector<4x8x32xbf16>, vector<4x8x32xf32> -> vector<4x8x32xf32>
    "tpu.trace_stop"() : () -> ()
    %cst_41 = arith.constant dense<0.000000e+00> : vector<8x32xf32>
    %63 = vector.multi_reduction <add>, %62, %cst_41 [0] : vector<4x8x32xf32> to vector<8x32xf32>
    %64 = vector.extract_strided_slice %34 {offsets = [0, 0], sizes = [1, 32], strides = [1, 1]} : vector<6x32xf32> to vector<1x32xf32>
    %65 = vector.extract_strided_slice %34 {offsets = [3, 0], sizes = [1, 32], strides = [1, 1]} : vector<6x32xf32> to vector<1x32xf32>
    %66 = arith.addf %1, %63 : vector<8x32xf32>
    %cst_42 = arith.constant dense<0.000000e+00> : vector<8xf32>
    %67 = vector.multi_reduction <add>, %66, %cst_42 [1] : vector<8x32xf32> to vector<8xf32>
    %68 = vector.shape_cast %67 : vector<8xf32> to vector<8x1xf32>
    %cst_43 = arith.constant 3.200000e+01 : f32
    %69 = vector.broadcast %cst_43 : f32 to vector<8x1xf32>
    %70 = arith.divf %68, %69 : vector<8x1xf32>
    %71 = vector.broadcast %70 : vector<8x1xf32> to vector<8x32xf32>
    %72 = arith.subf %66, %71 : vector<8x32xf32>
    %73 = arith.mulf %72, %72 : vector<8x32xf32>
    %cst_44 = arith.constant dense<0.000000e+00> : vector<8xf32>
    %74 = vector.multi_reduction <add>, %73, %cst_44 [1] : vector<8x32xf32> to vector<8xf32>
    %75 = vector.shape_cast %74 : vector<8xf32> to vector<8x1xf32>
    %cst_45 = arith.constant 3.200000e+01 : f32
    %76 = vector.broadcast %cst_45 : f32 to vector<8x1xf32>
    %77 = arith.divf %75, %76 : vector<8x1xf32>
    %78 = vector.broadcast %70 : vector<8x1xf32> to vector<8x32xf32>
    %79 = arith.subf %66, %78 : vector<8x32xf32>
    %cst_46 = arith.constant 9.99999974E-6 : f32
    %80 = vector.broadcast %cst_46 : f32 to vector<8x1xf32>
    %81 = arith.addf %77, %80 : vector<8x1xf32>
    %82 = math.rsqrt %81 : vector<8x1xf32>
    %83 = vector.broadcast %82 : vector<8x1xf32> to vector<8x32xf32>
    %84 = arith.mulf %79, %83 : vector<8x32xf32>
    %85 = vector.broadcast %64 : vector<1x32xf32> to vector<8x32xf32>
    %86 = arith.mulf %84, %85 : vector<8x32xf32>
    %87 = vector.broadcast %65 : vector<1x32xf32> to vector<8x32xf32>
    %88 = arith.addf %86, %87 : vector<8x32xf32>
    %c0_47 = arith.constant 0 : index
    %c0_48 = arith.constant 0 : index
    %c0_49 = arith.constant 0 : index
    %c0_50 = arith.constant 0 : index
    %89 = vector.load %arg4[%c0_47, %c0_48, %c0_49, %c0_50] : memref<1x16x8x32xbf16, #tpu.memory_space<vmem>>, vector<1x4x8x32xbf16>
    %90 = vector.shape_cast %89 : vector<1x4x8x32xbf16> to vector<4x8x32xbf16>
    %c0_51 = arith.constant 0 : index
    %c4 = arith.constant 4 : index
    %c0_52 = arith.constant 0 : index
    %c0_53 = arith.constant 0 : index
    %91 = vector.load %arg4[%c0_51, %c4, %c0_52, %c0_53] : memref<1x16x8x32xbf16, #tpu.memory_space<vmem>>, vector<1x4x8x32xbf16>
    %92 = vector.shape_cast %91 : vector<1x4x8x32xbf16> to vector<4x8x32xbf16>
    %93 = arith.truncf %88 : vector<8x32xf32> to vector<8x32xbf16>
    %94 = vector.shape_cast %93 : vector<8x32xbf16> to vector<1x8x32xbf16>
    %95 = vector.broadcast %94 : vector<1x8x32xbf16> to vector<4x8x32xbf16>
    "tpu.trace_start"() <{level = 10 : i32, message = "hqf,hkf->hqk"}> : () -> ()
    %cst_54 = arith.constant dense<0.000000e+00> : vector<4x8x8xf32>
    %96 = tpu.matmul %95, %90, %cst_54 {dimension_numbers = #tpu.dot_dimension_numbers<[2], [2], [1], [1], [0, 0, 0, 1, 1, 1], [0], [0]>} : vector<4x8x32xbf16>, vector<4x8x32xbf16>, vector<4x8x8xf32> -> vector<4x8x8xf32>
    "tpu.trace_stop"() : () -> ()
    %97 = vector.shape_cast %20 : vector<1x8xf32> to vector<1x1x8xf32>
    %98 = vector.broadcast %97 : vector<1x1x8xf32> to vector<4x8x8xf32>
    %99 = arith.addf %96, %98 : vector<4x8x8xf32>
    %cst_55 = arith.constant dense<0xFF800000> : vector<4x8xf32>
    %100 = vector.multi_reduction <maximumf>, %99, %cst_55 [2] : vector<4x8x8xf32> to vector<4x8xf32>
    %101 = vector.shape_cast %100 : vector<4x8xf32> to vector<4x8x1xf32>
    %102 = vector.broadcast %101 : vector<4x8x1xf32> to vector<4x8x8xf32>
    %103 = arith.subf %99, %102 : vector<4x8x8xf32>
    %104 = math.exp %103 : vector<4x8x8xf32>
    %cst_56 = arith.constant dense<0.000000e+00> : vector<4x8xf32>
    %105 = vector.multi_reduction <add>, %104, %cst_56 [2] : vector<4x8x8xf32> to vector<4x8xf32>
    %106 = vector.shape_cast %105 : vector<4x8xf32> to vector<4x8x1xf32>
    %107 = tpu.reciprocal %106 {approx = true} : vector<4x8x1xf32> -> vector<4x8x1xf32>
    %108 = vector.broadcast %107 : vector<4x8x1xf32> to vector<4x8x8xf32>
    %109 = arith.mulf %104, %108 : vector<4x8x8xf32>
    %110 = arith.truncf %109 : vector<4x8x8xf32> to vector<4x8x8xbf16>
    "tpu.trace_start"() <{level = 10 : i32, message = "hqk,hkf->hqf"}> : () -> ()
    %cst_57 = arith.constant dense<0.000000e+00> : vector<4x8x32xf32>
    %111 = tpu.matmul %110, %92, %cst_57 {dimension_numbers = #tpu.dot_dimension_numbers<[2], [1], [1], [2], [0, 0, 0, 1, 1, 2], [0], [0]>} : vector<4x8x8xbf16>, vector<4x8x32xbf16>, vector<4x8x32xf32> -> vector<4x8x32xf32>
    "tpu.trace_stop"() : () -> ()
    %cst_58 = arith.constant dense<0.000000e+00> : vector<8x32xf32>
    %112 = vector.multi_reduction <add>, %111, %cst_58 [0] : vector<4x8x32xf32> to vector<8x32xf32>
    %113 = vector.extract_strided_slice %34 {offsets = [1, 0], sizes = [1, 32], strides = [1, 1]} : vector<6x32xf32> to vector<1x32xf32>
    %114 = vector.extract_strided_slice %34 {offsets = [4, 0], sizes = [1, 32], strides = [1, 1]} : vector<6x32xf32> to vector<1x32xf32>
    %115 = arith.addf %88, %112 : vector<8x32xf32>
    %cst_59 = arith.constant dense<0.000000e+00> : vector<8xf32>
    %116 = vector.multi_reduction <add>, %115, %cst_59 [1] : vector<8x32xf32> to vector<8xf32>
    %117 = vector.shape_cast %116 : vector<8xf32> to vector<8x1xf32>
    %cst_60 = arith.constant 3.200000e+01 : f32
    %118 = vector.broadcast %cst_60 : f32 to vector<8x1xf32>
    %119 = arith.divf %117, %118 : vector<8x1xf32>
    %120 = vector.broadcast %119 : vector<8x1xf32> to vector<8x32xf32>
    %121 = arith.subf %115, %120 : vector<8x32xf32>
    %122 = arith.mulf %121, %121 : vector<8x32xf32>
    %cst_61 = arith.constant dense<0.000000e+00> : vector<8xf32>
    %123 = vector.multi_reduction <add>, %122, %cst_61 [1] : vector<8x32xf32> to vector<8xf32>
    %124 = vector.shape_cast %123 : vector<8xf32> to vector<8x1xf32>
    %cst_62 = arith.constant 3.200000e+01 : f32
    %125 = vector.broadcast %cst_62 : f32 to vector<8x1xf32>
    %126 = arith.divf %124, %125 : vector<8x1xf32>
    %127 = vector.broadcast %119 : vector<8x1xf32> to vector<8x32xf32>
    %128 = arith.subf %115, %127 : vector<8x32xf32>
    %cst_63 = arith.constant 9.99999974E-6 : f32
    %129 = vector.broadcast %cst_63 : f32 to vector<8x1xf32>
    %130 = arith.addf %126, %129 : vector<8x1xf32>
    %131 = math.rsqrt %130 : vector<8x1xf32>
    %132 = vector.broadcast %131 : vector<8x1xf32> to vector<8x32xf32>
    %133 = arith.mulf %128, %132 : vector<8x32xf32>
    %134 = vector.broadcast %113 : vector<1x32xf32> to vector<8x32xf32>
    %135 = arith.mulf %133, %134 : vector<8x32xf32>
    %136 = vector.broadcast %114 : vector<1x32xf32> to vector<8x32xf32>
    %137 = arith.addf %135, %136 : vector<8x32xf32>
    %138 = arith.truncf %137 : vector<8x32xf32> to vector<8x32xbf16>
    %cst_64 = arith.constant dense<0.000000e+00> : vector<8x64xf32>
    %139 = tpu.matmul %138, %26, %cst_64 {dimension_numbers = #tpu.dot_dimension_numbers<[1], [0], [0], [1], [0, 0, 1, 1], [], []>} : vector<8x32xbf16>, vector<32x64xbf16>, vector<8x64xf32> -> vector<8x64xf32>
    %140 = vector.broadcast %28 : vector<1x64xf32> to vector<8x64xf32>
    %141 = arith.addf %139, %140 : vector<8x64xf32>
    %cst_65 = arith.constant 0.000000e+00 : f32
    %142 = vector.broadcast %cst_65 : f32 to vector<8x64xf32>
    %143 = arith.maximumf %141, %142 : vector<8x64xf32>
    %144 = arith.truncf %143 : vector<8x64xf32> to vector<8x64xbf16>
    %cst_66 = arith.constant dense<0.000000e+00> : vector<8x32xf32>
    %145 = tpu.matmul %144, %30, %cst_66 {dimension_numbers = #tpu.dot_dimension_numbers<[1], [0], [0], [1], [0, 0, 1, 1], [], []>} : vector<8x64xbf16>, vector<64x32xbf16>, vector<8x32xf32> -> vector<8x32xf32>
    %146 = vector.broadcast %32 : vector<1x32xf32> to vector<8x32xf32>
    %147 = arith.addf %145, %146 : vector<8x32xf32>
    %148 = vector.extract_strided_slice %34 {offsets = [2, 0], sizes = [1, 32], strides = [1, 1]} : vector<6x32xf32> to vector<1x32xf32>
    %149 = vector.extract_strided_slice %34 {offsets = [5, 0], sizes = [1, 32], strides = [1, 1]} : vector<6x32xf32> to vector<1x32xf32>
    %150 = arith.addf %137, %147 : vector<8x32xf32>
    %cst_67 = arith.constant dense<0.000000e+00> : vector<8xf32>
    %151 = vector.multi_reduction <add>, %150, %cst_67 [1] : vector<8x32xf32> to vector<8xf32>
    %152 = vector.shape_cast %151 : vector<8xf32> to vector<8x1xf32>
    %cst_68 = arith.constant 3.200000e+01 : f32
    %153 = vector.broadcast %cst_68 : f32 to vector<8x1xf32>
    %154 = arith.divf %152, %153 : vector<8x1xf32>
    %155 = vector.broadcast %154 : vector<8x1xf32> to vector<8x32xf32>
    %156 = arith.subf %150, %155 : vector<8x32xf32>
    %157 = arith.mulf %156, %156 : vector<8x32xf32>
    %cst_69 = arith.constant dense<0.000000e+00> : vector<8xf32>
    %158 = vector.multi_reduction <add>, %157, %cst_69 [1] : vector<8x32xf32> to vector<8xf32>
    %159 = vector.shape_cast %158 : vector<8xf32> to vector<8x1xf32>
    %cst_70 = arith.constant 3.200000e+01 : f32
    %160 = vector.broadcast %cst_70 : f32 to vector<8x1xf32>
    %161 = arith.divf %159, %160 : vector<8x1xf32>
    %162 = vector.broadcast %154 : vector<8x1xf32> to vector<8x32xf32>
    %163 = arith.subf %150, %162 : vector<8x32xf32>
    %cst_71 = arith.constant 9.99999974E-6 : f32
    %164 = vector.broadcast %cst_71 : f32 to vector<8x1xf32>
    %165 = arith.addf %161, %164 : vector<8x1xf32>
    %166 = math.rsqrt %165 : vector<8x1xf32>
    %167 = vector.broadcast %166 : vector<8x1xf32> to vector<8x32xf32>
    %168 = arith.mulf %163, %167 : vector<8x32xf32>
    %169 = vector.broadcast %148 : vector<1x32xf32> to vector<8x32xf32>
    %170 = arith.mulf %168, %169 : vector<8x32xf32>
    %171 = vector.broadcast %149 : vector<1x32xf32> to vector<8x32xf32>
    %172 = arith.addf %170, %171 : vector<8x32xf32>
    %c1 = arith.constant 1 : index
    %c0_72 = arith.constant 0 : index
    %c0_73 = arith.constant 0 : index
    %c0_74 = arith.constant 0 : index
    %173 = vector.load %arg5[%c1, %c0_72, %c0_73, %c0_74] : memref<2x12x32x32xbf16, #tpu.memory_space<vmem>>, vector<1x12x32x32xbf16>
    %174 = vector.shape_cast %173 : vector<1x12x32x32xbf16> to vector<12x32x32xbf16>
    %c1_75 = arith.constant 1 : index
    %c0_76 = arith.constant 0 : index
    %c0_77 = arith.constant 0 : index
    %c0_78 = arith.constant 0 : index
    %175 = vector.load %arg6[%c1_75, %c0_76, %c0_77, %c0_78] : memref<2x12x1x32xf32, #tpu.memory_space<vmem>>, vector<1x12x1x32xf32>
    %176 = vector.shape_cast %175 : vector<1x12x1x32xf32> to vector<12x1x32xf32>
    %c1_79 = arith.constant 1 : index
    %c0_80 = arith.constant 0 : index
    %c0_81 = arith.constant 0 : index
    %177 = vector.load %arg7[%c1_79, %c0_80, %c0_81] : memref<2x32x64xbf16, #tpu.memory_space<vmem>>, vector<1x32x64xbf16>
    %178 = vector.shape_cast %177 : vector<1x32x64xbf16> to vector<32x64xbf16>
    %c1_82 = arith.constant 1 : index
    %c0_83 = arith.constant 0 : index
    %c0_84 = arith.constant 0 : index
    %179 = vector.load %arg8[%c1_82, %c0_83, %c0_84] : memref<2x1x64xf32, #tpu.memory_space<vmem>>, vector<1x1x64xf32>
    %180 = vector.shape_cast %179 : vector<1x1x64xf32> to vector<1x64xf32>
    %c1_85 = arith.constant 1 : index
    %c0_86 = arith.constant 0 : index
    %c0_87 = arith.constant 0 : index
    %181 = vector.load %arg9[%c1_85, %c0_86, %c0_87] : memref<2x64x32xbf16, #tpu.memory_space<vmem>>, vector<1x64x32xbf16>
    %182 = vector.shape_cast %181 : vector<1x64x32xbf16> to vector<64x32xbf16>
    %c1_88 = arith.constant 1 : index
    %c0_89 = arith.constant 0 : index
    %c0_90 = arith.constant 0 : index
    %183 = vector.load %arg10[%c1_88, %c0_89, %c0_90] : memref<2x1x32xf32, #tpu.memory_space<vmem>>, vector<1x1x32xf32>
    %184 = vector.shape_cast %183 : vector<1x1x32xf32> to vector<1x32xf32>
    %c1_91 = arith.constant 1 : index
    %c0_92 = arith.constant 0 : index
    %c0_93 = arith.constant 0 : index
    %185 = vector.load %arg11[%c1_91, %c0_92, %c0_93] : memref<2x6x32xf32, #tpu.memory_space<vmem>>, vector<1x6x32xf32>
    %186 = vector.shape_cast %185 : vector<1x6x32xf32> to vector<6x32xf32>
    %187 = arith.truncf %172 : vector<8x32xf32> to vector<8x32xbf16>
    %188 = vector.shape_cast %187 : vector<8x32xbf16> to vector<1x8x32xbf16>
    %189 = vector.broadcast %188 : vector<1x8x32xbf16> to vector<12x8x32xbf16>
    "tpu.trace_start"() <{level = 10 : i32, message = "gsd,gdf->gsf"}> : () -> ()
    %cst_94 = arith.constant dense<0.000000e+00> : vector<12x8x32xf32>
    %190 = tpu.matmul %189, %174, %cst_94 {dimension_numbers = #tpu.dot_dimension_numbers<[2], [1], [1], [2], [0, 0, 0, 1, 1, 2], [0], [0]>} : vector<12x8x32xbf16>, vector<12x32x32xbf16>, vector<12x8x32xf32> -> vector<12x8x32xf32>
    "tpu.trace_stop"() : () -> ()
    %191 = vector.broadcast %176 : vector<12x1x32xf32> to vector<12x8x32xf32>
    %192 = arith.addf %190, %191 : vector<12x8x32xf32>
    %193 = vector.extract_strided_slice %192 {offsets = [0, 0, 0], sizes = [4, 8, 32], strides = [1, 1, 1]} : vector<12x8x32xf32> to vector<4x8x32xf32>
    %194 = vector.extract_strided_slice %192 {offsets = [4, 0, 0], sizes = [4, 8, 32], strides = [1, 1, 1]} : vector<12x8x32xf32> to vector<4x8x32xf32>
    %195 = vector.extract_strided_slice %192 {offsets = [8, 0, 0], sizes = [4, 8, 32], strides = [1, 1, 1]} : vector<12x8x32xf32> to vector<4x8x32xf32>
    %196 = arith.truncf %193 : vector<4x8x32xf32> to vector<4x8x32xbf16>
    %197 = arith.truncf %194 : vector<4x8x32xf32> to vector<4x8x32xbf16>
    "tpu.trace_start"() <{level = 10 : i32, message = "hqf,hkf->hqk"}> : () -> ()
    %cst_95 = arith.constant dense<0.000000e+00> : vector<4x8x8xf32>
    %198 = tpu.matmul %196, %197, %cst_95 {dimension_numbers = #tpu.dot_dimension_numbers<[2], [2], [1], [1], [0, 0, 0, 1, 1, 1], [0], [0]>} : vector<4x8x32xbf16>, vector<4x8x32xbf16>, vector<4x8x8xf32> -> vector<4x8x8xf32>
    "tpu.trace_stop"() : () -> ()
    %199 = vector.shape_cast %13 : vector<8x8xf32> to vector<1x8x8xf32>
    %200 = vector.broadcast %199 : vector<1x8x8xf32> to vector<4x8x8xf32>
    %201 = arith.addf %198, %200 : vector<4x8x8xf32>
    %cst_96 = arith.constant dense<0xFF800000> : vector<4x8xf32>
    %202 = vector.multi_reduction <maximumf>, %201, %cst_96 [2] : vector<4x8x8xf32> to vector<4x8xf32>
    %203 = vector.shape_cast %202 : vector<4x8xf32> to vector<4x8x1xf32>
    %204 = vector.broadcast %203 : vector<4x8x1xf32> to vector<4x8x8xf32>
    %205 = arith.subf %201, %204 : vector<4x8x8xf32>
    %206 = math.exp %205 : vector<4x8x8xf32>
    %cst_97 = arith.constant dense<0.000000e+00> : vector<4x8xf32>
    %207 = vector.multi_reduction <add>, %206, %cst_97 [2] : vector<4x8x8xf32> to vector<4x8xf32>
    %208 = vector.shape_cast %207 : vector<4x8xf32> to vector<4x8x1xf32>
    %209 = tpu.reciprocal %208 {approx = true} : vector<4x8x1xf32> -> vector<4x8x1xf32>
    %210 = vector.broadcast %209 : vector<4x8x1xf32> to vector<4x8x8xf32>
    %211 = arith.mulf %206, %210 : vector<4x8x8xf32>
    %212 = arith.truncf %211 : vector<4x8x8xf32> to vector<4x8x8xbf16>
    %213 = arith.truncf %195 : vector<4x8x32xf32> to vector<4x8x32xbf16>
    "tpu.trace_start"() <{level = 10 : i32, message = "hqk,hkf->hqf"}> : () -> ()
    %cst_98 = arith.constant dense<0.000000e+00> : vector<4x8x32xf32>
    %214 = tpu.matmul %212, %213, %cst_98 {dimension_numbers = #tpu.dot_dimension_numbers<[2], [1], [1], [2], [0, 0, 0, 1, 1, 2], [0], [0]>} : vector<4x8x8xbf16>, vector<4x8x32xbf16>, vector<4x8x32xf32> -> vector<4x8x32xf32>
    "tpu.trace_stop"() : () -> ()
    %cst_99 = arith.constant dense<0.000000e+00> : vector<8x32xf32>
    %215 = vector.multi_reduction <add>, %214, %cst_99 [0] : vector<4x8x32xf32> to vector<8x32xf32>
    %216 = vector.extract_strided_slice %186 {offsets = [0, 0], sizes = [1, 32], strides = [1, 1]} : vector<6x32xf32> to vector<1x32xf32>
    %217 = vector.extract_strided_slice %186 {offsets = [3, 0], sizes = [1, 32], strides = [1, 1]} : vector<6x32xf32> to vector<1x32xf32>
    %218 = arith.addf %172, %215 : vector<8x32xf32>
    %cst_100 = arith.constant dense<0.000000e+00> : vector<8xf32>
    %219 = vector.multi_reduction <add>, %218, %cst_100 [1] : vector<8x32xf32> to vector<8xf32>
    %220 = vector.shape_cast %219 : vector<8xf32> to vector<8x1xf32>
    %cst_101 = arith.constant 3.200000e+01 : f32
    %221 = vector.broadcast %cst_101 : f32 to vector<8x1xf32>
    %222 = arith.divf %220, %221 : vector<8x1xf32>
    %223 = vector.broadcast %222 : vector<8x1xf32> to vector<8x32xf32>
    %224 = arith.subf %218, %223 : vector<8x32xf32>
    %225 = arith.mulf %224, %224 : vector<8x32xf32>
    %cst_102 = arith.constant dense<0.000000e+00> : vector<8xf32>
    %226 = vector.multi_reduction <add>, %225, %cst_102 [1] : vector<8x32xf32> to vector<8xf32>
    %227 = vector.shape_cast %226 : vector<8xf32> to vector<8x1xf32>
    %cst_103 = arith.constant 3.200000e+01 : f32
    %228 = vector.broadcast %cst_103 : f32 to vector<8x1xf32>
    %229 = arith.divf %227, %228 : vector<8x1xf32>
    %230 = vector.broadcast %222 : vector<8x1xf32> to vector<8x32xf32>
    %231 = arith.subf %218, %230 : vector<8x32xf32>
    %cst_104 = arith.constant 9.99999974E-6 : f32
    %232 = vector.broadcast %cst_104 : f32 to vector<8x1xf32>
    %233 = arith.addf %229, %232 : vector<8x1xf32>
    %234 = math.rsqrt %233 : vector<8x1xf32>
    %235 = vector.broadcast %234 : vector<8x1xf32> to vector<8x32xf32>
    %236 = arith.mulf %231, %235 : vector<8x32xf32>
    %237 = vector.broadcast %216 : vector<1x32xf32> to vector<8x32xf32>
    %238 = arith.mulf %236, %237 : vector<8x32xf32>
    %239 = vector.broadcast %217 : vector<1x32xf32> to vector<8x32xf32>
    %240 = arith.addf %238, %239 : vector<8x32xf32>
    %c0_105 = arith.constant 0 : index
    %c8 = arith.constant 8 : index
    %c0_106 = arith.constant 0 : index
    %c0_107 = arith.constant 0 : index
    %241 = vector.load %arg4[%c0_105, %c8, %c0_106, %c0_107] : memref<1x16x8x32xbf16, #tpu.memory_space<vmem>>, vector<1x4x8x32xbf16>
    %242 = vector.shape_cast %241 : vector<1x4x8x32xbf16> to vector<4x8x32xbf16>
    %c0_108 = arith.constant 0 : index
    %c12 = arith.constant 12 : index
    %c0_109 = arith.constant 0 : index
    %c0_110 = arith.constant 0 : index
    %243 = vector.load %arg4[%c0_108, %c12, %c0_109, %c0_110] : memref<1x16x8x32xbf16, #tpu.memory_space<vmem>>, vector<1x4x8x32xbf16>
    %244 = vector.shape_cast %243 : vector<1x4x8x32xbf16> to vector<4x8x32xbf16>
    %245 = arith.truncf %240 : vector<8x32xf32> to vector<8x32xbf16>
    %246 = vector.shape_cast %245 : vector<8x32xbf16> to vector<1x8x32xbf16>
    %247 = vector.broadcast %246 : vector<1x8x32xbf16> to vector<4x8x32xbf16>
    "tpu.trace_start"() <{level = 10 : i32, message = "hqf,hkf->hqk"}> : () -> ()
    %cst_111 = arith.constant dense<0.000000e+00> : vector<4x8x8xf32>
    %248 = tpu.matmul %247, %242, %cst_111 {dimension_numbers = #tpu.dot_dimension_numbers<[2], [2], [1], [1], [0, 0, 0, 1, 1, 1], [0], [0]>} : vector<4x8x32xbf16>, vector<4x8x32xbf16>, vector<4x8x8xf32> -> vector<4x8x8xf32>
    "tpu.trace_stop"() : () -> ()
    %249 = vector.shape_cast %20 : vector<1x8xf32> to vector<1x1x8xf32>
    %250 = vector.broadcast %249 : vector<1x1x8xf32> to vector<4x8x8xf32>
    %251 = arith.addf %248, %250 : vector<4x8x8xf32>
    %cst_112 = arith.constant dense<0xFF800000> : vector<4x8xf32>
    %252 = vector.multi_reduction <maximumf>, %251, %cst_112 [2] : vector<4x8x8xf32> to vector<4x8xf32>
    %253 = vector.shape_cast %252 : vector<4x8xf32> to vector<4x8x1xf32>
    %254 = vector.broadcast %253 : vector<4x8x1xf32> to vector<4x8x8xf32>
    %255 = arith.subf %251, %254 : vector<4x8x8xf32>
    %256 = math.exp %255 : vector<4x8x8xf32>
    %cst_113 = arith.constant dense<0.000000e+00> : vector<4x8xf32>
    %257 = vector.multi_reduction <add>, %256, %cst_113 [2] : vector<4x8x8xf32> to vector<4x8xf32>
    %258 = vector.shape_cast %257 : vector<4x8xf32> to vector<4x8x1xf32>
    %259 = tpu.reciprocal %258 {approx = true} : vector<4x8x1xf32> -> vector<4x8x1xf32>
    %260 = vector.broadcast %259 : vector<4x8x1xf32> to vector<4x8x8xf32>
    %261 = arith.mulf %256, %260 : vector<4x8x8xf32>
    %262 = arith.truncf %261 : vector<4x8x8xf32> to vector<4x8x8xbf16>
    "tpu.trace_start"() <{level = 10 : i32, message = "hqk,hkf->hqf"}> : () -> ()
    %cst_114 = arith.constant dense<0.000000e+00> : vector<4x8x32xf32>
    %263 = tpu.matmul %262, %244, %cst_114 {dimension_numbers = #tpu.dot_dimension_numbers<[2], [1], [1], [2], [0, 0, 0, 1, 1, 2], [0], [0]>} : vector<4x8x8xbf16>, vector<4x8x32xbf16>, vector<4x8x32xf32> -> vector<4x8x32xf32>
    "tpu.trace_stop"() : () -> ()
    %cst_115 = arith.constant dense<0.000000e+00> : vector<8x32xf32>
    %264 = vector.multi_reduction <add>, %263, %cst_115 [0] : vector<4x8x32xf32> to vector<8x32xf32>
    %265 = vector.extract_strided_slice %186 {offsets = [1, 0], sizes = [1, 32], strides = [1, 1]} : vector<6x32xf32> to vector<1x32xf32>
    %266 = vector.extract_strided_slice %186 {offsets = [4, 0], sizes = [1, 32], strides = [1, 1]} : vector<6x32xf32> to vector<1x32xf32>
    %267 = arith.addf %240, %264 : vector<8x32xf32>
    %cst_116 = arith.constant dense<0.000000e+00> : vector<8xf32>
    %268 = vector.multi_reduction <add>, %267, %cst_116 [1] : vector<8x32xf32> to vector<8xf32>
    %269 = vector.shape_cast %268 : vector<8xf32> to vector<8x1xf32>
    %cst_117 = arith.constant 3.200000e+01 : f32
    %270 = vector.broadcast %cst_117 : f32 to vector<8x1xf32>
    %271 = arith.divf %269, %270 : vector<8x1xf32>
    %272 = vector.broadcast %271 : vector<8x1xf32> to vector<8x32xf32>
    %273 = arith.subf %267, %272 : vector<8x32xf32>
    %274 = arith.mulf %273, %273 : vector<8x32xf32>
    %cst_118 = arith.constant dense<0.000000e+00> : vector<8xf32>
    %275 = vector.multi_reduction <add>, %274, %cst_118 [1] : vector<8x32xf32> to vector<8xf32>
    %276 = vector.shape_cast %275 : vector<8xf32> to vector<8x1xf32>
    %cst_119 = arith.constant 3.200000e+01 : f32
    %277 = vector.broadcast %cst_119 : f32 to vector<8x1xf32>
    %278 = arith.divf %276, %277 : vector<8x1xf32>
    %279 = vector.broadcast %271 : vector<8x1xf32> to vector<8x32xf32>
    %280 = arith.subf %267, %279 : vector<8x32xf32>
    %cst_120 = arith.constant 9.99999974E-6 : f32
    %281 = vector.broadcast %cst_120 : f32 to vector<8x1xf32>
    %282 = arith.addf %278, %281 : vector<8x1xf32>
    %283 = math.rsqrt %282 : vector<8x1xf32>
    %284 = vector.broadcast %283 : vector<8x1xf32> to vector<8x32xf32>
    %285 = arith.mulf %280, %284 : vector<8x32xf32>
    %286 = vector.broadcast %265 : vector<1x32xf32> to vector<8x32xf32>
    %287 = arith.mulf %285, %286 : vector<8x32xf32>
    %288 = vector.broadcast %266 : vector<1x32xf32> to vector<8x32xf32>
    %289 = arith.addf %287, %288 : vector<8x32xf32>
    %290 = arith.truncf %289 : vector<8x32xf32> to vector<8x32xbf16>
    %cst_121 = arith.constant dense<0.000000e+00> : vector<8x64xf32>
    %291 = tpu.matmul %290, %178, %cst_121 {dimension_numbers = #tpu.dot_dimension_numbers<[1], [0], [0], [1], [0, 0, 1, 1], [], []>} : vector<8x32xbf16>, vector<32x64xbf16>, vector<8x64xf32> -> vector<8x64xf32>
    %292 = vector.broadcast %180 : vector<1x64xf32> to vector<8x64xf32>
    %293 = arith.addf %291, %292 : vector<8x64xf32>
    %cst_122 = arith.constant 0.000000e+00 : f32
    %294 = vector.broadcast %cst_122 : f32 to vector<8x64xf32>
    %295 = arith.maximumf %293, %294 : vector<8x64xf32>
    %296 = arith.truncf %295 : vector<8x64xf32> to vector<8x64xbf16>
    %cst_123 = arith.constant dense<0.000000e+00> : vector<8x32xf32>
    %297 = tpu.matmul %296, %182, %cst_123 {dimension_numbers = #tpu.dot_dimension_numbers<[1], [0], [0], [1], [0, 0, 1, 1], [], []>} : vector<8x64xbf16>, vector<64x32xbf16>, vector<8x32xf32> -> vector<8x32xf32>
    %298 = vector.broadcast %184 : vector<1x32xf32> to vector<8x32xf32>
    %299 = arith.addf %297, %298 : vector<8x32xf32>
    %300 = vector.extract_strided_slice %186 {offsets = [2, 0], sizes = [1, 32], strides = [1, 1]} : vector<6x32xf32> to vector<1x32xf32>
    %301 = vector.extract_strided_slice %186 {offsets = [5, 0], sizes = [1, 32], strides = [1, 1]} : vector<6x32xf32> to vector<1x32xf32>
    %302 = arith.addf %289, %299 : vector<8x32xf32>
    %cst_124 = arith.constant dense<0.000000e+00> : vector<8xf32>
    %303 = vector.multi_reduction <add>, %302, %cst_124 [1] : vector<8x32xf32> to vector<8xf32>
    %304 = vector.shape_cast %303 : vector<8xf32> to vector<8x1xf32>
    %cst_125 = arith.constant 3.200000e+01 : f32
    %305 = vector.broadcast %cst_125 : f32 to vector<8x1xf32>
    %306 = arith.divf %304, %305 : vector<8x1xf32>
    %307 = vector.broadcast %306 : vector<8x1xf32> to vector<8x32xf32>
    %308 = arith.subf %302, %307 : vector<8x32xf32>
    %309 = arith.mulf %308, %308 : vector<8x32xf32>
    %cst_126 = arith.constant dense<0.000000e+00> : vector<8xf32>
    %310 = vector.multi_reduction <add>, %309, %cst_126 [1] : vector<8x32xf32> to vector<8xf32>
    %311 = vector.shape_cast %310 : vector<8xf32> to vector<8x1xf32>
    %cst_127 = arith.constant 3.200000e+01 : f32
    %312 = vector.broadcast %cst_127 : f32 to vector<8x1xf32>
    %313 = arith.divf %311, %312 : vector<8x1xf32>
    %314 = vector.broadcast %306 : vector<8x1xf32> to vector<8x32xf32>
    %315 = arith.subf %302, %314 : vector<8x32xf32>
    %cst_128 = arith.constant 9.99999974E-6 : f32
    %316 = vector.broadcast %cst_128 : f32 to vector<8x1xf32>
    %317 = arith.addf %313, %316 : vector<8x1xf32>
    %318 = math.rsqrt %317 : vector<8x1xf32>
    %319 = vector.broadcast %318 : vector<8x1xf32> to vector<8x32xf32>
    %320 = arith.mulf %315, %319 : vector<8x32xf32>
    %321 = vector.broadcast %300 : vector<1x32xf32> to vector<8x32xf32>
    %322 = arith.mulf %320, %321 : vector<8x32xf32>
    %323 = vector.broadcast %301 : vector<1x32xf32> to vector<8x32xf32>
    %324 = arith.addf %322, %323 : vector<8x32xf32>
    %c0_129 = arith.constant 0 : index
    %c0_130 = arith.constant 0 : index
    %c0_131 = arith.constant 0 : index
    %325 = vector.load %arg12[%c0_129, %c0_130, %c0_131] : memref<1x8x32xf32, #tpu.memory_space<vmem>>, vector<1x8x32xf32>
    %326 = vector.shape_cast %325 : vector<1x8x32xf32> to vector<8x32xf32>
    %327 = vector.shape_cast %324 : vector<8x32xf32> to vector<1x8x32xf32>
    tpu.vector_store %arg12[%c0_129, %c0_130, %c0_131], %327 {strides = array<i32>} : memref<1x8x32xf32, #tpu.memory_space<vmem>>, vector<1x8x32xf32>,
    return
  }
  func.func @transform_0(%arg0: i32) -> (i32, i32, i32) {
    %c0_i32 = arith.constant 0 : i32
    %c0_i32_0 = arith.constant 0 : i32
    %c0_i32_1 = arith.constant 0 : i32
    return %arg0, %c0_i32, %c0_i32_0 : i32, i32, i32
  }
  func.func @transform_1(%arg0: i32) -> (i32, i32, i32) {
    %c0_i32 = arith.constant 0 : i32
    %c0_i32_0 = arith.constant 0 : i32
    %c0_i32_1 = arith.constant 0 : i32
    return %arg0, %c0_i32, %c0_i32_0 : i32, i32, i32
  }
  func.func @transform_2(%arg0: i32) -> (i32, i32, i32) {
    %c0_i32 = arith.constant 0 : i32
    %c0_i32_0 = arith.constant 0 : i32
    %c0_i32_1 = arith.constant 0 : i32
    return %arg0, %c0_i32, %c0_i32_0 : i32, i32, i32
  }
  func.func @transform_3(%arg0: i32) -> (i32, i32, i32, i32) {
    %c0_i32 = arith.constant 0 : i32
    %c0_i32_0 = arith.constant 0 : i32
    %c0_i32_1 = arith.constant 0 : i32
    %c0_i32_2 = arith.constant 0 : i32
    return %arg0, %c0_i32, %c0_i32_0, %c0_i32_1 : i32, i32, i32, i32
  }
  func.func @transform_4(%arg0: i32) -> (i32, i32, i32, i32) {
    %c0_i32 = arith.constant 0 : i32
    %c0_i32_0 = arith.constant 0 : i32
    %c0_i32_1 = arith.constant 0 : i32
    %c0_i32_2 = arith.constant 0 : i32
    %c0_i32_3 = arith.constant 0 : i32
    return %c0_i32, %c0_i32_0, %c0_i32_1, %c0_i32_2 : i32, i32, i32, i32
  }
  func.func @transform_5(%arg0: i32) -> (i32, i32, i32, i32) {
    %c0_i32 = arith.constant 0 : i32
    %c0_i32_0 = arith.constant 0 : i32
    %c0_i32_1 = arith.constant 0 : i32
    %c0_i32_2 = arith.constant 0 : i32
    %c0_i32_3 = arith.constant 0 : i32
    return %c0_i32, %c0_i32_0, %c0_i32_1, %c0_i32_2 : i32, i32, i32, i32
  }
  func.func @transform_6(%arg0: i32) -> (i32, i32, i32) {
    %c0_i32 = arith.constant 0 : i32
    %c0_i32_0 = arith.constant 0 : i32
    %c0_i32_1 = arith.constant 0 : i32
    %c0_i32_2 = arith.constant 0 : i32
    return %c0_i32, %c0_i32_0, %c0_i32_1 : i32, i32, i32
  }
  func.func @transform_7(%arg0: i32) -> (i32, i32, i32) {
    %c0_i32 = arith.constant 0 : i32
    %c0_i32_0 = arith.constant 0 : i32
    %c0_i32_1 = arith.constant 0 : i32
    %c0_i32_2 = arith.constant 0 : i32
    return %c0_i32, %c0_i32_0, %c0_i32_1 : i32, i32, i32
  }
  func.func @transform_8(%arg0: i32) -> (i32, i32, i32) {
    %c0_i32 = arith.constant 0 : i32
    %c0_i32_0 = arith.constant 0 : i32
    %c0_i32_1 = arith.constant 0 : i32
    %c0_i32_2 = arith.constant 0 : i32
    return %c0_i32, %c0_i32_0, %c0_i32_1 : i32, i32, i32
  }
  func.func @transform_9(%arg0: i32) -> (i32, i32, i32) {
    %c0_i32 = arith.constant 0 : i32
    %c0_i32_0 = arith.constant 0 : i32
    %c0_i32_1 = arith.constant 0 : i32
    %c0_i32_2 = arith.constant 0 : i32
    return %c0_i32, %c0_i32_0, %c0_i32_1 : i32, i32, i32
  }
  func.func @transform_10(%arg0: i32) -> (i32, i32, i32) {
    %c0_i32 = arith.constant 0 : i32
    %c0_i32_0 = arith.constant 0 : i32
    %c0_i32_1 = arith.constant 0 : i32
    %c0_i32_2 = arith.constant 0 : i32
    return %c0_i32, %c0_i32_0, %c0_i32_1 : i32, i32, i32
  }
  func.func @transform_11(%arg0: i32) -> (i32, i32, i32) {
    %c0_i32 = arith.constant 0 : i32
    %c0_i32_0 = arith.constant 0 : i32
    %c0_i32_1 = arith.constant 0 : i32
    return %arg0, %c0_i32, %c0_i32_0 : i32, i32, i32
  }
}

</mosaic_0001>

<llo_original>
// kernel: transformer_decoder.1
$region0: #{transformer_decoder.1}
  #allocation0 [shape = 'u32[]', space=smem, size = 0x4, offset = 0x4, fixed_abs, tag = 'smem constant byte address 0x4 - core index']
  #allocation1 [shape = 'u32[144,128]{1,0:T(1,128)}', space=vmem, size = 0x12000, scoped, tag = 'internal scratch']
  %s0 = inlined_call_operand.vmem [shape: f32[2,8,32], index: 0, kind: input, shape index: {}]
  %s1 = inlined_call_operand.vmem [shape: f32[2,1,8], index: 1, kind: input, shape index: {}]
  %s2 = inlined_call_operand.vmem [shape: f32[2,1,8], index: 2, kind: input, shape index: {}]
  %s3 = inlined_call_operand.vmem [shape: bf16[2,16,8,32], index: 3, kind: input, shape index: {}]
  %s4 = inlined_call_operand.vmem [shape: bf16[2,12,32,32], index: 4, kind: input, shape index: {}]
  %s5 = inlined_call_operand.vmem [shape: f32[2,12,1,32], index: 5, kind: input, shape index: {}]
  %s6 = inlined_call_operand.vmem [shape: bf16[2,32,64], index: 6, kind: input, shape index: {}]
  %s7 = inlined_call_operand.vmem [shape: f32[2,1,64], index: 7, kind: input, shape index: {}]
  %s8 = inlined_call_operand.vmem [shape: bf16[2,64,32], index: 8, kind: input, shape index: {}]
  %s9 = inlined_call_operand.vmem [shape: f32[2,1,32], index: 9, kind: input, shape index: {}]
  %s10 = inlined_call_operand.vmem [shape: f32[2,6,32], index: 10, kind: input, shape index: {}]
  %s11 = inlined_call_operand.hbm [shape: f32[2,8,32], index: 11, kind: output, shape index: {}]
  %s12 = sld [smem:[#allocation0]]
  $region77: #{transformer_decoder.1} parent=0
    _
  %s14 = ssub.s32 1, %s12
  %s15 = scalar_select 0, %s14, %s12
  $region1: #{transformer_decoder.1} parent=0
    #allocation2 [shape = 'u8[8192]{0}', space=vmem, size = 0x2000, scoped, tag = 'output window, operand 0']
    #allocation3 [shape = 's32[2]{0}', space=sflag, size = 0x8, scoped, tag = 'scoped memory for transformer_decoder.1']
    %16 = vsyncpa [#allocation3], 0
    %s17 = scalar_lea.sflag [#allocation3], 1
    %18 = vsyncpa %s17, 0
    loop: start=0, step=1, limit=4
    $region2: #{transformer_decoder.1} parent=1 // loop_pre_header
      _
    $region3: #{transformer_decoder.1} parent=1 // loop_header
      %s20 = sphi 0, %s24
      %p21 = scmp.ge.s32.totalorder %s20, 4
      %s30 = sphi 0, %s32
      %s33 = sphi 0, %s30
      %s34 = sphi 0, %s33
      %s50 = sphi 0, %s34
      %s56 = sphi 0, %s58
      %s59 = sphi 0, %s56
      %s60 = sphi 0, %s59
      %s76 = sphi 0, %s60
      %s82 = sphi 0, %s84
      %s85 = sphi 0, %s82
      %s86 = sphi 0, %s85
      %s102 = sphi 0, %s86
      %s108 = sphi 0, %s110
      %s111 = sphi 0, %s108
      %s112 = sphi 0, %s111
      %s128 = sphi 0, %s112
      %s132 = sphi 0, %s132
      %s134 = sphi 0, %s132
      %s135 = sphi 0, %s134
      %s149 = sphi 0, %s135
      %s153 = sphi 0, %s153
      %s155 = sphi 0, %s153
      %s156 = sphi 0, %s155
      %s170 = sphi 0, %s156
      %s174 = sphi 0, %s174
      %s176 = sphi 0, %s174
      %s177 = sphi 0, %s176
      %s191 = sphi 0, %s177
      %s195 = sphi 0, %s195
      %s197 = sphi 0, %s195
      %s198 = sphi 0, %s197
      %s212 = sphi 0, %s198
      %s216 = sphi 0, %s216
      %s218 = sphi 0, %s216
      %s219 = sphi 0, %s218
      %s233 = sphi 0, %s219
      %s237 = sphi 0, %s237
      %s239 = sphi 0, %s237
      %s240 = sphi 0, %s239
      %s254 = sphi 0, %s240
      %s258 = sphi 0, %s258
      %s260 = sphi 0, %s258
      %s261 = sphi 0, %s260
      %s275 = sphi 0, %s261
      %s281 = sphi 0, %s283
      %s284 = sphi 0, %s281
      %s285 = sphi 0, %s284
      %s301 = sphi 0, %s285
    $region4: #{transformer_decoder.1} parent=1 // loop_header_branch
      %23 = sbr.rel (%p21) target = $region8
    $region5: #{transformer_decoder.1} parent=1 // loop_body
      %s25 = ssub.s32 %s20, 1
      %s26 = ssub.s32 %s20, 2
      %s27 = sadd.s32 %s20, 1
      %s28 = ssub.s32 %s20, %s27
      %p29 = scmp.eq.s32.totalorder %s28, 0
      %s31 = sadd.s32 %s30, 1
      %s32 = scalar_select %p29, %s30, %s31
      %p35 = pneg %p29
      %p36 = scmp.eq.s32.totalorder %s20, 1
      %p37 = por %p35, %p36
      %p38 = scmp.ne.s32.totalorder %s30, %s33
      %p39 = scmp.eq.s32.totalorder %s20, 0
      %p40 = por %p38, %p39
      %p41 = scmp.ne.s32.totalorder %s30, %s33
      %p42 = scmp.eq.s32.totalorder %s25, 1
      %p43 = por %p41, %p42
      %p44 = scmp.ne.s32.totalorder %s33, %s34
      %p45 = scmp.eq.s32.totalorder %s25, 0
      %p46 = por %p44, %p45
      %p47 = scmp.ne.s32.totalorder %s33, %s34
      %p48 = scmp.eq.s32.totalorder %s26, 1
      %p49 = por %p47, %p48
      %p51 = scmp.ne.s32.totalorder %s34, %s50
      %p52 = scmp.eq.s32.totalorder %s26, 0
      %p53 = por %p51, %p52
      %s54 = ssub.s32 %s20, %s27
      %p55 = scmp.eq.s32.totalorder %s54, 0
      %s57 = sadd.s32 %s56, 1
      %s58 = scalar_select %p55, %s56, %s57
      %p61 = pneg %p55
      %p62 = scmp.eq.s32.totalorder %s20, 1
      %p63 = por %p61, %p62
      %p64 = scmp.ne.s32.totalorder %s56, %s59
      %p65 = scmp.eq.s32.totalorder %s20, 0
      %p66 = por %p64, %p65
      %p67 = scmp.ne.s32.totalorder %s56, %s59
      %p68 = scmp.eq.s32.totalorder %s25, 1
      %p69 = por %p67, %p68
      %p70 = scmp.ne.s32.totalorder %s59, %s60
      %p71 = scmp.eq.s32.totalorder %s25, 0
      %p72 = por %p70, %p71
      %p73 = scmp.ne.s32.totalorder %s59, %s60
      %p74 = scmp.eq.s32.totalorder %s26, 1
      %p75 = por %p73, %p74
      %p77 = scmp.ne.s32.totalorder %s60, %s76
      %p78 = scmp.eq.s32.totalorder %s26, 0
      %p79 = por %p77, %p78
      %s80 = ssub.s32 %s20, %s27
      %p81 = scmp.eq.s32.totalorder %s80, 0
      %s83 = sadd.s32 %s82, 1
      %s84 = scalar_select %p81, %s82, %s83
      %p87 = pneg %p81
      %p88 = scmp.eq.s32.totalorder %s20, 1
      %p89 = por %p87, %p88
      %p90 = scmp.ne.s32.totalorder %s82, %s85
      %p91 = scmp.eq.s32.totalorder %s20, 0
      %p92 = por %p90, %p91
      %p93 = scmp.ne.s32.totalorder %s82, %s85
      %p94 = scmp.eq.s32.totalorder %s25, 1
      %p95 = por %p93, %p94
      %p96 = scmp.ne.s32.totalorder %s85, %s86
      %p97 = scmp.eq.s32.totalorder %s25, 0
      %p98 = por %p96, %p97
      %p99 = scmp.ne.s32.totalorder %s85, %s86
      %p100 = scmp.eq.s32.totalorder %s26, 1
      %p101 = por %p99, %p100
      %p103 = scmp.ne.s32.totalorder %s86, %s102
      %p104 = scmp.eq.s32.totalorder %s26, 0
      %p105 = por %p103, %p104
      %s106 = ssub.s32 %s20, %s27
      %p107 = scmp.eq.s32.totalorder %s106, 0
      %s109 = sadd.s32 %s108, 1
      %s110 = scalar_select %p107, %s108, %s109
      %p113 = pneg %p107
      %p114 = scmp.eq.s32.totalorder %s20, 1
      %p115 = por %p113, %p114
      %p116 = scmp.ne.s32.totalorder %s108, %s111
      %p117 = scmp.eq.s32.totalorder %s20, 0
      %p118 = por %p116, %p117
      %p119 = scmp.ne.s32.totalorder %s108, %s111
      %p120 = scmp.eq.s32.totalorder %s25, 1
      %p121 = por %p119, %p120
      %p122 = scmp.ne.s32.totalorder %s111, %s112
      %p123 = scmp.eq.s32.totalorder %s25, 0
      %p124 = por %p122, %p123
      %p125 = scmp.ne.s32.totalorder %s111, %s112
      %p126 = scmp.eq.s32.totalorder %s26, 1
      %p127 = por %p125, %p126
      %p129 = scmp.ne.s32.totalorder %s112, %s128
      %p130 = scmp.eq.s32.totalorder %s26, 0
      %p131 = por %p129, %p130
      %s133 = sadd.s32 %s132, 1
      %p136 = scmp.eq.s32.totalorder %s20, 1
      %p137 = scmp.ne.s32.totalorder %s132, %s134
      %p138 = scmp.eq.s32.totalorder %s20, 0
      %p139 = por %p137, %p138
      %p140 = scmp.ne.s32.totalorder %s132, %s134
      %p141 = scmp.eq.s32.totalorder %s25, 1
      %p142 = por %p140, %p141
      %p143 = scmp.ne.s32.totalorder %s134, %s135
      %p144 = scmp.eq.s32.totalorder %s25, 0
      %p145 = por %p143, %p144
      %p146 = scmp.ne.s32.totalorder %s134, %s135
      %p147 = scmp.eq.s32.totalorder %s26, 1
      %p148 = por %p146, %p147
      %p150 = scmp.ne.s32.totalorder %s135, %s149
      %p151 = scmp.eq.s32.totalorder %s26, 0
      %p152 = por %p150, %p151
      %s154 = sadd.s32 %s153, 1
      %p157 = scmp.eq.s32.totalorder %s20, 1
      %p158 = scmp.ne.s32.totalorder %s153, %s155
      %p159 = scmp.eq.s32.totalorder %s20, 0
      %p160 = por %p158, %p159
      %p161 = scmp.ne.s32.totalorder %s153, %s155
      %p162 = scmp.eq.s32.totalorder %s25, 1
      %p163 = por %p161, %p162
      %p164 = scmp.ne.s32.totalorder %s155, %s156
      %p165 = scmp.eq.s32.totalorder %s25, 0
      %p166 = por %p164, %p165
      %p167 = scmp.ne.s32.totalorder %s155, %s156
      %p168 = scmp.eq.s32.totalorder %s26, 1
      %p169 = por %p167, %p168
      %p171 = scmp.ne.s32.totalorder %s156, %s170
      %p172 = scmp.eq.s32.totalorder %s26, 0
      %p173 = por %p171, %p172
      %s175 = sadd.s32 %s174, 1
      %p178 = scmp.eq.s32.totalorder %s20, 1
      %p179 = scmp.ne.s32.totalorder %s174, %s176
      %p180 = scmp.eq.s32.totalorder %s20, 0
      %p181 = por %p179, %p180
      %p182 = scmp.ne.s32.totalorder %s174, %s176
      %p183 = scmp.eq.s32.totalorder %s25, 1
      %p184 = por %p182, %p183
      %p185 = scmp.ne.s32.totalorder %s176, %s177
      %p186 = scmp.eq.s32.totalorder %s25, 0
      %p187 = por %p185, %p186
      %p188 = scmp.ne.s32.totalorder %s176, %s177
      %p189 = scmp.eq.s32.totalorder %s26, 1
      %p190 = por %p188, %p189
      %p192 = scmp.ne.s32.totalorder %s177, %s191
      %p193 = scmp.eq.s32.totalorder %s26, 0
      %p194 = por %p192, %p193
      %s196 = sadd.s32 %s195, 1
      %p199 = scmp.eq.s32.totalorder %s20, 1
      %p200 = scmp.ne.s32.totalorder %s195, %s197
      %p201 = scmp.eq.s32.totalorder %s20, 0
      %p202 = por %p200, %p201
      %p203 = scmp.ne.s32.totalorder %s195, %s197
      %p204 = scmp.eq.s32.totalorder %s25, 1
      %p205 = por %p203, %p204
      %p206 = scmp.ne.s32.totalorder %s197, %s198
      %p207 = scmp.eq.s32.totalorder %s25, 0
      %p208 = por %p206, %p207
      %p209 = scmp.ne.s32.totalorder %s197, %s198
      %p210 = scmp.eq.s32.totalorder %s26, 1
      %p211 = por %p209, %p210
      %p213 = scmp.ne.s32.totalorder %s198, %s212
      %p214 = scmp.eq.s32.totalorder %s26, 0
      %p215 = por %p213, %p214
      %s217 = sadd.s32 %s216, 1
      %p220 = scmp.eq.s32.totalorder %s20, 1
      %p221 = scmp.ne.s32.totalorder %s216, %s218
      %p222 = scmp.eq.s32.totalorder %s20, 0
      %p223 = por %p221, %p222
      %p224 = scmp.ne.s32.totalorder %s216, %s218
      %p225 = scmp.eq.s32.totalorder %s25, 1
      %p226 = por %p224, %p225
      %p227 = scmp.ne.s32.totalorder %s218, %s219
      %p228 = scmp.eq.s32.totalorder %s25, 0
      %p229 = por %p227, %p228
      %p230 = scmp.ne.s32.totalorder %s218, %s219
      %p231 = scmp.eq.s32.totalorder %s26, 1
      %p232 = por %p230, %p231
      %p234 = scmp.ne.s32.totalorder %s219, %s233
      %p235 = scmp.eq.s32.totalorder %s26, 0
      %p236 = por %p234, %p235
      %s238 = sadd.s32 %s237, 1
      %p241 = scmp.eq.s32.totalorder %s20, 1
      %p242 = scmp.ne.s32.totalorder %s237, %s239
      %p243 = scmp.eq.s32.totalorder %s20, 0
      %p244 = por %p242, %p243
      %p245 = scmp.ne.s32.totalorder %s237, %s239
      %p246 = scmp.eq.s32.totalorder %s25, 1
      %p247 = por %p245, %p246
      %p248 = scmp.ne.s32.totalorder %s239, %s240
      %p249 = scmp.eq.s32.totalorder %s25, 0
      %p250 = por %p248, %p249
      %p251 = scmp.ne.s32.totalorder %s239, %s240
      %p252 = scmp.eq.s32.totalorder %s26, 1
      %p253 = por %p251, %p252
      %p255 = scmp.ne.s32.totalorder %s240, %s254
      %p256 = scmp.eq.s32.totalorder %s26, 0
      %p257 = por %p255, %p256
      %s259 = sadd.s32 %s258, 1
      %p262 = scmp.eq.s32.totalorder %s20, 1
      %p263 = scmp.ne.s32.totalorder %s258, %s260
      %p264 = scmp.eq.s32.totalorder %s20, 0
      %p265 = por %p263, %p264
      %p266 = scmp.ne.s32.totalorder %s258, %s260
      %p267 = scmp.eq.s32.totalorder %s25, 1
      %p268 = por %p266, %p267
      %p269 = scmp.ne.s32.totalorder %s260, %s261
      %p270 = scmp.eq.s32.totalorder %s25, 0
      %p271 = por %p269, %p270
      %p272 = scmp.ne.s32.totalorder %s260, %s261
      %p273 = scmp.eq.s32.totalorder %s26, 1
      %p274 = por %p272, %p273
      %p276 = scmp.ne.s32.totalorder %s261, %s275
      %p277 = scmp.eq.s32.totalorder %s26, 0
      %p278 = por %p276, %p277
      %s279 = ssub.s32 %s20, %s27
      %p280 = scmp.eq.s32.totalorder %s279, 0
      %s282 = sadd.s32 %s281, 1
      %s283 = scalar_select %p280, %s281, %s282
      %p286 = pneg %p280
      %p287 = scmp.eq.s32.totalorder %s20, 1
      %p288 = por %p286, %p287
      %p289 = scmp.ne.s32.totalorder %s281, %s284
      %p290 = scmp.eq.s32.totalorder %s20, 0
      %p291 = por %p289, %p290
      %p292 = scmp.ne.s32.totalorder %s281, %s284
      %p293 = scmp.eq.s32.totalorder %s25, 1
      %p294 = por %p292, %p293
      %p295 = scmp.ne.s32.totalorder %s284, %s285
      %p296 = scmp.eq.s32.totalorder %s25, 0
      %p297 = por %p295, %p296
      %p298 = scmp.ne.s32.totalorder %s284, %s285
      %p299 = scmp.eq.s32.totalorder %s26, 1
      %p300 = por %p298, %p299
      %p302 = scmp.ne.s32.totalorder %s285, %s301
      %p303 = scmp.eq.s32.totalorder %s26, 0
      %p304 = por %p302, %p303
      %p305 = scmp.le.s32.totalorder 1, %s20
      %p306 = scmp.lt.s32.totalorder %s20, 3
      %p307 = pnand %p305, %p306
      %p308 = pneg %p307
      // Predicated region
      $region9: #{transformer_decoder.1} parent=5 // pred_check
        _
      $region10: #{transformer_decoder.1} parent=5 // pred_check_branch
        %310 = sbr.rel (%p307) target = $region12
      $region11: #{transformer_decoder.1} parent=5 // pred_region
        %s311 = ssub.s32 %s20, 1
        // Predicated region
        $region13: #{transformer_decoder.1} parent=11 // pred_check
          %p312 = pneg %p145
        $region14: #{transformer_decoder.1} parent=11 // pred_check_branch
          %314 = sbr.rel (%p312) target = $region16
        $region15: #{transformer_decoder.1} parent=11 // pred_region
          _
        $region16: #{transformer_decoder.1} parent=11 // pred_fallthru
          _
        // Predicated region
        $region17: #{transformer_decoder.1} parent=11 // pred_check
          %p315 = pneg %p166
        $region18: #{transformer_decoder.1} parent=11 // pred_check_branch
          %317 = sbr.rel (%p315) target = $region20
        $region19: #{transformer_decoder.1} parent=11 // pred_region
          _
        $region20: #{transformer_decoder.1} parent=11 // pred_fallthru
          _
        // Predicated region
        $region21: #{transformer_decoder.1} parent=11 // pred_check
          %p318 = pneg %p187
        $region22: #{transformer_decoder.1} parent=11 // pred_check_branch
          %320 = sbr.rel (%p318) target = $region24
        $region23: #{transformer_decoder.1} parent=11 // pred_region
          _
        $region24: #{transformer_decoder.1} parent=11 // pred_fallthru
          _
        // Predicated region
        $region25: #{transformer_decoder.1} parent=11 // pred_check
          %p321 = pneg %p208
        $region26: #{transformer_decoder.1} parent=11 // pred_check_branch
          %323 = sbr.rel (%p321) target = $region28
        $region27: #{transformer_decoder.1} parent=11 // pred_region
          _
        $region28: #{transformer_decoder.1} parent=11 // pred_fallthru
          _
        // Predicated region
        $region29: #{transformer_decoder.1} parent=11 // pred_check
          %p324 = pneg %p229
        $region30: #{transformer_decoder.1} parent=11 // pred_check_branch
          %326 = sbr.rel (%p324) target = $region32
        $region31: #{transformer_decoder.1} parent=11 // pred_region
          _
        $region32: #{transformer_decoder.1} parent=11 // pred_fallthru
          _
        // Predicated region
        $region33: #{transformer_decoder.1} parent=11 // pred_check
          %p327 = pneg %p250
        $region34: #{transformer_decoder.1} parent=11 // pred_check_branch
          %329 = sbr.rel (%p327) target = $region36
        $region35: #{transformer_decoder.1} parent=11 // pred_region
          _
        $region36: #{transformer_decoder.1} parent=11 // pred_fallthru
          _
        // Predicated region
        $region37: #{transformer_decoder.1} parent=11 // pred_check
          %p330 = pneg %p271
        $region38: #{transformer_decoder.1} parent=11 // pred_check_branch
          %332 = sbr.rel (%p330) target = $region40
        $region39: #{transformer_decoder.1} parent=11 // pred_region
          _
        $region40: #{transformer_decoder.1} parent=11 // pred_fallthru
          _
      $region12: #{transformer_decoder.1} parent=5 // pred_fallthru
        _
      %p333 = scmp.lt.s32.totalorder %s20, 2
      // Predicated region
      $region41: #{transformer_decoder.1} parent=5 // pred_check
        %p334 = pneg %p333
      $region42: #{transformer_decoder.1} parent=5 // pred_check_branch
        %336 = sbr.rel (%p334) target = $region44
      $region43: #{transformer_decoder.1} parent=5 // pred_region
        // Predicated region
        $region45: #{transformer_decoder.1} parent=43 // pred_check
          %p337 = pneg %p40
        $region46: #{transformer_decoder.1} parent=43 // pred_check_branch
          %339 = sbr.rel (%p337) target = $region48
        $region47: #{transformer_decoder.1} parent=43 // pred_region
          %p340 = scmp.lt.s32.totalorder %s20, 1
          %s341 = scalar_select %p340, %s20, 1
          %s342 = smul.addr %s341, 8
          %s343 = scalar_lea.vmem %s0, %s342
        $region48: #{transformer_decoder.1} parent=43 // pred_fallthru
          _
        // Predicated region
        $region49: #{transformer_decoder.1} parent=43 // pred_check
          %p344 = pneg %p66
        $region50: #{transformer_decoder.1} parent=43 // pred_check_branch
          %346 = sbr.rel (%p344) target = $region52
        $region51: #{transformer_decoder.1} parent=43 // pred_region
          %p347 = scmp.lt.s32.totalorder %s20, 1
          %s348 = scalar_select %p347, %s20, 1
          %s349 = scalar_lea.vmem %s1, %s348
        $region52: #{transformer_decoder.1} parent=43 // pred_fallthru
          _
        // Predicated region
        $region53: #{transformer_decoder.1} parent=43 // pred_check
          %p350 = pneg %p92
        $region54: #{transformer_decoder.1} parent=43 // pred_check_branch
          %352 = sbr.rel (%p350) target = $region56
        $region55: #{transformer_decoder.1} parent=43 // pred_region
          %p353 = scmp.lt.s32.totalorder %s20, 1
          %s354 = scalar_select %p353, %s20, 1
          %s355 = scalar_lea.vmem %s2, %s354
        $region56: #{transformer_decoder.1} parent=43 // pred_fallthru
          _
        // Predicated region
        $region57: #{transformer_decoder.1} parent=43 // pred_check
          %p356 = pneg %p118
        $region58: #{transformer_decoder.1} parent=43 // pred_check_branch
          %358 = sbr.rel (%p356) target = $region60
        $region59: #{transformer_decoder.1} parent=43 // pred_region
          %p359 = scmp.lt.s32.totalorder %s20, 1
          %s360 = scalar_select %p359, %s20, 1
          %s361 = smul.addr %s360, 16
          %s362 = smul.addr %s361, 4
          %s363 = scalar_lea.vmem %s3, %s362
        $region60: #{transformer_decoder.1} parent=43 // pred_fallthru
          _
      $region44: #{transformer_decoder.1} parent=5 // pred_fallthru
        _
      %p364 = scmp.le.s32.totalorder 1, %s20
      %p365 = scmp.lt.s32.totalorder %s20, 3
      %p366 = pnand %p364, %p365
      %p367 = pneg %p366
      // Predicated region
      $region61: #{transformer_decoder.1} parent=5 // pred_check
        _
      $region62: #{transformer_decoder.1} parent=5 // pred_check_branch
        %369 = sbr.rel (%p366) target = $region64
      $region63: #{transformer_decoder.1} parent=5 // pred_region
        %s370 = ssub.s32 %s20, 1
        %p371 = scmp.lt.s32.totalorder %s25, 1
        %s372 = scalar_select %p371, %s25, 1
        %s373 = smul.addr %s372, 8
        %s374 = scalar_lea.vmem %s0, %s373
        %p375 = pneg %p46
        %p376 = pneg %p43
        %p377 = scmp.lt.s32.totalorder %s25, 1
        %s378 = scalar_select %p377, %s25, 1
        %s379 = scalar_lea.vmem %s1, %s378
        %p380 = pneg %p72
        %p381 = pneg %p69
        %p382 = scmp.lt.s32.totalorder %s25, 1
        %s383 = scalar_select %p382, %s25, 1
        %s384 = scalar_lea.vmem %s2, %s383
        %p385 = pneg %p98
        %p386 = pneg %p95
        %p387 = scmp.lt.s32.totalorder %s25, 1
        %s388 = scalar_select %p387, %s25, 1
        %s389 = smul.addr %s388, 16
        %s390 = smul.addr %s389, 4
        %s391 = scalar_lea.vmem %s3, %s390
        %p392 = pneg %p124
        %p393 = pneg %p121
        %p394 = pneg %p145
        %p395 = pneg %p142
        %p396 = pneg %p166
        %p397 = pneg %p163
        %p398 = pneg %p187
        %p399 = pneg %p184
        %p400 = pneg %p208
        %p401 = pneg %p205
        %p402 = pneg %p229
        %p403 = pneg %p226
        %p404 = pneg %p250
        %p405 = pneg %p247
        %p406 = pneg %p271
        %p407 = pneg %p268
        %p408 = pneg %p297
        %p409 = pneg %p294
        %s410 = sand.u32 %s284, 1
        %s411 = scalar_lea.sflag [#allocation3], %s410
        %s412 = sand.u32 %s284, 1
        %s413 = smul.addr %s412, 8
        %s414 = scalar_lea.vmem [#allocation2], %s413
        %p415 = scmp.lt.s32.totalorder %s25, 1
        %s416 = scalar_select %p415, %s25, 1
        %s417 = smul.addr %s416, 8
        %s418 = scalar_lea.vmem %s0, %s417
        %p419 = scmp.lt.s32.totalorder %s25, 1
        %s420 = scalar_select %p419, %s25, 1
        %s421 = scalar_lea.vmem %s1, %s420
        %p422 = scmp.lt.s32.totalorder %s25, 1
        %s423 = scalar_select %p422, %s25, 1
        %s424 = scalar_lea.vmem %s2, %s423
        %p425 = scmp.lt.s32.totalorder %s25, 1
        %s426 = scalar_select %p425, %s25, 1
        %s427 = smul.addr %s426, 16
        %s428 = smul.addr %s427, 4
        %s429 = scalar_lea.vmem %s3, %s428
        %v431 = vld [vmem:[%s418] sm:$0xff]
        %v432 = vlaneseq
        %v433 = vshrl.u32 %v432, 7
        %v434 = vlaneseq
        %v435 = vand.u32 %v434, 127
        %vm436 = vcmp.ge.s32.totalorder %v433, %v435
        %v437 = vld [vmem:[%s421] sm:$0x1]
        %vm438 = vcmp.gt.f32.partialorder %v437, 0.5
        %v439 = vsel %vm438, 1, 0
        %v440 = vlaneseq
        %v441 = vshrl.u32 %v440, 7
        %v442 = vsub.s32 0, %v441
        %v443 = vrot.slane %v439, %v442
        %vm444 = vcmp.eq.s32.totalorder %v443, 1
        %vm445 = vmand %vm436, %vm444
        %v446 = vsel %vm445, 0.0, -1e+09
        %v447 = vld [vmem:[%s424] sm:$0x1]
        %vm448 = vcmp.gt.f32.partialorder %v447, 0.5
        %v449 = vsel %vm448, 0.0, -1e+09
        %v450 = vld [vmem:[%s4] sm:$0xf]
        %v451 = vld [vmem:[%s4 + $0x4] sm:$0xf]
        %v452 = vld [vmem:[%s4 + $0x8] sm:$0xf]
        %v453 = vld [vmem:[%s4 + $0xc] sm:$0xf]
        %v454 = vld [vmem:[%s4 + $0x10] sm:$0xf]
        %v455 = vld [vmem:[%s4 + $0x14] sm:$0xf]
        %v456 = vld [vmem:[%s4 + $0x18] sm:$0xf]
        %v457 = vld [vmem:[%s4 + $0x1c] sm:$0xf]
        %v458 = vld [vmem:[%s4 + $0x20] sm:$0xf]
        %v459 = vld [vmem:[%s4 + $0x24] sm:$0xf]
        %v460 = vld [vmem:[%s4 + $0x28] sm:$0xf]
        %v461 = vld [vmem:[%s4 + $0x2c] sm:$0xf]
        %v462 = vld [vmem:[%s4 + $0x30] sm:$0xf]
        %v463 = vld [vmem:[%s4 + $0x34] sm:$0xf]
        %v464 = vld [vmem:[%s4 + $0x38] sm:$0xf]
        %v465 = vld [vmem:[%s4 + $0x3c] sm:$0xf]
        %v466 = vld [vmem:[%s4 + $0x40] sm:$0xf]
        %v467 = vld [vmem:[%s4 + $0x44] sm:$0xf]
        %v468 = vld [vmem:[%s4 + $0x48] sm:$0xf]
        %v469 = vld [vmem:[%s4 + $0x4c] sm:$0xf]
        %v470 = vld [vmem:[%s4 + $0x50] sm:$0xf]
        %v471 = vld [vmem:[%s4 + $0x54] sm:$0xf]
        %v472 = vld [vmem:[%s4 + $0x58] sm:$0xf]
        %v473 = vld [vmem:[%s4 + $0x5c] sm:$0xf]
        %v474 = vld [vmem:[%s4 + $0x60] sm:$0xf]
        %v475 = vld [vmem:[%s4 + $0x64] sm:$0xf]
        %v476 = vld [vmem:[%s4 + $0x68] sm:$0xf]
        %v477 = vld [vmem:[%s4 + $0x6c] sm:$0xf]
        %v478 = vld [vmem:[%s4 + $0x70] sm:$0xf]
        %v479 = vld [vmem:[%s4 + $0x74] sm:$0xf]
        %v480 = vld [vmem:[%s4 + $0x78] sm:$0xf]
        %v481 = vld [vmem:[%s4 + $0x7c] sm:$0xf]
        %v482 = vld [vmem:[%s4 + $0x80] sm:$0xf]
        %v483 = vld [vmem:[%s4 + $0x84] sm:$0xf]
        %v484 = vld [vmem:[%s4 + $0x88] sm:$0xf]
        %v485 = vld [vmem:[%s4 + $0x8c] sm:$0xf]
        %v486 = vld [vmem:[%s4 + $0x90] sm:$0xf]
        %v487 = vld [vmem:[%s4 + $0x94] sm:$0xf]
        %v488 = vld [vmem:[%s4 + $0x98] sm:$0xf]
        %v489 = vld [vmem:[%s4 + $0x9c] sm:$0xf]
        %v490 = vld [vmem:[%s4 + $0xa0] sm:$0xf]
        %v491 = vld [vmem:[%s4 + $0xa4] sm:$0xf]
        %v492 = vld [vmem:[%s4 + $0xa8] sm:$0xf]
        %v493 = vld [vmem:[%s4 + $0xac] sm:$0xf]
        %v494 = vld [vmem:[%s4 + $0xb0] sm:$0xf]
        %v495 = vld [vmem:[%s4 + $0xb4] sm:$0xf]
        %v496 = vld [vmem:[%s4 + $0xb8] sm:$0xf]
        %v497 = vld [vmem:[%s4 + $0xbc] sm:$0xf]
        %v498 = vld [vmem:[%s5] sm:$0x1]
        %v499 = vld [vmem:[%s5 + $0x1] sm:$0x1]
        %v500 = vld [vmem:[%s5 + $0x2] sm:$0x1]
        %v501 = vld [vmem:[%s5 + $0x3] sm:$0x1]
        %v502 = vld [vmem:[%s5 + $0x4] sm:$0x1]
        %v503 = vld [vmem:[%s5 + $0x5] sm:$0x1]
        %v504 = vld [vmem:[%s5 + $0x6] sm:$0x1]
        %v505 = vld [vmem:[%s5 + $0x7] sm:$0x1]
        %v506 = vld [vmem:[%s5 + $0x8] sm:$0x1]
        %v507 = vld [vmem:[%s5 + $0x9] sm:$0x1]
        %v508 = vld [vmem:[%s5 + $0xa] sm:$0x1]
        %v509 = vld [vmem:[%s5 + $0xb] sm:$0x1]
        %v510 = vld [vmem:[%s6] sm:$0xf]
        %v511 = vld [vmem:[%s6 + $0x4] sm:$0xf]
        %v512 = vld [vmem:[%s6 + $0x8] sm:$0xf]
        %v513 = vld [vmem:[%s6 + $0xc] sm:$0xf]
        %v514 = vld [vmem:[%s7] sm:$0x1]
        %v515 = vld [vmem:[%s8] sm:$0xf]
        %v516 = vld [vmem:[%s8 + $0x4] sm:$0xf]
        %v517 = vld [vmem:[%s8 + $0x8] sm:$0xf]
        %v518 = vld [vmem:[%s8 + $0xc] sm:$0xf]
        %v519 = vld [vmem:[%s8 + $0x10] sm:$0xf]
        %v520 = vld [vmem:[%s8 + $0x14] sm:$0xf]
        %v521 = vld [vmem:[%s8 + $0x18] sm:$0xf]
        %v522 = vld [vmem:[%s8 + $0x1c] sm:$0xf]
        %v523 = vld [vmem:[%s9] sm:$0x1]
        %v524 = vld [vmem:[%s10] sm:$0x3f]
        %v525 = vpack.c.bf16 %v431, %v431
        %v538 = vlaneseq
        %v539 = vshrl.u32 %v538, 7
        %v540 = vsub.s32 0, %v539
        %v541 = vrot.slane %v498, %v540
        %v542 = vlaneseq
        %v543 = vshrl.u32 %v542, 7
        %v544 = vsub.s32 0, %v543
        %v545 = vrot.slane %v499, %v544
        %v546 = vlaneseq
        %v547 = vshrl.u32 %v546, 7
        %v548 = vsub.s32 0, %v547
        %v549 = vrot.slane %v500, %v548
        %v550 = vlaneseq
        %v551 = vshrl.u32 %v550, 7
        %v552 = vsub.s32 0, %v551
        %v553 = vrot.slane %v501, %v552
        %v554 = vlaneseq
        %v555 = vshrl.u32 %v554, 7
        %v556 = vsub.s32 0, %v555
        %v557 = vrot.slane %v502, %v556
        %v558 = vlaneseq
        %v559 = vshrl.u32 %v558, 7
        %v560 = vsub.s32 0, %v559
        %v561 = vrot.slane %v503, %v560
        %v562 = vlaneseq
        %v563 = vshrl.u32 %v562, 7
        %v564 = vsub.s32 0, %v563
        %v565 = vrot.slane %v504, %v564
        %v566 = vlaneseq
        %v567 = vshrl.u32 %v566, 7
        %v568 = vsub.s32 0, %v567
        %v569 = vrot.slane %v505, %v568
        %v570 = vlaneseq
        %v571 = vshrl.u32 %v570, 7
        %v572 = vsub.s32 0, %v571
        %v573 = vrot.slane %v506, %v572
        %v574 = vlaneseq
        %v575 = vshrl.u32 %v574, 7
        %v576 = vsub.s32 0, %v575
        %v577 = vrot.slane %v507, %v576
        %v578 = vlaneseq
        %v579 = vshrl.u32 %v578, 7
        %v580 = vsub.s32 0, %v579
        %v581 = vrot.slane %v508, %v580
        %v582 = vlaneseq
        %v583 = vshrl.u32 %v582, 7
        %v584 = vsub.s32 0, %v583
        %v585 = vrot.slane %v509, %v584
        %v602 = vunpack.c.l.b16 %v450
        %v603 = vunpack.c.l.b16 %v451
        %v604 = vunpack.c.l.b16 %v452
        %v605 = vunpack.c.l.b16 %v453
        %v606 = vpack.c.b16 %v603, %v602
        %v607 = vpack.c.b16 %v605, %v604
        %vm610 = vcmask 261120
        %v612 = vsel %vm610, %v525, 0
        %614 = vmatprep.subr.bf16.mxu0 0
        %615 = vmatpush1.bf16.msra.mxu0 %v606
        %616 = vmatprep.subr.bf16.mxu0 0
        %617 = vmatpush1.bf16.msra.mxu0 %v607
        %618 = vmatprep.subr.bf16.mxu0 0
        %619 = vmatpush1.bf16.msra.mxu0 0
        %620 = vmatprep.subr.bf16.mxu0 0
        %621 = vmatpush1.bf16.msra.mxu0 0
        %622 = vmatprep.subr.bf16.mxu0 0
        %623 = vmatpush1.bf16.msra.mxu0 0
        %624 = vmatprep.subr.bf16.mxu0 0
        %625 = vmatpush1.bf16.msra.mxu0 0
        %626 = vmatprep.subr.bf16.mxu0 0
        %627 = vmatpush1.bf16.msra.mxu0 0
        %628 = vmatprep.subr.bf16.mxu0 0
        %629 = vmatpush1.bf16.msra.mxu0 0
        %630 = vmatprep.subr.bf16.mxu0 0
        %631 = vmatpush1.bf16.msra.mxu0 0
        %632 = vmatprep.subr.bf16.mxu0 0
        %633 = vmatpush1.bf16.msra.mxu0 0
        %634 = vmatprep.subr.bf16.mxu0 0
        %635 = vmatpush1.bf16.msra.mxu0 0
        %636 = vmatprep.subr.bf16.mxu0 0
        %637 = vmatpush1.bf16.msra.mxu0 0
        %638 = vmatprep.subr.bf16.mxu0 0
        %639 = vmatpush1.bf16.msra.mxu0 0
        %640 = vmatprep.subr.bf16.mxu0 0
        %641 = vmatpush1.bf16.msra.mxu0 0
        %642 = vmatprep.subr.bf16.mxu0 0
        %643 = vmatpush1.bf16.msra.mxu0 0
        %644 = vmatprep.subr.bf16.mxu0 0
        %645 = vmatpush1.bf16.msra.mxu0 0
        %646 = vmatprep.mubr.bf16.mxu0 0
        %647 = vmatmul.mubr.bf16.gmra.mrb[0].mxu0 %v612
        %v648 = vpop.f32.mrb[0].mxu0
        %v649 = vadd.f32 %v541, %v648
        %v650 = vpop.f32.mrb[0].mxu0
        %v651 = vpop.f32.mrb[0].mxu0
        %v652 = vpop.f32.mrb[0].mxu0
        %653 = vdwg.mxu0
        %v658 = vunpack.c.l.b16 %v454
        %v659 = vunpack.c.l.b16 %v455
        %v660 = vunpack.c.l.b16 %v456
        %v661 = vunpack.c.l.b16 %v457
        %v662 = vpack.c.b16 %v659, %v658
        %v663 = vpack.c.b16 %v661, %v660
        %666 = vmatprep.subr.bf16.mxu0 0
        %667 = vmatpush1.bf16.msra.mxu0 %v662
        %668 = vmatprep.subr.bf16.mxu0 0
        %669 = vmatpush1.bf16.msra.mxu0 %v663
        %670 = vmatprep.subr.bf16.mxu0 0
        %671 = vmatpush1.bf16.msra.mxu0 0
        %672 = vmatprep.subr.bf16.mxu0 0
        %673 = vmatpush1.bf16.msra.mxu0 0
        %674 = vmatprep.subr.bf16.mxu0 0
        %675 = vmatpush1.bf16.msra.mxu0 0
        %676 = vmatprep.subr.bf16.mxu0 0
        %677 = vmatpush1.bf16.msra.mxu0 0
        %678 = vmatprep.subr.bf16.mxu0 0
        %679 = vmatpush1.bf16.msra.mxu0 0
        %680 = vmatprep.subr.bf16.mxu0 0
        %681 = vmatpush1.bf16.msra.mxu0 0
        %682 = vmatprep.subr.bf16.mxu0 0
        %683 = vmatpush1.bf16.msra.mxu0 0
        %684 = vmatprep.subr.bf16.mxu0 0
        %685 = vmatpush1.bf16.msra.mxu0 0
        %686 = vmatprep.subr.bf16.mxu0 0
        %687 = vmatpush1.bf16.msra.mxu0 0
        %688 = vmatprep.subr.bf16.mxu0 0
        %689 = vmatpush1.bf16.msra.mxu0 0
        %690 = vmatprep.subr.bf16.mxu0 0
        %691 = vmatpush1.bf16.msra.mxu0 0
        %692 = vmatprep.subr.bf16.mxu0 0
        %693 = vmatpush1.bf16.msra.mxu0 0
        %694 = vmatprep.subr.bf16.mxu0 0
        %695 = vmatpush1.bf16.msra.mxu0 0
        %696 = vmatprep.subr.bf16.mxu0 0
        %697 = vmatpush1.bf16.msra.mxu0 0
        %698 = vmatprep.mubr.bf16.mxu0 0
        %699 = vmatmul.mubr.bf16.gmra.mrb[0].mxu0 %v612
        %v700 = vpop.f32.mrb[0].mxu0
        %v701 = vadd.f32 %v545, %v700
        %v702 = vpop.f32.mrb[0].mxu0
        %v703 = vpop.f32.mrb[0].mxu0
        %v704 = vpop.f32.mrb[0].mxu0
        %705 = vdwg.mxu0
        %v710 = vunpack.c.l.b16 %v458
        %v711 = vunpack.c.l.b16 %v459
        %v712 = vunpack.c.l.b16 %v460
        %v713 = vunpack.c.l.b16 %v461
        %v714 = vpack.c.b16 %v711, %v710
        %v715 = vpack.c.b16 %v713, %v712
        %718 = vmatprep.subr.bf16.mxu0 0
        %719 = vmatpush1.bf16.msra.mxu0 %v714
        %720 = vmatprep.subr.bf16.mxu0 0
        %721 = vmatpush1.bf16.msra.mxu0 %v715
        %722 = vmatprep.subr.bf16.mxu0 0
        %723 = vmatpush1.bf16.msra.mxu0 0
        %724 = vmatprep.subr.bf16.mxu0 0
        %725 = vmatpush1.bf16.msra.mxu0 0
        %726 = vmatprep.subr.bf16.mxu0 0
        %727 = vmatpush1.bf16.msra.mxu0 0
        %728 = vmatprep.subr.bf16.mxu0 0
        %729 = vmatpush1.bf16.msra.mxu0 0
        %730 = vmatprep.subr.bf16.mxu0 0
        %731 = vmatpush1.bf16.msra.mxu0 0
        %732 = vmatprep.subr.bf16.mxu0 0
        %733 = vmatpush1.bf16.msra.mxu0 0
        %734 = vmatprep.subr.bf16.mxu0 0
        %735 = vmatpush1.bf16.msra.mxu0 0
        %736 = vmatprep.subr.bf16.mxu0 0
        %737 = vmatpush1.bf16.msra.mxu0 0
        %738 = vmatprep.subr.bf16.mxu0 0
        %739 = vmatpush1.bf16.msra.mxu0 0
        %740 = vmatprep.subr.bf16.mxu0 0
        %741 = vmatpush1.bf16.msra.mxu0 0
        %742 = vmatprep.subr.bf16.mxu0 0
        %743 = vmatpush1.bf16.msra.mxu0 0
        %744 = vmatprep.subr.bf16.mxu0 0
        %745 = vmatpush1.bf16.msra.mxu0 0
        %746 = vmatprep.subr.bf16.mxu0 0
        %747 = vmatpush1.bf16.msra.mxu0 0
        %748 = vmatprep.subr.bf16.mxu0 0
        %749 = vmatpush1.bf16.msra.mxu0 0
        %750 = vmatprep.mubr.bf16.mxu0 0
        %751 = vmatmul.mubr.bf16.gmra.mrb[0].mxu0 %v612
        %v752 = vpop.f32.mrb[0].mxu0
        %v753 = vadd.f32 %v549, %v752
        %v754 = vpop.f32.mrb[0].mxu0
        %v755 = vpop.f32.mrb[0].mxu0
        %v756 = vpop.f32.mrb[0].mxu0
        %757 = vdwg.mxu0
        %v762 = vunpack.c.l.b16 %v462
        %v763 = vunpack.c.l.b16 %v463
        %v764 = vunpack.c.l.b16 %v464
        %v765 = vunpack.c.l.b16 %v465
        %v766 = vpack.c.b16 %v763, %v762
        %v767 = vpack.c.b16 %v765, %v764
        %770 = vmatprep.subr.bf16.mxu0 0
        %771 = vmatpush1.bf16.msra.mxu0 %v766
        %772 = vmatprep.subr.bf16.mxu0 0
        %773 = vmatpush1.bf16.msra.mxu0 %v767
        %774 = vmatprep.subr.bf16.mxu0 0
        %775 = vmatpush1.bf16.msra.mxu0 0
        %776 = vmatprep.subr.bf16.mxu0 0
        %777 = vmatpush1.bf16.msra.mxu0 0
        %778 = vmatprep.subr.bf16.mxu0 0
        %779 = vmatpush1.bf16.msra.mxu0 0
        %780 = vmatprep.subr.bf16.mxu0 0
        %781 = vmatpush1.bf16.msra.mxu0 0
        %782 = vmatprep.subr.bf16.mxu0 0
        %783 = vmatpush1.bf16.msra.mxu0 0
        %784 = vmatprep.subr.bf16.mxu0 0
        %785 = vmatpush1.bf16.msra.mxu0 0
        %786 = vmatprep.subr.bf16.mxu0 0
        %787 = vmatpush1.bf16.msra.mxu0 0
        %788 = vmatprep.subr.bf16.mxu0 0
        %789 = vmatpush1.bf16.msra.mxu0 0
        %790 = vmatprep.subr.bf16.mxu0 0
        %791 = vmatpush1.bf16.msra.mxu0 0
        %792 = vmatprep.subr.bf16.mxu0 0
        %793 = vmatpush1.bf16.msra.mxu0 0
        %794 = vmatprep.subr.bf16.mxu0 0
        %795 = vmatpush1.bf16.msra.mxu0 0
        %796 = vmatprep.subr.bf16.mxu0 0
        %797 = vmatpush1.bf16.msra.mxu0 0
        %798 = vmatprep.subr.bf16.mxu0 0
        %799 = vmatpush1.bf16.msra.mxu0 0
        %800 = vmatprep.subr.bf16.mxu0 0
        %801 = vmatpush1.bf16.msra.mxu0 0
        %802 = vmatprep.mubr.bf16.mxu0 0
        %803 = vmatmul.mubr.bf16.gmra.mrb[0].mxu0 %v612
        %v804 = vpop.f32.mrb[0].mxu0
        %v805 = vadd.f32 %v553, %v804
        %v806 = vpop.f32.mrb[0].mxu0
        %v807 = vpop.f32.mrb[0].mxu0
        %v808 = vpop.f32.mrb[0].mxu0
        %809 = vdwg.mxu0
        %v814 = vunpack.c.l.b16 %v466
        %v815 = vunpack.c.l.b16 %v467
        %v816 = vunpack.c.l.b16 %v468
        %v817 = vunpack.c.l.b16 %v469
        %v818 = vpack.c.b16 %v815, %v814
        %v819 = vpack.c.b16 %v817, %v816
        %822 = vmatprep.subr.bf16.mxu0 0
        %823 = vmatpush1.bf16.msra.mxu0 %v818
        %824 = vmatprep.subr.bf16.mxu0 0
        %825 = vmatpush1.bf16.msra.mxu0 %v819
        %826 = vmatprep.subr.bf16.mxu0 0
        %827 = vmatpush1.bf16.msra.mxu0 0
        %828 = vmatprep.subr.bf16.mxu0 0
        %829 = vmatpush1.bf16.msra.mxu0 0
        %830 = vmatprep.subr.bf16.mxu0 0
        %831 = vmatpush1.bf16.msra.mxu0 0
        %832 = vmatprep.subr.bf16.mxu0 0
        %833 = vmatpush1.bf16.msra.mxu0 0
        %834 = vmatprep.subr.bf16.mxu0 0
        %835 = vmatpush1.bf16.msra.mxu0 0
        %836 = vmatprep.subr.bf16.mxu0 0
        %837 = vmatpush1.bf16.msra.mxu0 0
        %838 = vmatprep.subr.bf16.mxu0 0
        %839 = vmatpush1.bf16.msra.mxu0 0
        %840 = vmatprep.subr.bf16.mxu0 0
        %841 = vmatpush1.bf16.msra.mxu0 0
        %842 = vmatprep.subr.bf16.mxu0 0
        %843 = vmatpush1.bf16.msra.mxu0 0
        %844 = vmatprep.subr.bf16.mxu0 0
        %845 = vmatpush1.bf16.msra.mxu0 0
        %846 = vmatprep.subr.bf16.mxu0 0
        %847 = vmatpush1.bf16.msra.mxu0 0
        %848 = vmatprep.subr.bf16.mxu0 0
        %849 = vmatpush1.bf16.msra.mxu0 0
        %850 = vmatprep.subr.bf16.mxu0 0
        %851 = vmatpush1.bf16.msra.mxu0 0
        %852 = vmatprep.subr.bf16.mxu0 0
        %853 = vmatpush1.bf16.msra.mxu0 0
        %854 = vmatprep.mubr.bf16.mxu0 0
        %855 = vmatmul.mubr.bf16.gmra.mrb[0].mxu0 %v612
        %v856 = vpop.f32.mrb[0].mxu0
        %v857 = vadd.f32 %v557, %v856
        %v858 = vpop.f32.mrb[0].mxu0
        %v859 = vpop.f32.mrb[0].mxu0
        %v860 = vpop.f32.mrb[0].mxu0
        %861 = vdwg.mxu0
        %v866 = vunpack.c.l.b16 %v470
        %v867 = vunpack.c.l.b16 %v471
        %v868 = vunpack.c.l.b16 %v472
        %v869 = vunpack.c.l.b16 %v473
        %v870 = vpack.c.b16 %v867, %v866
        %v871 = vpack.c.b16 %v869, %v868
        %874 = vmatprep.subr.bf16.mxu0 0
        %875 = vmatpush1.bf16.msra.mxu0 %v870
        %876 = vmatprep.subr.bf16.mxu0 0
        %877 = vmatpush1.bf16.msra.mxu0 %v871
        %878 = vmatprep.subr.bf16.mxu0 0
        %879 = vmatpush1.bf16.msra.mxu0 0
        %880 = vmatprep.subr.bf16.mxu0 0
        %881 = vmatpush1.bf16.msra.mxu0 0
        %882 = vmatprep.subr.bf16.mxu0 0
        %883 = vmatpush1.bf16.msra.mxu0 0
        %884 = vmatprep.subr.bf16.mxu0 0
        %885 = vmatpush1.bf16.msra.mxu0 0
        %886 = vmatprep.subr.bf16.mxu0 0
        %887 = vmatpush1.bf16.msra.mxu0 0
        %888 = vmatprep.subr.bf16.mxu0 0
        %889 = vmatpush1.bf16.msra.mxu0 0
        %890 = vmatprep.subr.bf16.mxu0 0
        %891 = vmatpush1.bf16.msra.mxu0 0
        %892 = vmatprep.subr.bf16.mxu0 0
        %893 = vmatpush1.bf16.msra.mxu0 0
        %894 = vmatprep.subr.bf16.mxu0 0
        %895 = vmatpush1.bf16.msra.mxu0 0
        %896 = vmatprep.subr.bf16.mxu0 0
        %897 = vmatpush1.bf16.msra.mxu0 0
        %898 = vmatprep.subr.bf16.mxu0 0
        %899 = vmatpush1.bf16.msra.mxu0 0
        %900 = vmatprep.subr.bf16.mxu0 0
        %901 = vmatpush1.bf16.msra.mxu0 0
        %902 = vmatprep.subr.bf16.mxu0 0
        %903 = vmatpush1.bf16.msra.mxu0 0
        %904 = vmatprep.subr.bf16.mxu0 0
        %905 = vmatpush1.bf16.msra.mxu0 0
        %906 = vmatprep.mubr.bf16.mxu0 0
        %907 = vmatmul.mubr.bf16.gmra.mrb[0].mxu0 %v612
        %v908 = vpop.f32.mrb[0].mxu0
        %v909 = vadd.f32 %v561, %v908
        %v910 = vpop.f32.mrb[0].mxu0
        %v911 = vpop.f32.mrb[0].mxu0
        %v912 = vpop.f32.mrb[0].mxu0
        %913 = vdwg.mxu0
        %v918 = vunpack.c.l.b16 %v474
        %v919 = vunpack.c.l.b16 %v475
        %v920 = vunpack.c.l.b16 %v476
        %v921 = vunpack.c.l.b16 %v477
        %v922 = vpack.c.b16 %v919, %v918
        %v923 = vpack.c.b16 %v921, %v920
        %926 = vmatprep.subr.bf16.mxu0 0
        %927 = vmatpush1.bf16.msra.mxu0 %v922
        %928 = vmatprep.subr.bf16.mxu0 0
        %929 = vmatpush1.bf16.msra.mxu0 %v923
        %930 = vmatprep.subr.bf16.mxu0 0
        %931 = vmatpush1.bf16.msra.mxu0 0
        %932 = vmatprep.subr.bf16.mxu0 0
        %933 = vmatpush1.bf16.msra.mxu0 0
        %934 = vmatprep.subr.bf16.mxu0 0
        %935 = vmatpush1.bf16.msra.mxu0 0
        %936 = vmatprep.subr.bf16.mxu0 0
        %937 = vmatpush1.bf16.msra.mxu0 0
        %938 = vmatprep.subr.bf16.mxu0 0
        %939 = vmatpush1.bf16.msra.mxu0 0
        %940 = vmatprep.subr.bf16.mxu0 0
        %941 = vmatpush1.bf16.msra.mxu0 0
        %942 = vmatprep.subr.bf16.mxu0 0
        %943 = vmatpush1.bf16.msra.mxu0 0
        %944 = vmatprep.subr.bf16.mxu0 0
        %945 = vmatpush1.bf16.msra.mxu0 0
        %946 = vmatprep.subr.bf16.mxu0 0
        %947 = vmatpush1.bf16.msra.mxu0 0
        %948 = vmatprep.subr.bf16.mxu0 0
        %949 = vmatpush1.bf16.msra.mxu0 0
        %950 = vmatprep.subr.bf16.mxu0 0
        %951 = vmatpush1.bf16.msra.mxu0 0
        %952 = vmatprep.subr.bf16.mxu0 0
        %953 = vmatpush1.bf16.msra.mxu0 0
        %954 = vmatprep.subr.bf16.mxu0 0
        %955 = vmatpush1.bf16.msra.mxu0 0
        %956 = vmatprep.subr.bf16.mxu0 0
        %957 = vmatpush1.bf16.msra.mxu0 0
        %958 = vmatprep.mubr.bf16.mxu0 0
        %959 = vmatmul.mubr.bf16.gmra.mrb[0].mxu0 %v612
        %v960 = vpop.f32.mrb[0].mxu0
        %v961 = vadd.f32 %v565, %v960
        %v962 = vpop.f32.mrb[0].mxu0
        %v963 = vpop.f32.mrb[0].mxu0
        %v964 = vpop.f32.mrb[0].mxu0
        %965 = vdwg.mxu0
        %v970 = vunpack.c.l.b16 %v478
        %v971 = vunpack.c.l.b16 %v479
        %v972 = vunpack.c.l.b16 %v480
        %v973 = vunpack.c.l.b16 %v481
        %v974 = vpack.c.b16 %v971, %v970
        %v975 = vpack.c.b16 %v973, %v972
        %978 = vmatprep.subr.bf16.mxu0 0
        %979 = vmatpush1.bf16.msra.mxu0 %v974
        %980 = vmatprep.subr.bf16.mxu0 0
        %981 = vmatpush1.bf16.msra.mxu0 %v975
        %982 = vmatprep.subr.bf16.mxu0 0
        %983 = vmatpush1.bf16.msra.mxu0 0
        %984 = vmatprep.subr.bf16.mxu0 0
        %985 = vmatpush1.bf16.msra.mxu0 0
        %986 = vmatprep.subr.bf16.mxu0 0
        %987 = vmatpush1.bf16.msra.mxu0 0
        %988 = vmatprep.subr.bf16.mxu0 0
        %989 = vmatpush1.bf16.msra.mxu0 0
        %990 = vmatprep.subr.bf16.mxu0 0
        %991 = vmatpush1.bf16.msra.mxu0 0
        %992 = vmatprep.subr.bf16.mxu0 0
        %993 = vmatpush1.bf16.msra.mxu0 0
        %994 = vmatprep.subr.bf16.mxu0 0
        %995 = vmatpush1.bf16.msra.mxu0 0
        %996 = vmatprep.subr.bf16.mxu0 0
        %997 = vmatpush1.bf16.msra.mxu0 0
        %998 = vmatprep.subr.bf16.mxu0 0
        %999 = vmatpush1.bf16.msra.mxu0 0
        %1000 = vmatprep.subr.bf16.mxu0 0
        %1001 = vmatpush1.bf16.msra.mxu0 0
        %1002 = vmatprep.subr.bf16.mxu0 0
        %1003 = vmatpush1.bf16.msra.mxu0 0
        %1004 = vmatprep.subr.bf16.mxu0 0
        %1005 = vmatpush1.bf16.msra.mxu0 0
        %1006 = vmatprep.subr.bf16.mxu0 0
        %1007 = vmatpush1.bf16.msra.mxu0 0
        %1008 = vmatprep.subr.bf16.mxu0 0
        %1009 = vmatpush1.bf16.msra.mxu0 0
        %1010 = vmatprep.mubr.bf16.mxu0 0
        %1011 = vmatmul.mubr.bf16.gmra.mrb[0].mxu0 %v612
        %v1012 = vpop.f32.mrb[0].mxu0
        %v1013 = vadd.f32 %v569, %v1012
        %v1014 = vpop.f32.mrb[0].mxu0
        %v1015 = vpop.f32.mrb[0].mxu0
        %v1016 = vpop.f32.mrb[0].mxu0
        %1017 = vdwg.mxu0
        %v1022 = vunpack.c.l.b16 %v482
        %v1023 = vunpack.c.l.b16 %v483
        %v1024 = vunpack.c.l.b16 %v484
        %v1025 = vunpack.c.l.b16 %v485
        %v1026 = vpack.c.b16 %v1023, %v1022
        %v1027 = vpack.c.b16 %v1025, %v1024
        %1030 = vmatprep.subr.bf16.mxu0 0
        %1031 = vmatpush1.bf16.msra.mxu0 %v1026
        %1032 = vmatprep.subr.bf16.mxu0 0
        %1033 = vmatpush1.bf16.msra.mxu0 %v1027
        %1034 = vmatprep.subr.bf16.mxu0 0
        %1035 = vmatpush1.bf16.msra.mxu0 0
        %1036 = vmatprep.subr.bf16.mxu0 0
        %1037 = vmatpush1.bf16.msra.mxu0 0
        %1038 = vmatprep.subr.bf16.mxu0 0
        %1039 = vmatpush1.bf16.msra.mxu0 0
        %1040 = vmatprep.subr.bf16.mxu0 0
        %1041 = vmatpush1.bf16.msra.mxu0 0
        %1042 = vmatprep.subr.bf16.mxu0 0
        %1043 = vmatpush1.bf16.msra.mxu0 0
        %1044 = vmatprep.subr.bf16.mxu0 0
        %1045 = vmatpush1.bf16.msra.mxu0 0
        %1046 = vmatprep.subr.bf16.mxu0 0
        %1047 = vmatpush1.bf16.msra.mxu0 0
        %1048 = vmatprep.subr.bf16.mxu0 0
        %1049 = vmatpush1.bf16.msra.mxu0 0
        %1050 = vmatprep.subr.bf16.mxu0 0
        %1051 = vmatpush1.bf16.msra.mxu0 0
        %1052 = vmatprep.subr.bf16.mxu0 0
        %1053 = vmatpush1.bf16.msra.mxu0 0
        %1054 = vmatprep.subr.bf16.mxu0 0
        %1055 = vmatpush1.bf16.msra.mxu0 0
        %1056 = vmatprep.subr.bf16.mxu0 0
        %1057 = vmatpush1.bf16.msra.mxu0 0
        %1058 = vmatprep.subr.bf16.mxu0 0
        %1059 = vmatpush1.bf16.msra.mxu0 0
        %1060 = vmatprep.subr.bf16.mxu0 0
        %1061 = vmatpush1.bf16.msra.mxu0 0
        %1062 = vmatprep.mubr.bf16.mxu0 0
        %1063 = vmatmul.mubr.bf16.gmra.mrb[0].mxu0 %v612
        %v1064 = vpop.f32.mrb[0].mxu0
        %v1065 = vadd.f32 %v573, %v1064
        %v1066 = vpop.f32.mrb[0].mxu0
        %v1067 = vpop.f32.mrb[0].mxu0
        %v1068 = vpop.f32.mrb[0].mxu0
        %1069 = vdwg.mxu0
        %v1074 = vunpack.c.l.b16 %v486
        %v1075 = vunpack.c.l.b16 %v487
        %v1076 = vunpack.c.l.b16 %v488
        %v1077 = vunpack.c.l.b16 %v489
        %v1078 = vpack.c.b16 %v1075, %v1074
        %v1079 = vpack.c.b16 %v1077, %v1076
        %1082 = vmatprep.subr.bf16.mxu0 0
        %1083 = vmatpush1.bf16.msra.mxu0 %v1078
        %1084 = vmatprep.subr.bf16.mxu0 0
        %1085 = vmatpush1.bf16.msra.mxu0 %v1079
        %1086 = vmatprep.subr.bf16.mxu0 0
        %1087 = vmatpush1.bf16.msra.mxu0 0
        %1088 = vmatprep.subr.bf16.mxu0 0
        %1089 = vmatpush1.bf16.msra.mxu0 0
        %1090 = vmatprep.subr.bf16.mxu0 0
        %1091 = vmatpush1.bf16.msra.mxu0 0
        %1092 = vmatprep.subr.bf16.mxu0 0
        %1093 = vmatpush1.bf16.msra.mxu0 0
        %1094 = vmatprep.subr.bf16.mxu0 0
        %1095 = vmatpush1.bf16.msra.mxu0 0
        %1096 = vmatprep.subr.bf16.mxu0 0
        %1097 = vmatpush1.bf16.msra.mxu0 0
        %1098 = vmatprep.subr.bf16.mxu0 0
        %1099 = vmatpush1.bf16.msra.mxu0 0
        %1100 = vmatprep.subr.bf16.mxu0 0
        %1101 = vmatpush1.bf16.msra.mxu0 0
        %1102 = vmatprep.subr.bf16.mxu0 0
        %1103 = vmatpush1.bf16.msra.mxu0 0
        %1104 = vmatprep.subr.bf16.mxu0 0
        %1105 = vmatpush1.bf16.msra.mxu0 0
        %1106 = vmatprep.subr.bf16.mxu0 0
        %1107 = vmatpush1.bf16.msra.mxu0 0
        %1108 = vmatprep.subr.bf16.mxu0 0
        %1109 = vmatpush1.bf16.msra.mxu0 0
        %1110 = vmatprep.subr.bf16.mxu0 0
        %1111 = vmatpush1.bf16.msra.mxu0 0
        %1112 = vmatprep.subr.bf16.mxu0 0
        %1113 = vmatpush1.bf16.msra.mxu0 0
        %1114 = vmatprep.mubr.bf16.mxu0 0
        %1115 = vmatmul.mubr.bf16.gmra.mrb[0].mxu0 %v612
        %v1116 = vpop.f32.mrb[0].mxu0
        %v1117 = vadd.f32 %v577, %v1116
        %v1118 = vpop.f32.mrb[0].mxu0
        %v1119 = vpop.f32.mrb[0].mxu0
        %v1120 = vpop.f32.mrb[0].mxu0
        %1121 = vdwg.mxu0
        %v1126 = vunpack.c.l.b16 %v490
        %v1127 = vunpack.c.l.b16 %v491
        %v1128 = vunpack.c.l.b16 %v492
        %v1129 = vunpack.c.l.b16 %v493
        %v1130 = vpack.c.b16 %v1127, %v1126
        %v1131 = vpack.c.b16 %v1129, %v1128
        %1134 = vmatprep.subr.bf16.mxu0 0
        %1135 = vmatpush1.bf16.msra.mxu0 %v1130
        %1136 = vmatprep.subr.bf16.mxu0 0
        %1137 = vmatpush1.bf16.msra.mxu0 %v1131
        %1138 = vmatprep.subr.bf16.mxu0 0
        %1139 = vmatpush1.bf16.msra.mxu0 0
        %1140 = vmatprep.subr.bf16.mxu0 0
        %1141 = vmatpush1.bf16.msra.mxu0 0
        %1142 = vmatprep.subr.bf16.mxu0 0
        %1143 = vmatpush1.bf16.msra.mxu0 0
        %1144 = vmatprep.subr.bf16.mxu0 0
        %1145 = vmatpush1.bf16.msra.mxu0 0
        %1146 = vmatprep.subr.bf16.mxu0 0
        %1147 = vmatpush1.bf16.msra.mxu0 0
        %1148 = vmatprep.subr.bf16.mxu0 0
        %1149 = vmatpush1.bf16.msra.mxu0 0
        %1150 = vmatprep.subr.bf16.mxu0 0
        %1151 = vmatpush1.bf16.msra.mxu0 0
        %1152 = vmatprep.subr.bf16.mxu0 0
        %1153 = vmatpush1.bf16.msra.mxu0 0
        %1154 = vmatprep.subr.bf16.mxu0 0
        %1155 = vmatpush1.bf16.msra.mxu0 0
        %1156 = vmatprep.subr.bf16.mxu0 0
        %1157 = vmatpush1.bf16.msra.mxu0 0
        %1158 = vmatprep.subr.bf16.mxu0 0
        %1159 = vmatpush1.bf16.msra.mxu0 0
        %1160 = vmatprep.subr.bf16.mxu0 0
        %1161 = vmatpush1.bf16.msra.mxu0 0
        %1162 = vmatprep.subr.bf16.mxu0 0
        %1163 = vmatpush1.bf16.msra.mxu0 0
        %1164 = vmatprep.subr.bf16.mxu0 0
        %1165 = vmatpush1.bf16.msra.mxu0 0
        %1166 = vmatprep.mubr.bf16.mxu0 0
        %1167 = vmatmul.mubr.bf16.gmra.mrb[0].mxu0 %v612
        %v1168 = vpop.f32.mrb[0].mxu0
        %v1169 = vadd.f32 %v581, %v1168
        %v1170 = vpop.f32.mrb[0].mxu0
        %v1171 = vpop.f32.mrb[0].mxu0
        %v1172 = vpop.f32.mrb[0].mxu0
        %1173 = vdwg.mxu0
        %v1178 = vunpack.c.l.b16 %v494
        %v1179 = vunpack.c.l.b16 %v495
        %v1180 = vunpack.c.l.b16 %v496
        %v1181 = vunpack.c.l.b16 %v497
        %v1182 = vpack.c.b16 %v1179, %v1178
        %v1183 = vpack.c.b16 %v1181, %v1180
        %1186 = vmatprep.subr.bf16.mxu0 0
        %1187 = vmatpush1.bf16.msra.mxu0 %v1182
        %1188 = vmatprep.subr.bf16.mxu0 0
        %1189 = vmatpush1.bf16.msra.mxu0 %v1183
        %1190 = vmatprep.subr.bf16.mxu0 0
        %1191 = vmatpush1.bf16.msra.mxu0 0
        %1192 = vmatprep.subr.bf16.mxu0 0
        %1193 = vmatpush1.bf16.msra.mxu0 0
        %1194 = vmatprep.subr.bf16.mxu0 0
        %1195 = vmatpush1.bf16.msra.mxu0 0
        %1196 = vmatprep.subr.bf16.mxu0 0
        %1197 = vmatpush1.bf16.msra.mxu0 0
        %1198 = vmatprep.subr.bf16.mxu0 0
        %1199 = vmatpush1.bf16.msra.mxu0 0
        %1200 = vmatprep.subr.bf16.mxu0 0
        %1201 = vmatpush1.bf16.msra.mxu0 0
        %1202 = vmatprep.subr.bf16.mxu0 0
        %1203 = vmatpush1.bf16.msra.mxu0 0
        %1204 = vmatprep.subr.bf16.mxu0 0
        %1205 = vmatpush1.bf16.msra.mxu0 0
        %1206 = vmatprep.subr.bf16.mxu0 0
        %1207 = vmatpush1.bf16.msra.mxu0 0
        %1208 = vmatprep.subr.bf16.mxu0 0
        %1209 = vmatpush1.bf16.msra.mxu0 0
        %1210 = vmatprep.subr.bf16.mxu0 0
        %1211 = vmatpush1.bf16.msra.mxu0 0
        %1212 = vmatprep.subr.bf16.mxu0 0
        %1213 = vmatpush1.bf16.msra.mxu0 0
        %1214 = vmatprep.subr.bf16.mxu0 0
        %1215 = vmatpush1.bf16.msra.mxu0 0
        %1216 = vmatprep.subr.bf16.mxu0 0
        %1217 = vmatpush1.bf16.msra.mxu0 0
        %1218 = vmatprep.mubr.bf16.mxu0 0
        %1219 = vmatmul.mubr.bf16.gmra.mrb[0].mxu0 %v612
        %v1220 = vpop.f32.mrb[0].mxu0
        %v1221 = vadd.f32 %v585, %v1220
        %v1222 = vpop.f32.mrb[0].mxu0
        %v1223 = vpop.f32.mrb[0].mxu0
        %v1224 = vpop.f32.mrb[0].mxu0
        %1225 = vdwg.mxu0
        %v1226 = vpack.c.bf16 %v649, %v649
        %v1227 = vpack.c.bf16 %v701, %v701
        %v1228 = vpack.c.bf16 %v753, %v753
        %v1229 = vpack.c.bf16 %v805, %v805
        %v1230 = vpack.c.bf16 %v857, %v857
        %v1231 = vpack.c.bf16 %v909, %v909
        %v1232 = vpack.c.bf16 %v961, %v961
        %v1233 = vpack.c.bf16 %v1013, %v1013
        %v1235 = vsel %vm610, %v1226, 0
        %v1238 = vsel %vm610, %v1230, 0
        %1240 = vmatprep.subr.bf16.mxu0 0
        %1241 = vmatpush1.bf16.xpose.msra.mxu0 %v1238
        %1242 = vmatprep.subr.bf16.mxu0 0
        %1243 = vmatpush1.bf16.xpose.msra.mxu0 0
        %1244 = vmatprep.subr.bf16.mxu0 0
        %1245 = vmatpush1.bf16.xpose.msra.mxu0 0
        %1246 = vmatprep.subr.bf16.mxu0 0
        %1247 = vmatpush1.bf16.xpose.msra.mxu0 0
        %1248 = vmatprep.subr.bf16.mxu0 0
        %1249 = vmatpush1.bf16.xpose.msra.mxu0 0
        %1250 = vmatprep.subr.bf16.mxu0 0
        %1251 = vmatpush1.bf16.xpose.msra.mxu0 0
        %1252 = vmatprep.subr.bf16.mxu0 0
        %1253 = vmatpush1.bf16.xpose.msra.mxu0 0
        %1254 = vmatprep.subr.bf16.mxu0 0
        %1255 = vmatpush1.bf16.xpose.msra.mxu0 0
        %1256 = vmatprep.subr.bf16.mxu0 0
        %1257 = vmatpush1.bf16.xpose.msra.mxu0 0
        %1258 = vmatprep.subr.bf16.mxu0 0
        %1259 = vmatpush1.bf16.xpose.msra.mxu0 0
        %1260 = vmatprep.subr.bf16.mxu0 0
        %1261 = vmatpush1.bf16.xpose.msra.mxu0 0
        %1262 = vmatprep.subr.bf16.mxu0 0
        %1263 = vmatpush1.bf16.xpose.msra.mxu0 0
        %1264 = vmatprep.subr.bf16.mxu0 0
        %1265 = vmatpush1.bf16.xpose.msra.mxu0 0
        %1266 = vmatprep.subr.bf16.mxu0 0
        %1267 = vmatpush1.bf16.xpose.msra.mxu0 0
        %1268 = vmatprep.subr.bf16.mxu0 0
        %1269 = vmatpush1.bf16.xpose.msra.mxu0 0
        %1270 = vmatprep.subr.bf16.mxu0 0
        %1271 = vmatpush1.bf16.xpose.msra.mxu0 0
        %1272 = vmatprep.mubr.bf16.mxu0 0
        %1273 = vmatmul.mubr.bf16.gmra.mrb[0].mxu0 %v1235
        %v1274 = vpop.f32.mrb[0].mxu0
        %v1275 = vadd.f32 %v446, %v1274
        %v1276 = vpop.f32.mrb[0].mxu0
        %v1277 = vpop.f32.mrb[0].mxu0
        %v1278 = vpop.f32.mrb[0].mxu0
        %1279 = vdwg.mxu0
        %v1281 = vsel %vm610, %v1227, 0
        %v1284 = vsel %vm610, %v1231, 0
        %1286 = vmatprep.subr.bf16.mxu0 0
        %1287 = vmatpush1.bf16.xpose.msra.mxu0 %v1284
        %1288 = vmatprep.subr.bf16.mxu0 0
        %1289 = vmatpush1.bf16.xpose.msra.mxu0 0
        %1290 = vmatprep.subr.bf16.mxu0 0
        %1291 = vmatpush1.bf16.xpose.msra.mxu0 0
        %1292 = vmatprep.subr.bf16.mxu0 0
        %1293 = vmatpush1.bf16.xpose.msra.mxu0 0
        %1294 = vmatprep.subr.bf16.mxu0 0
        %1295 = vmatpush1.bf16.xpose.msra.mxu0 0
        %1296 = vmatprep.subr.bf16.mxu0 0
        %1297 = vmatpush1.bf16.xpose.msra.mxu0 0
        %1298 = vmatprep.subr.bf16.mxu0 0
        %1299 = vmatpush1.bf16.xpose.msra.mxu0 0
        %1300 = vmatprep.subr.bf16.mxu0 0
        %1301 = vmatpush1.bf16.xpose.msra.mxu0 0
        %1302 = vmatprep.subr.bf16.mxu0 0
        %1303 = vmatpush1.bf16.xpose.msra.mxu0 0
        %1304 = vmatprep.subr.bf16.mxu0 0
        %1305 = vmatpush1.bf16.xpose.msra.mxu0 0
        %1306 = vmatprep.subr.bf16.mxu0 0
        %1307 = vmatpush1.bf16.xpose.msra.mxu0 0
        %1308 = vmatprep.subr.bf16.mxu0 0
        %1309 = vmatpush1.bf16.xpose.msra.mxu0 0
        %1310 = vmatprep.subr.bf16.mxu0 0
        %1311 = vmatpush1.bf16.xpose.msra.mxu0 0
        %1312 = vmatprep.subr.bf16.mxu0 0
        %1313 = vmatpush1.bf16.xpose.msra.mxu0 0
        %1314 = vmatprep.subr.bf16.mxu0 0
        %1315 = vmatpush1.bf16.xpose.msra.mxu0 0
        %1316 = vmatprep.subr.bf16.mxu0 0
        %1317 = vmatpush1.bf16.xpose.msra.mxu0 0
        %1318 = vmatprep.mubr.bf16.mxu0 0
        %1319 = vmatmul.mubr.bf16.gmra.mrb[0].mxu0 %v1281
        %v1320 = vpop.f32.mrb[0].mxu0
        %v1321 = vadd.f32 %v446, %v1320
        %v1322 = vpop.f32.mrb[0].mxu0
        %v1323 = vpop.f32.mrb[0].mxu0
        %v1324 = vpop.f32.mrb[0].mxu0
        %1325 = vdwg.mxu0
        %v1327 = vsel %vm610, %v1228, 0
        %v1330 = vsel %vm610, %v1232, 0
        %1332 = vmatprep.subr.bf16.mxu0 0
        %1333 = vmatpush1.bf16.xpose.msra.mxu0 %v1330
        %1334 = vmatprep.subr.bf16.mxu0 0
        %1335 = vmatpush1.bf16.xpose.msra.mxu0 0
        %1336 = vmatprep.subr.bf16.mxu0 0
        %1337 = vmatpush1.bf16.xpose.msra.mxu0 0
        %1338 = vmatprep.subr.bf16.mxu0 0
        %1339 = vmatpush1.bf16.xpose.msra.mxu0 0
        %1340 = vmatprep.subr.bf16.mxu0 0
        %1341 = vmatpush1.bf16.xpose.msra.mxu0 0
        %1342 = vmatprep.subr.bf16.mxu0 0
        %1343 = vmatpush1.bf16.xpose.msra.mxu0 0
        %1344 = vmatprep.subr.bf16.mxu0 0
        %1345 = vmatpush1.bf16.xpose.msra.mxu0 0
        %1346 = vmatprep.subr.bf16.mxu0 0
        %1347 = vmatpush1.bf16.xpose.msra.mxu0 0
        %1348 = vmatprep.subr.bf16.mxu0 0
        %1349 = vmatpush1.bf16.xpose.msra.mxu0 0
        %1350 = vmatprep.subr.bf16.mxu0 0
        %1351 = vmatpush1.bf16.xpose.msra.mxu0 0
        %1352 = vmatprep.subr.bf16.mxu0 0
        %1353 = vmatpush1.bf16.xpose.msra.mxu0 0
        %1354 = vmatprep.subr.bf16.mxu0 0
        %1355 = vmatpush1.bf16.xpose.msra.mxu0 0
        %1356 = vmatprep.subr.bf16.mxu0 0
        %1357 = vmatpush1.bf16.xpose.msra.mxu0 0
        %1358 = vmatprep.subr.bf16.mxu0 0
        %1359 = vmatpush1.bf16.xpose.msra.mxu0 0
        %1360 = vmatprep.subr.bf16.mxu0 0
        %1361 = vmatpush1.bf16.xpose.msra.mxu0 0
        %1362 = vmatprep.subr.bf16.mxu0 0
        %1363 = vmatpush1.bf16.xpose.msra.mxu0 0
        %1364 = vmatprep.mubr.bf16.mxu0 0
        %1365 = vmatmul.mubr.bf16.gmra.mrb[0].mxu0 %v1327
        %v1366 = vpop.f32.mrb[0].mxu0
        %v1367 = vadd.f32 %v446, %v1366
        %v1368 = vpop.f32.mrb[0].mxu0
        %v1369 = vpop.f32.mrb[0].mxu0
        %v1370 = vpop.f32.mrb[0].mxu0
        %1371 = vdwg.mxu0
        %v1373 = vsel %vm610, %v1229, 0
        %v1376 = vsel %vm610, %v1233, 0
        %1378 = vmatprep.subr.bf16.mxu0 0
        %1379 = vmatpush1.bf16.xpose.msra.mxu0 %v1376
        %1380 = vmatprep.subr.bf16.mxu0 0
        %1381 = vmatpush1.bf16.xpose.msra.mxu0 0
        %1382 = vmatprep.subr.bf16.mxu0 0
        %1383 = vmatpush1.bf16.xpose.msra.mxu0 0
        %1384 = vmatprep.subr.bf16.mxu0 0
        %1385 = vmatpush1.bf16.xpose.msra.mxu0 0
        %1386 = vmatprep.subr.bf16.mxu0 0
        %1387 = vmatpush1.bf16.xpose.msra.mxu0 0
        %1388 = vmatprep.subr.bf16.mxu0 0
        %1389 = vmatpush1.bf16.xpose.msra.mxu0 0
        %1390 = vmatprep.subr.bf16.mxu0 0
        %1391 = vmatpush1.bf16.xpose.msra.mxu0 0
        %1392 = vmatprep.subr.bf16.mxu0 0
        %1393 = vmatpush1.bf16.xpose.msra.mxu0 0
        %1394 = vmatprep.subr.bf16.mxu0 0
        %1395 = vmatpush1.bf16.xpose.msra.mxu0 0
        %1396 = vmatprep.subr.bf16.mxu0 0
        %1397 = vmatpush1.bf16.xpose.msra.mxu0 0
        %1398 = vmatprep.subr.bf16.mxu0 0
        %1399 = vmatpush1.bf16.xpose.msra.mxu0 0
        %1400 = vmatprep.subr.bf16.mxu0 0
        %1401 = vmatpush1.bf16.xpose.msra.mxu0 0
        %1402 = vmatprep.subr.bf16.mxu0 0
        %1403 = vmatpush1.bf16.xpose.msra.mxu0 0
        %1404 = vmatprep.subr.bf16.mxu0 0
        %1405 = vmatpush1.bf16.xpose.msra.mxu0 0
        %1406 = vmatprep.subr.bf16.mxu0 0
        %1407 = vmatpush1.bf16.xpose.msra.mxu0 0
        %1408 = vmatprep.subr.bf16.mxu0 0
        %1409 = vmatpush1.bf16.xpose.msra.mxu0 0
        %1410 = vmatprep.mubr.bf16.mxu0 0
        %1411 = vmatmul.mubr.bf16.gmra.mrb[0].mxu0 %v1373
        %v1412 = vpop.f32.mrb[0].mxu0
        %v1413 = vadd.f32 %v446, %v1412
        %v1414 = vpop.f32.mrb[0].mxu0
        %v1415 = vpop.f32.mrb[0].mxu0
        %v1416 = vpop.f32.mrb[0].mxu0
        %1417 = vdwg.mxu0
        %vm1418 = vcmask 64512
        %v1419 = vsel %vm1418, %v1275, -inf
        %1420 = vmax.xlane.f32.xlu0 %v1419
        %v1421 = vpop.xlane.xlu0 %1420
        %v1422 = vsel %vm1418, %v1321, -inf
        %1423 = vmax.xlane.f32.xlu0 %v1422
        %v1424 = vpop.xlane.xlu0 %1423
        %v1425 = vsel %vm1418, %v1367, -inf
        %1426 = vmax.xlane.f32.xlu0 %v1425
        %v1427 = vpop.xlane.xlu0 %1426
        %v1428 = vsel %vm1418, %v1413, -inf
        %1429 = vmax.xlane.f32.xlu0 %v1428
        %v1430 = vpop.xlane.xlu0 %1429
        %v1431 = vsub.f32 %v1275, %v1421
        %v1432 = vsub.f32 %v1321, %v1424
        %v1433 = vsub.f32 %v1367, %v1427
        %v1434 = vsub.f32 %v1413, %v1430
        %v1435 = vmul.f32 %v1431, 1.442695
        %v1436 = vpow.pop %v1435
        %v1437 = vmul.f32 %v1432, 1.442695
        %v1438 = vpow.pop %v1437
        %v1439 = vmul.f32 %v1433, 1.442695
        %v1440 = vpow.pop %v1439
        %v1441 = vmul.f32 %v1434, 1.442695
        %v1442 = vpow.pop %v1441
        %v1443 = vsel %vm1418, %v1436, 0.0
        %1444 = vadd.xlane.f32.xlu0 %v1443
        %v1445 = vpop.xlane.xlu0 %1444
        %v1446 = vsel %vm1418, %v1438, 0.0
        %1447 = vadd.xlane.f32.xlu0 %v1446
        %v1448 = vpop.xlane.xlu0 %1447
        %v1449 = vsel %vm1418, %v1440, 0.0
        %1450 = vadd.xlane.f32.xlu0 %v1449
        %v1451 = vpop.xlane.xlu0 %1450
        %v1452 = vsel %vm1418, %v1442, 0.0
        %1453 = vadd.xlane.f32.xlu0 %v1452
        %v1454 = vpop.xlane.xlu0 %1453
        %v1455 = vrcp.pop %v1445
        %v1456 = vrcp.pop %v1448
        %v1457 = vrcp.pop %v1451
        %v1458 = vrcp.pop %v1454
        %v1459 = vmul.f32 %v1436, %v1455
        %v1460 = vmul.f32 %v1438, %v1456
        %v1461 = vmul.f32 %v1440, %v1457
        %v1462 = vmul.f32 %v1442, %v1458
        %v1463 = vpack.c.bf16 %v1459, %v1459
        %v1464 = vpack.c.bf16 %v1460, %v1460
        %v1465 = vpack.c.bf16 %v1461, %v1461
        %v1466 = vpack.c.bf16 %v1462, %v1462
        %v1467 = vpack.c.bf16 %v1065, %v1065
        %v1468 = vpack.c.bf16 %v1117, %v1117
        %v1469 = vpack.c.bf16 %v1169, %v1169
        %v1470 = vpack.c.bf16 %v1221, %v1221
        %v1472 = vsel %vm1418, %v1463, 0
        %vm1474 = vcmask 1043456
        %v1476 = vsel %vm1474, %v1467, 0
        %1478 = vmatprep.subr.bf16.mxu0 0
        %1479 = vmatpush1.bf16.msra.mxu0 %v1476
        %1480 = vmatprep.subr.bf16.mxu0 0
        %1481 = vmatpush1.bf16.msra.mxu0 0
        %1482 = vmatprep.subr.bf16.mxu0 0
        %1483 = vmatpush1.bf16.msra.mxu0 0
        %1484 = vmatprep.subr.bf16.mxu0 0
        %1485 = vmatpush1.bf16.msra.mxu0 0
        %1486 = vmatprep.subr.bf16.mxu0 0
        %1487 = vmatpush1.bf16.msra.mxu0 0
        %1488 = vmatprep.subr.bf16.mxu0 0
        %1489 = vmatpush1.bf16.msra.mxu0 0
        %1490 = vmatprep.subr.bf16.mxu0 0
        %1491 = vmatpush1.bf16.msra.mxu0 0
        %1492 = vmatprep.subr.bf16.mxu0 0
        %1493 = vmatpush1.bf16.msra.mxu0 0
        %1494 = vmatprep.subr.bf16.mxu0 0
        %1495 = vmatpush1.bf16.msra.mxu0 0
        %1496 = vmatprep.subr.bf16.mxu0 0
        %1497 = vmatpush1.bf16.msra.mxu0 0
        %1498 = vmatprep.subr.bf16.mxu0 0
        %1499 = vmatpush1.bf16.msra.mxu0 0
        %1500 = vmatprep.subr.bf16.mxu0 0
        %1501 = vmatpush1.bf16.msra.mxu0 0
        %1502 = vmatprep.subr.bf16.mxu0 0
        %1503 = vmatpush1.bf16.msra.mxu0 0
        %1504 = vmatprep.subr.bf16.mxu0 0
        %1505 = vmatpush1.bf16.msra.mxu0 0
        %1506 = vmatprep.subr.bf16.mxu0 0
        %1507 = vmatpush1.bf16.msra.mxu0 0
        %1508 = vmatprep.subr.bf16.mxu0 0
        %1509 = vmatpush1.bf16.msra.mxu0 0
        %1510 = vmatprep.mubr.bf16.mxu0 0
        %1511 = vmatmul.mubr.bf16.gmra.mrb[0].mxu0 %v1472
        %v1512 = vpop.f32.mrb[0].mxu0
        %v1513 = vadd.f32 0.0, %v1512
        %v1514 = vpop.f32.mrb[0].mxu0
        %v1515 = vpop.f32.mrb[0].mxu0
        %v1516 = vpop.f32.mrb[0].mxu0
        %1517 = vdwg.mxu0
        %v1519 = vsel %vm1418, %v1464, 0
        %v1522 = vsel %vm1474, %v1468, 0
        %1524 = vmatprep.subr.bf16.mxu0 0
        %1525 = vmatpush1.bf16.msra.mxu0 %v1522
        %1526 = vmatprep.subr.bf16.mxu0 0
        %1527 = vmatpush1.bf16.msra.mxu0 0
        %1528 = vmatprep.subr.bf16.mxu0 0
        %1529 = vmatpush1.bf16.msra.mxu0 0
        %1530 = vmatprep.subr.bf16.mxu0 0
        %1531 = vmatpush1.bf16.msra.mxu0 0
        %1532 = vmatprep.subr.bf16.mxu0 0
        %1533 = vmatpush1.bf16.msra.mxu0 0
        %1534 = vmatprep.subr.bf16.mxu0 0
        %1535 = vmatpush1.bf16.msra.mxu0 0
        %1536 = vmatprep.subr.bf16.mxu0 0
        %1537 = vmatpush1.bf16.msra.mxu0 0
        %1538 = vmatprep.subr.bf16.mxu0 0
        %1539 = vmatpush1.bf16.msra.mxu0 0
        %1540 = vmatprep.subr.bf16.mxu0 0
        %1541 = vmatpush1.bf16.msra.mxu0 0
        %1542 = vmatprep.subr.bf16.mxu0 0
        %1543 = vmatpush1.bf16.msra.mxu0 0
        %1544 = vmatprep.subr.bf16.mxu0 0
        %1545 = vmatpush1.bf16.msra.mxu0 0
        %1546 = vmatprep.subr.bf16.mxu0 0
        %1547 = vmatpush1.bf16.msra.mxu0 0
        %1548 = vmatprep.subr.bf16.mxu0 0
        %1549 = vmatpush1.bf16.msra.mxu0 0
        %1550 = vmatprep.subr.bf16.mxu0 0
        %1551 = vmatpush1.bf16.msra.mxu0 0
        %1552 = vmatprep.subr.bf16.mxu0 0
        %1553 = vmatpush1.bf16.msra.mxu0 0
        %1554 = vmatprep.subr.bf16.mxu0 0
        %1555 = vmatpush1.bf16.msra.mxu0 0
        %1556 = vmatprep.mubr.bf16.mxu0 0
        %1557 = vmatmul.mubr.bf16.gmra.mrb[0].mxu0 %v1519
        %v1558 = vpop.f32.mrb[0].mxu0
        %v1559 = vadd.f32 0.0, %v1558
        %v1560 = vpop.f32.mrb[0].mxu0
        %v1561 = vpop.f32.mrb[0].mxu0
        %v1562 = vpop.f32.mrb[0].mxu0
        %1563 = vdwg.mxu0
        %v1565 = vsel %vm1418, %v1465, 0
        %v1568 = vsel %vm1474, %v1469, 0
        %1570 = vmatprep.subr.bf16.mxu0 0
        %1571 = vmatpush1.bf16.msra.mxu0 %v1568
        %1572 = vmatprep.subr.bf16.mxu0 0
        %1573 = vmatpush1.bf16.msra.mxu0 0
        %1574 = vmatprep.subr.bf16.mxu0 0
        %1575 = vmatpush1.bf16.msra.mxu0 0
        %1576 = vmatprep.subr.bf16.mxu0 0
        %1577 = vmatpush1.bf16.msra.mxu0 0
        %1578 = vmatprep.subr.bf16.mxu0 0
        %1579 = vmatpush1.bf16.msra.mxu0 0
        %1580 = vmatprep.subr.bf16.mxu0 0
        %1581 = vmatpush1.bf16.msra.mxu0 0
        %1582 = vmatprep.subr.bf16.mxu0 0
        %1583 = vmatpush1.bf16.msra.mxu0 0
        %1584 = vmatprep.subr.bf16.mxu0 0
        %1585 = vmatpush1.bf16.msra.mxu0 0
        %1586 = vmatprep.subr.bf16.mxu0 0
        %1587 = vmatpush1.bf16.msra.mxu0 0
        %1588 = vmatprep.subr.bf16.mxu0 0
        %1589 = vmatpush1.bf16.msra.mxu0 0
        %1590 = vmatprep.subr.bf16.mxu0 0
        %1591 = vmatpush1.bf16.msra.mxu0 0
        %1592 = vmatprep.subr.bf16.mxu0 0
        %1593 = vmatpush1.bf16.msra.mxu0 0
        %1594 = vmatprep.subr.bf16.mxu0 0
        %1595 = vmatpush1.bf16.msra.mxu0 0
        %1596 = vmatprep.subr.bf16.mxu0 0
        %1597 = vmatpush1.bf16.msra.mxu0 0
        %1598 = vmatprep.subr.bf16.mxu0 0
        %1599 = vmatpush1.bf16.msra.mxu0 0
        %1600 = vmatprep.subr.bf16.mxu0 0
        %1601 = vmatpush1.bf16.msra.mxu0 0
        %1602 = vmatprep.mubr.bf16.mxu0 0
        %1603 = vmatmul.mubr.bf16.gmra.mrb[0].mxu0 %v1565
        %v1604 = vpop.f32.mrb[0].mxu0
        %v1605 = vadd.f32 0.0, %v1604
        %v1606 = vpop.f32.mrb[0].mxu0
        %v1607 = vpop.f32.mrb[0].mxu0
        %v1608 = vpop.f32.mrb[0].mxu0
        %1609 = vdwg.mxu0
        %v1611 = vsel %vm1418, %v1466, 0
        %v1614 = vsel %vm1474, %v1470, 0
        %1616 = vmatprep.subr.bf16.mxu0 0
        %1617 = vmatpush1.bf16.msra.mxu0 %v1614
        %1618 = vmatprep.subr.bf16.mxu0 0
        %1619 = vmatpush1.bf16.msra.mxu0 0
        %1620 = vmatprep.subr.bf16.mxu0 0
        %1621 = vmatpush1.bf16.msra.mxu0 0
        %1622 = vmatprep.subr.bf16.mxu0 0
        %1623 = vmatpush1.bf16.msra.mxu0 0
        %1624 = vmatprep.subr.bf16.mxu0 0
        %1625 = vmatpush1.bf16.msra.mxu0 0
        %1626 = vmatprep.subr.bf16.mxu0 0
        %1627 = vmatpush1.bf16.msra.mxu0 0
        %1628 = vmatprep.subr.bf16.mxu0 0
        %1629 = vmatpush1.bf16.msra.mxu0 0
        %1630 = vmatprep.subr.bf16.mxu0 0
        %1631 = vmatpush1.bf16.msra.mxu0 0
        %1632 = vmatprep.subr.bf16.mxu0 0
        %1633 = vmatpush1.bf16.msra.mxu0 0
        %1634 = vmatprep.subr.bf16.mxu0 0
        %1635 = vmatpush1.bf16.msra.mxu0 0
        %1636 = vmatprep.subr.bf16.mxu0 0
        %1637 = vmatpush1.bf16.msra.mxu0 0
        %1638 = vmatprep.subr.bf16.mxu0 0
        %1639 = vmatpush1.bf16.msra.mxu0 0
        %1640 = vmatprep.subr.bf16.mxu0 0
        %1641 = vmatpush1.bf16.msra.mxu0 0
        %1642 = vmatprep.subr.bf16.mxu0 0
        %1643 = vmatpush1.bf16.msra.mxu0 0
        %1644 = vmatprep.subr.bf16.mxu0 0
        %1645 = vmatpush1.bf16.msra.mxu0 0
        %1646 = vmatprep.subr.bf16.mxu0 0
        %1647 = vmatpush1.bf16.msra.mxu0 0
        %1648 = vmatprep.mubr.bf16.mxu0 0
        %1649 = vmatmul.mubr.bf16.gmra.mrb[0].mxu0 %v1611
        %v1650 = vpop.f32.mrb[0].mxu0
        %v1651 = vadd.f32 0.0, %v1650
        %v1652 = vpop.f32.mrb[0].mxu0
        %v1653 = vpop.f32.mrb[0].mxu0
        %v1654 = vpop.f32.mrb[0].mxu0
        %1655 = vdwg.mxu0
        %v1656 = vsel %vm610, %v1513, 0.0
        %v1657 = vsel %vm610, %v1559, 0.0
        %v1658 = vadd.f32 %v1656, %v1657
        %v1659 = vsel %vm610, %v1605, 0.0
        %v1660 = vadd.f32 %v1658, %v1659
        %v1661 = vsel %vm610, %v1651, 0.0
        %v1662 = vadd.f32 %v1660, %v1661
        %v1663 = vadd.f32 %v431, %v1662
        %v1664 = vsel %vm610, %v1663, 0.0
        %1665 = vadd.xlane.f32.xlu0 %v1664
        %v1666 = vpop.xlane.xlu0 %1665
        %v1667 = vrcp.pop 32.0
        %v1668 = vmul.f32 %v1666, %v1667
        %v1669 = vsub.f32 %v1663, %v1668
        %v1670 = vmul.f32 %v1669, %v1669
        %v1671 = vsel %vm610, %v1670, 0.0
        %1672 = vadd.xlane.f32.xlu0 %v1671
        %v1673 = vpop.xlane.xlu0 %1672
        %v1674 = vmul.f32 %v1673, %v1667
        %v1675 = vadd.f32 %v1674, 1e-05
        %v1676 = vrsqrt.pop %v1675
        %v1677 = vmul.f32 %v1669, %v1676
        %v1678 = vlaneseq
        %v1679 = vshrl.u32 %v1678, 7
        %v1680 = vsub.s32 0, %v1679
        %v1681 = vrot.slane %v524, %v1680
        %v1682 = vmul.f32 %v1677, %v1681
        %v1683 = vlaneseq
        %v1684 = vshrl.u32 %v1683, 7
        %v1685 = vsub.s32 3, %v1684
        %v1686 = vrot.slane %v524, %v1685
        %v1687 = vadd.f32 %v1682, %v1686
        %v1688 = vld [vmem:[%s429] sm:$0xf]
        %v1689 = vld [vmem:[%s429 + $0x4] sm:$0xf]
        %v1690 = vld [vmem:[%s429 + $0x8] sm:$0xf]
        %v1691 = vld [vmem:[%s429 + $0xc] sm:$0xf]
        %s1692 = scalar_lea.vmem %s429, 16
        %v1693 = vld [vmem:[%s1692] sm:$0xf]
        %v1694 = vld [vmem:[%s1692 + $0x4] sm:$0xf]
        %v1695 = vld [vmem:[%s1692 + $0x8] sm:$0xf]
        %v1696 = vld [vmem:[%s1692 + $0xc] sm:$0xf]
        %v1697 = vpack.c.bf16 %v1687, %v1687
        %v1699 = vlaneseq
        %v1700 = vshrl.u32 %v1699, 7
        %v1701 = vsub.s32 0, %v1700
        %v1702 = vrot.slane %v449, %v1701
        %v1705 = vsel %vm610, %v1697, 0
        %v1708 = vsel %vm610, %v1688, 0
        %1710 = vmatprep.subr.bf16.mxu0 0
        %1711 = vmatpush1.bf16.xpose.msra.mxu0 %v1708
        %1712 = vmatprep.subr.bf16.mxu0 0
        %1713 = vmatpush1.bf16.xpose.msra.mxu0 0
        %1714 = vmatprep.subr.bf16.mxu0 0
        %1715 = vmatpush1.bf16.xpose.msra.mxu0 0
        %1716 = vmatprep.subr.bf16.mxu0 0
        %1717 = vmatpush1.bf16.xpose.msra.mxu0 0
        %1718 = vmatprep.subr.bf16.mxu0 0
        %1719 = vmatpush1.bf16.xpose.msra.mxu0 0
        %1720 = vmatprep.subr.bf16.mxu0 0
        %1721 = vmatpush1.bf16.xpose.msra.mxu0 0
        %1722 = vmatprep.subr.bf16.mxu0 0
        %1723 = vmatpush1.bf16.xpose.msra.mxu0 0
        %1724 = vmatprep.subr.bf16.mxu0 0
        %1725 = vmatpush1.bf16.xpose.msra.mxu0 0
        %1726 = vmatprep.subr.bf16.mxu0 0
        %1727 = vmatpush1.bf16.xpose.msra.mxu0 0
        %1728 = vmatprep.subr.bf16.mxu0 0
        %1729 = vmatpush1.bf16.xpose.msra.mxu0 0
        %1730 = vmatprep.subr.bf16.mxu0 0
        %1731 = vmatpush1.bf16.xpose.msra.mxu0 0
        %1732 = vmatprep.subr.bf16.mxu0 0
        %1733 = vmatpush1.bf16.xpose.msra.mxu0 0
        %1734 = vmatprep.subr.bf16.mxu0 0
        %1735 = vmatpush1.bf16.xpose.msra.mxu0 0
        %1736 = vmatprep.subr.bf16.mxu0 0
        %1737 = vmatpush1.bf16.xpose.msra.mxu0 0
        %1738 = vmatprep.subr.bf16.mxu0 0
        %1739 = vmatpush1.bf16.xpose.msra.mxu0 0
        %1740 = vmatprep.subr.bf16.mxu0 0
        %1741 = vmatpush1.bf16.xpose.msra.mxu0 0
        %1742 = vmatprep.mubr.bf16.mxu0 0
        %1743 = vmatmul.mubr.bf16.gmra.mrb[0].mxu0 %v1705
        %v1744 = vpop.f32.mrb[0].mxu0
        %v1745 = vadd.f32 %v1702, %v1744
        %v1746 = vpop.f32.mrb[0].mxu0
        %v1747 = vpop.f32.mrb[0].mxu0
        %v1748 = vpop.f32.mrb[0].mxu0
        %1749 = vdwg.mxu0
        %v1751 = vsel %vm610, %v1689, 0
        %1753 = vmatprep.subr.bf16.mxu0 0
        %1754 = vmatpush1.bf16.xpose.msra.mxu0 %v1751
        %1755 = vmatprep.subr.bf16.mxu0 0
        %1756 = vmatpush1.bf16.xpose.msra.mxu0 0
        %1757 = vmatprep.subr.bf16.mxu0 0
        %1758 = vmatpush1.bf16.xpose.msra.mxu0 0
        %1759 = vmatprep.subr.bf16.mxu0 0
        %1760 = vmatpush1.bf16.xpose.msra.mxu0 0
        %1761 = vmatprep.subr.bf16.mxu0 0
        %1762 = vmatpush1.bf16.xpose.msra.mxu0 0
        %1763 = vmatprep.subr.bf16.mxu0 0
        %1764 = vmatpush1.bf16.xpose.msra.mxu0 0
        %1765 = vmatprep.subr.bf16.mxu0 0
        %1766 = vmatpush1.bf16.xpose.msra.mxu0 0
        %1767 = vmatprep.subr.bf16.mxu0 0
        %1768 = vmatpush1.bf16.xpose.msra.mxu0 0
        %1769 = vmatprep.subr.bf16.mxu0 0
        %1770 = vmatpush1.bf16.xpose.msra.mxu0 0
        %1771 = vmatprep.subr.bf16.mxu0 0
        %1772 = vmatpush1.bf16.xpose.msra.mxu0 0
        %1773 = vmatprep.subr.bf16.mxu0 0
        %1774 = vmatpush1.bf16.xpose.msra.mxu0 0
        %1775 = vmatprep.subr.bf16.mxu0 0
        %1776 = vmatpush1.bf16.xpose.msra.mxu0 0
        %1777 = vmatprep.subr.bf16.mxu0 0
        %1778 = vmatpush1.bf16.xpose.msra.mxu0 0
        %1779 = vmatprep.subr.bf16.mxu0 0
        %1780 = vmatpush1.bf16.xpose.msra.mxu0 0
        %1781 = vmatprep.subr.bf16.mxu0 0
        %1782 = vmatpush1.bf16.xpose.msra.mxu0 0
        %1783 = vmatprep.subr.bf16.mxu0 0
        %1784 = vmatpush1.bf16.xpose.msra.mxu0 0
        %1785 = vmatprep.mubr.bf16.mxu0 0
        %1786 = vmatmul.mubr.bf16.gmra.mrb[0].mxu0 %v1705
        %v1787 = vpop.f32.mrb[0].mxu0
        %v1788 = vadd.f32 %v1702, %v1787
        %v1789 = vpop.f32.mrb[0].mxu0
        %v1790 = vpop.f32.mrb[0].mxu0
        %v1791 = vpop.f32.mrb[0].mxu0
        %1792 = vdwg.mxu0
        %v1794 = vsel %vm610, %v1690, 0
        %1796 = vmatprep.subr.bf16.mxu0 0
        %1797 = vmatpush1.bf16.xpose.msra.mxu0 %v1794
        %1798 = vmatprep.subr.bf16.mxu0 0
        %1799 = vmatpush1.bf16.xpose.msra.mxu0 0
        %1800 = vmatprep.subr.bf16.mxu0 0
        %1801 = vmatpush1.bf16.xpose.msra.mxu0 0
        %1802 = vmatprep.subr.bf16.mxu0 0
        %1803 = vmatpush1.bf16.xpose.msra.mxu0 0
        %1804 = vmatprep.subr.bf16.mxu0 0
        %1805 = vmatpush1.bf16.xpose.msra.mxu0 0
        %1806 = vmatprep.subr.bf16.mxu0 0
        %1807 = vmatpush1.bf16.xpose.msra.mxu0 0
        %1808 = vmatprep.subr.bf16.mxu0 0
        %1809 = vmatpush1.bf16.xpose.msra.mxu0 0
        %1810 = vmatprep.subr.bf16.mxu0 0
        %1811 = vmatpush1.bf16.xpose.msra.mxu0 0
        %1812 = vmatprep.subr.bf16.mxu0 0
        %1813 = vmatpush1.bf16.xpose.msra.mxu0 0
        %1814 = vmatprep.subr.bf16.mxu0 0
        %1815 = vmatpush1.bf16.xpose.msra.mxu0 0
        %1816 = vmatprep.subr.bf16.mxu0 0
        %1817 = vmatpush1.bf16.xpose.msra.mxu0 0
        %1818 = vmatprep.subr.bf16.mxu0 0
        %1819 = vmatpush1.bf16.xpose.msra.mxu0 0
        %1820 = vmatprep.subr.bf16.mxu0 0
        %1821 = vmatpush1.bf16.xpose.msra.mxu0 0
        %1822 = vmatprep.subr.bf16.mxu0 0
        %1823 = vmatpush1.bf16.xpose.msra.mxu0 0
        %1824 = vmatprep.subr.bf16.mxu0 0
        %1825 = vmatpush1.bf16.xpose.msra.mxu0 0
        %1826 = vmatprep.subr.bf16.mxu0 0
        %1827 = vmatpush1.bf16.xpose.msra.mxu0 0
        %1828 = vmatprep.mubr.bf16.mxu0 0
        %1829 = vmatmul.mubr.bf16.gmra.mrb[0].mxu0 %v1705
        %v1830 = vpop.f32.mrb[0].mxu0
        %v1831 = vadd.f32 %v1702, %v1830
        %v1832 = vpop.f32.mrb[0].mxu0
        %v1833 = vpop.f32.mrb[0].mxu0
        %v1834 = vpop.f32.mrb[0].mxu0
        %1835 = vdwg.mxu0
        %v1837 = vsel %vm610, %v1691, 0
        %1839 = vmatprep.subr.bf16.mxu0 0
        %1840 = vmatpush1.bf16.xpose.msra.mxu0 %v1837
        %1841 = vmatprep.subr.bf16.mxu0 0
        %1842 = vmatpush1.bf16.xpose.msra.mxu0 0
        %1843 = vmatprep.subr.bf16.mxu0 0
        %1844 = vmatpush1.bf16.xpose.msra.mxu0 0
        %1845 = vmatprep.subr.bf16.mxu0 0
        %1846 = vmatpush1.bf16.xpose.msra.mxu0 0
        %1847 = vmatprep.subr.bf16.mxu0 0
        %1848 = vmatpush1.bf16.xpose.msra.mxu0 0
        %1849 = vmatprep.subr.bf16.mxu0 0
        %1850 = vmatpush1.bf16.xpose.msra.mxu0 0
        %1851 = vmatprep.subr.bf16.mxu0 0
        %1852 = vmatpush1.bf16.xpose.msra.mxu0 0
        %1853 = vmatprep.subr.bf16.mxu0 0
        %1854 = vmatpush1.bf16.xpose.msra.mxu0 0
        %1855 = vmatprep.subr.bf16.mxu0 0
        %1856 = vmatpush1.bf16.xpose.msra.mxu0 0
        %1857 = vmatprep.subr.bf16.mxu0 0
        %1858 = vmatpush1.bf16.xpose.msra.mxu0 0
        %1859 = vmatprep.subr.bf16.mxu0 0
        %1860 = vmatpush1.bf16.xpose.msra.mxu0 0
        %1861 = vmatprep.subr.bf16.mxu0 0
        %1862 = vmatpush1.bf16.xpose.msra.mxu0 0
        %1863 = vmatprep.subr.bf16.mxu0 0
        %1864 = vmatpush1.bf16.xpose.msra.mxu0 0
        %1865 = vmatprep.subr.bf16.mxu0 0
        %1866 = vmatpush1.bf16.xpose.msra.mxu0 0
        %1867 = vmatprep.subr.bf16.mxu0 0
        %1868 = vmatpush1.bf16.xpose.msra.mxu0 0
        %1869 = vmatprep.subr.bf16.mxu0 0
        %1870 = vmatpush1.bf16.xpose.msra.mxu0 0
        %1871 = vmatprep.mubr.bf16.mxu0 0
        %1872 = vmatmul.mubr.bf16.gmra.mrb[0].mxu0 %v1705
        %v1873 = vpop.f32.mrb[0].mxu0
        %v1874 = vadd.f32 %v1702, %v1873
        %v1875 = vpop.f32.mrb[0].mxu0
        %v1876 = vpop.f32.mrb[0].mxu0
        %v1877 = vpop.f32.mrb[0].mxu0
        %1878 = vdwg.mxu0
        %v1879 = vsel %vm1418, %v1745, -inf
        %1880 = vmax.xlane.f32.xlu0 %v1879
        %v1881 = vpop.xlane.xlu0 %1880
        %v1882 = vsel %vm1418, %v1788, -inf
        %1883 = vmax.xlane.f32.xlu0 %v1882
        %v1884 = vpop.xlane.xlu0 %1883
        %v1885 = vsel %vm1418, %v1831, -inf
        %1886 = vmax.xlane.f32.xlu0 %v1885
        %v1887 = vpop.xlane.xlu0 %1886
        %v1888 = vsel %vm1418, %v1874, -inf
        %1889 = vmax.xlane.f32.xlu0 %v1888
        %v1890 = vpop.xlane.xlu0 %1889
        %v1891 = vsub.f32 %v1745, %v1881
        %v1892 = vsub.f32 %v1788, %v1884
        %v1893 = vsub.f32 %v1831, %v1887
        %v1894 = vsub.f32 %v1874, %v1890
        %v1895 = vmul.f32 %v1891, 1.442695
        %v1896 = vpow.pop %v1895
        %v1897 = vmul.f32 %v1892, 1.442695
        %v1898 = vpow.pop %v1897
        %v1899 = vmul.f32 %v1893, 1.442695
        %v1900 = vpow.pop %v1899
        %v1901 = vmul.f32 %v1894, 1.442695
        %v1902 = vpow.pop %v1901
        %v1903 = vsel %vm1418, %v1896, 0.0
        %1904 = vadd.xlane.f32.xlu0 %v1903
        %v1905 = vpop.xlane.xlu0 %1904
        %v1906 = vsel %vm1418, %v1898, 0.0
        %1907 = vadd.xlane.f32.xlu0 %v1906
        %v1908 = vpop.xlane.xlu0 %1907
        %v1909 = vsel %vm1418, %v1900, 0.0
        %1910 = vadd.xlane.f32.xlu0 %v1909
        %v1911 = vpop.xlane.xlu0 %1910
        %v1912 = vsel %vm1418, %v1902, 0.0
        %1913 = vadd.xlane.f32.xlu0 %v1912
        %v1914 = vpop.xlane.xlu0 %1913
        %v1915 = vrcp.pop %v1905
        %v1916 = vrcp.pop %v1908
        %v1917 = vrcp.pop %v1911
        %v1918 = vrcp.pop %v1914
        %v1919 = vmul.f32 %v1896, %v1915
        %v1920 = vmul.f32 %v1898, %v1916
        %v1921 = vmul.f32 %v1900, %v1917
        %v1922 = vmul.f32 %v1902, %v1918
        %v1923 = vpack.c.bf16 %v1919, %v1919
        %v1924 = vpack.c.bf16 %v1920, %v1920
        %v1925 = vpack.c.bf16 %v1921, %v1921
        %v1926 = vpack.c.bf16 %v1922, %v1922
        %v1928 = vsel %vm1418, %v1923, 0
        %v1931 = vsel %vm1474, %v1693, 0
        %1933 = vmatprep.subr.bf16.mxu0 0
        %1934 = vmatpush1.bf16.msra.mxu0 %v1931
        %1935 = vmatprep.subr.bf16.mxu0 0
        %1936 = vmatpush1.bf16.msra.mxu0 0
        %1937 = vmatprep.subr.bf16.mxu0 0
        %1938 = vmatpush1.bf16.msra.mxu0 0
        %1939 = vmatprep.subr.bf16.mxu0 0
        %1940 = vmatpush1.bf16.msra.mxu0 0
        %1941 = vmatprep.subr.bf16.mxu0 0
        %1942 = vmatpush1.bf16.msra.mxu0 0
        %1943 = vmatprep.subr.bf16.mxu0 0
        %1944 = vmatpush1.bf16.msra.mxu0 0
        %1945 = vmatprep.subr.bf16.mxu0 0
        %1946 = vmatpush1.bf16.msra.mxu0 0
        %1947 = vmatprep.subr.bf16.mxu0 0
        %1948 = vmatpush1.bf16.msra.mxu0 0
        %1949 = vmatprep.subr.bf16.mxu0 0
        %1950 = vmatpush1.bf16.msra.mxu0 0
        %1951 = vmatprep.subr.bf16.mxu0 0
        %1952 = vmatpush1.bf16.msra.mxu0 0
        %1953 = vmatprep.subr.bf16.mxu0 0
        %1954 = vmatpush1.bf16.msra.mxu0 0
        %1955 = vmatprep.subr.bf16.mxu0 0
        %1956 = vmatpush1.bf16.msra.mxu0 0
        %1957 = vmatprep.subr.bf16.mxu0 0
        %1958 = vmatpush1.bf16.msra.mxu0 0
        %1959 = vmatprep.subr.bf16.mxu0 0
        %1960 = vmatpush1.bf16.msra.mxu0 0
        %1961 = vmatprep.subr.bf16.mxu0 0
        %1962 = vmatpush1.bf16.msra.mxu0 0
        %1963 = vmatprep.subr.bf16.mxu0 0
        %1964 = vmatpush1.bf16.msra.mxu0 0
        %1965 = vmatprep.mubr.bf16.mxu0 0
        %1966 = vmatmul.mubr.bf16.gmra.mrb[0].mxu0 %v1928
        %v1967 = vpop.f32.mrb[0].mxu0
        %v1968 = vadd.f32 0.0, %v1967
        %v1969 = vpop.f32.mrb[0].mxu0
        %v1970 = vpop.f32.mrb[0].mxu0
        %v1971 = vpop.f32.mrb[0].mxu0
        %1972 = vdwg.mxu0
        %v1974 = vsel %vm1418, %v1924, 0
        %v1977 = vsel %vm1474, %v1694, 0
        %1979 = vmatprep.subr.bf16.mxu0 0
        %1980 = vmatpush1.bf16.msra.mxu0 %v1977
        %1981 = vmatprep.subr.bf16.mxu0 0
        %1982 = vmatpush1.bf16.msra.mxu0 0
        %1983 = vmatprep.subr.bf16.mxu0 0
        %1984 = vmatpush1.bf16.msra.mxu0 0
        %1985 = vmatprep.subr.bf16.mxu0 0
        %1986 = vmatpush1.bf16.msra.mxu0 0
        %1987 = vmatprep.subr.bf16.mxu0 0
        %1988 = vmatpush1.bf16.msra.mxu0 0
        %1989 = vmatprep.subr.bf16.mxu0 0
        %1990 = vmatpush1.bf16.msra.mxu0 0
        %1991 = vmatprep.subr.bf16.mxu0 0
        %1992 = vmatpush1.bf16.msra.mxu0 0
        %1993 = vmatprep.subr.bf16.mxu0 0
        %1994 = vmatpush1.bf16.msra.mxu0 0
        %1995 = vmatprep.subr.bf16.mxu0 0
        %1996 = vmatpush1.bf16.msra.mxu0 0
        %1997 = vmatprep.subr.bf16.mxu0 0
        %1998 = vmatpush1.bf16.msra.mxu0 0
        %1999 = vmatprep.subr.bf16.mxu0 0
        %2000 = vmatpush1.bf16.msra.mxu0 0
        %2001 = vmatprep.subr.bf16.mxu0 0
        %2002 = vmatpush1.bf16.msra.mxu0 0
        %2003 = vmatprep.subr.bf16.mxu0 0
        %2004 = vmatpush1.bf16.msra.mxu0 0
        %2005 = vmatprep.subr.bf16.mxu0 0
        %2006 = vmatpush1.bf16.msra.mxu0 0
        %2007 = vmatprep.subr.bf16.mxu0 0
        %2008 = vmatpush1.bf16.msra.mxu0 0
        %2009 = vmatprep.subr.bf16.mxu0 0
        %2010 = vmatpush1.bf16.msra.mxu0 0
        %2011 = vmatprep.mubr.bf16.mxu0 0
        %2012 = vmatmul.mubr.bf16.gmra.mrb[0].mxu0 %v1974
        %v2013 = vpop.f32.mrb[0].mxu0
        %v2014 = vadd.f32 0.0, %v2013
        %v2015 = vpop.f32.mrb[0].mxu0
        %v2016 = vpop.f32.mrb[0].mxu0
        %v2017 = vpop.f32.mrb[0].mxu0
        %2018 = vdwg.mxu0
        %v2020 = vsel %vm1418, %v1925, 0
        %v2023 = vsel %vm1474, %v1695, 0
        %2025 = vmatprep.subr.bf16.mxu0 0
        %2026 = vmatpush1.bf16.msra.mxu0 %v2023
        %2027 = vmatprep.subr.bf16.mxu0 0
        %2028 = vmatpush1.bf16.msra.mxu0 0
        %2029 = vmatprep.subr.bf16.mxu0 0
        %2030 = vmatpush1.bf16.msra.mxu0 0
        %2031 = vmatprep.subr.bf16.mxu0 0
        %2032 = vmatpush1.bf16.msra.mxu0 0
        %2033 = vmatprep.subr.bf16.mxu0 0
        %2034 = vmatpush1.bf16.msra.mxu0 0
        %2035 = vmatprep.subr.bf16.mxu0 0
        %2036 = vmatpush1.bf16.msra.mxu0 0
        %2037 = vmatprep.subr.bf16.mxu0 0
        %2038 = vmatpush1.bf16.msra.mxu0 0
        %2039 = vmatprep.subr.bf16.mxu0 0
        %2040 = vmatpush1.bf16.msra.mxu0 0
        %2041 = vmatprep.subr.bf16.mxu0 0
        %2042 = vmatpush1.bf16.msra.mxu0 0
        %2043 = vmatprep.subr.bf16.mxu0 0
        %2044 = vmatpush1.bf16.msra.mxu0 0
        %2045 = vmatprep.subr.bf16.mxu0 0
        %2046 = vmatpush1.bf16.msra.mxu0 0
        %2047 = vmatprep.subr.bf16.mxu0 0
        %2048 = vmatpush1.bf16.msra.mxu0 0
        %2049 = vmatprep.subr.bf16.mxu0 0
        %2050 = vmatpush1.bf16.msra.mxu0 0
        %2051 = vmatprep.subr.bf16.mxu0 0
        %2052 = vmatpush1.bf16.msra.mxu0 0
        %2053 = vmatprep.subr.bf16.mxu0 0
        %2054 = vmatpush1.bf16.msra.mxu0 0
        %2055 = vmatprep.subr.bf16.mxu0 0
        %2056 = vmatpush1.bf16.msra.mxu0 0
        %2057 = vmatprep.mubr.bf16.mxu0 0
        %2058 = vmatmul.mubr.bf16.gmra.mrb[0].mxu0 %v2020
        %v2059 = vpop.f32.mrb[0].mxu0
        %v2060 = vadd.f32 0.0, %v2059
        %v2061 = vpop.f32.mrb[0].mxu0
        %v2062 = vpop.f32.mrb[0].mxu0
        %v2063 = vpop.f32.mrb[0].mxu0
        %2064 = vdwg.mxu0
        %v2066 = vsel %vm1418, %v1926, 0
        %v2069 = vsel %vm1474, %v1696, 0
        %2071 = vmatprep.subr.bf16.mxu0 0
        %2072 = vmatpush1.bf16.msra.mxu0 %v2069
        %2073 = vmatprep.subr.bf16.mxu0 0
        %2074 = vmatpush1.bf16.msra.mxu0 0
        %2075 = vmatprep.subr.bf16.mxu0 0
        %2076 = vmatpush1.bf16.msra.mxu0 0
        %2077 = vmatprep.subr.bf16.mxu0 0
        %2078 = vmatpush1.bf16.msra.mxu0 0
        %2079 = vmatprep.subr.bf16.mxu0 0
        %2080 = vmatpush1.bf16.msra.mxu0 0
        %2081 = vmatprep.subr.bf16.mxu0 0
        %2082 = vmatpush1.bf16.msra.mxu0 0
        %2083 = vmatprep.subr.bf16.mxu0 0
        %2084 = vmatpush1.bf16.msra.mxu0 0
        %2085 = vmatprep.subr.bf16.mxu0 0
        %2086 = vmatpush1.bf16.msra.mxu0 0
        %2087 = vmatprep.subr.bf16.mxu0 0
        %2088 = vmatpush1.bf16.msra.mxu0 0
        %2089 = vmatprep.subr.bf16.mxu0 0
        %2090 = vmatpush1.bf16.msra.mxu0 0
        %2091 = vmatprep.subr.bf16.mxu0 0
        %2092 = vmatpush1.bf16.msra.mxu0 0
        %2093 = vmatprep.subr.bf16.mxu0 0
        %2094 = vmatpush1.bf16.msra.mxu0 0
        %2095 = vmatprep.subr.bf16.mxu0 0
        %2096 = vmatpush1.bf16.msra.mxu0 0
        %2097 = vmatprep.subr.bf16.mxu0 0
        %2098 = vmatpush1.bf16.msra.mxu0 0
        %2099 = vmatprep.subr.bf16.mxu0 0
        %2100 = vmatpush1.bf16.msra.mxu0 0
        %2101 = vmatprep.subr.bf16.mxu0 0
        %2102 = vmatpush1.bf16.msra.mxu0 0
        %2103 = vmatprep.mubr.bf16.mxu0 0
        %2104 = vmatmul.mubr.bf16.gmra.mrb[0].mxu0 %v2066
        %v2105 = vpop.f32.mrb[0].mxu0
        %v2106 = vadd.f32 0.0, %v2105
        %v2107 = vpop.f32.mrb[0].mxu0
        %v2108 = vpop.f32.mrb[0].mxu0
        %v2109 = vpop.f32.mrb[0].mxu0
        %2110 = vdwg.mxu0
        %v2111 = vsel %vm610, %v1968, 0.0
        %v2112 = vsel %vm610, %v2014, 0.0
        %v2113 = vadd.f32 %v2111, %v2112
        %v2114 = vsel %vm610, %v2060, 0.0
        %v2115 = vadd.f32 %v2113, %v2114
        %v2116 = vsel %vm610, %v2106, 0.0
        %v2117 = vadd.f32 %v2115, %v2116
        %v2118 = vadd.f32 %v1687, %v2117
        %v2119 = vsel %vm610, %v2118, 0.0
        %2120 = vadd.xlane.f32.xlu0 %v2119
        %v2121 = vpop.xlane.xlu0 %2120
        %v2122 = vmul.f32 %v2121, %v1667
        %v2123 = vsub.f32 %v2118, %v2122
        %v2124 = vmul.f32 %v2123, %v2123
        %v2125 = vsel %vm610, %v2124, 0.0
        %2126 = vadd.xlane.f32.xlu0 %v2125
        %v2127 = vpop.xlane.xlu0 %2126
        %v2128 = vmul.f32 %v2127, %v1667
        %v2129 = vadd.f32 %v2128, 1e-05
        %v2130 = vrsqrt.pop %v2129
        %v2131 = vmul.f32 %v2123, %v2130
        %v2132 = vlaneseq
        %v2133 = vshrl.u32 %v2132, 7
        %v2134 = vsub.s32 1, %v2133
        %v2135 = vrot.slane %v524, %v2134
        %v2136 = vmul.f32 %v2131, %v2135
        %v2137 = vlaneseq
        %v2138 = vshrl.u32 %v2137, 7
        %v2139 = vsub.s32 4, %v2138
        %v2140 = vrot.slane %v524, %v2139
        %v2141 = vadd.f32 %v2136, %v2140
        %v2142 = vpack.c.bf16 %v2141, %v2141
        %v2144 = vlaneseq
        %v2145 = vshrl.u32 %v2144, 7
        %v2146 = vsub.s32 0, %v2145
        %v2147 = vrot.slane %v514, %v2146
        %v2153 = vunpack.c.l.b16 %v510
        %v2154 = vunpack.c.l.b16 %v511
        %v2155 = vunpack.c.l.b16 %v512
        %v2156 = vunpack.c.l.b16 %v513
        %v2157 = vpack.c.b16 %v2154, %v2153
        %v2158 = vpack.c.b16 %v2156, %v2155
        %v2162 = vsel %vm610, %v2142, 0
        %2164 = vmatprep.subr.bf16.mxu0 0
        %2165 = vmatpush1.bf16.msra.mxu0 %v2157
        %2166 = vmatprep.subr.bf16.mxu0 0
        %2167 = vmatpush1.bf16.msra.mxu0 %v2158
        %2168 = vmatprep.subr.bf16.mxu0 0
        %2169 = vmatpush1.bf16.msra.mxu0 0
        %2170 = vmatprep.subr.bf16.mxu0 0
        %2171 = vmatpush1.bf16.msra.mxu0 0
        %2172 = vmatprep.subr.bf16.mxu0 0
        %2173 = vmatpush1.bf16.msra.mxu0 0
        %2174 = vmatprep.subr.bf16.mxu0 0
        %2175 = vmatpush1.bf16.msra.mxu0 0
        %2176 = vmatprep.subr.bf16.mxu0 0
        %2177 = vmatpush1.bf16.msra.mxu0 0
        %2178 = vmatprep.subr.bf16.mxu0 0
        %2179 = vmatpush1.bf16.msra.mxu0 0
        %2180 = vmatprep.subr.bf16.mxu0 0
        %2181 = vmatpush1.bf16.msra.mxu0 0
        %2182 = vmatprep.subr.bf16.mxu0 0
        %2183 = vmatpush1.bf16.msra.mxu0 0
        %2184 = vmatprep.subr.bf16.mxu0 0
        %2185 = vmatpush1.bf16.msra.mxu0 0
        %2186 = vmatprep.subr.bf16.mxu0 0
        %2187 = vmatpush1.bf16.msra.mxu0 0
        %2188 = vmatprep.subr.bf16.mxu0 0
        %2189 = vmatpush1.bf16.msra.mxu0 0
        %2190 = vmatprep.subr.bf16.mxu0 0
        %2191 = vmatpush1.bf16.msra.mxu0 0
        %2192 = vmatprep.subr.bf16.mxu0 0
        %2193 = vmatpush1.bf16.msra.mxu0 0
        %2194 = vmatprep.subr.bf16.mxu0 0
        %2195 = vmatpush1.bf16.msra.mxu0 0
        %2196 = vmatprep.mubr.bf16.mxu0 0
        %2197 = vmatmul.mubr.bf16.gmra.mrb[0].mxu0 %v2162
        %v2198 = vpop.f32.mrb[0].mxu0
        %v2199 = vadd.f32 %v2147, %v2198
        %v2200 = vpop.f32.mrb[0].mxu0
        %v2201 = vpop.f32.mrb[0].mxu0
        %v2202 = vpop.f32.mrb[0].mxu0
        %2203 = vdwg.mxu0
        %v2204 = vmax.f32 %v2199, 0.0
        %v2205 = vpack.c.bf16 %v2204, %v2204
        %v2207 = vlaneseq
        %v2208 = vshrl.u32 %v2207, 7
        %v2209 = vsub.s32 0, %v2208
        %v2210 = vrot.slane %v523, %v2209
        %v2220 = vunpack.c.l.b16 %v515
        %v2221 = vunpack.c.l.b16 %v516
        %v2222 = vunpack.c.l.b16 %v517
        %v2223 = vunpack.c.l.b16 %v518
        %v2224 = vunpack.c.l.b16 %v519
        %v2225 = vunpack.c.l.b16 %v520
        %v2226 = vunpack.c.l.b16 %v521
        %v2227 = vunpack.c.l.b16 %v522
        %v2228 = vpack.c.b16 %v2221, %v2220
        %v2229 = vpack.c.b16 %v2223, %v2222
        %v2230 = vpack.c.b16 %v2225, %v2224
        %v2231 = vpack.c.b16 %v2227, %v2226
        %vm2236 = vcmask 523264
        %v2238 = vsel %vm2236, %v2205, 0
        %2240 = vmatprep.subr.bf16.mxu0 0
        %2241 = vmatpush1.bf16.msra.mxu0 %v2228
        %2242 = vmatprep.subr.bf16.mxu0 0
        %2243 = vmatpush1.bf16.msra.mxu0 %v2229
        %2244 = vmatprep.subr.bf16.mxu0 0
        %2245 = vmatpush1.bf16.msra.mxu0 %v2230
        %2246 = vmatprep.subr.bf16.mxu0 0
        %2247 = vmatpush1.bf16.msra.mxu0 %v2231
        %2248 = vmatprep.subr.bf16.mxu0 0
        %2249 = vmatpush1.bf16.msra.mxu0 0
        %2250 = vmatprep.subr.bf16.mxu0 0
        %2251 = vmatpush1.bf16.msra.mxu0 0
        %2252 = vmatprep.subr.bf16.mxu0 0
        %2253 = vmatpush1.bf16.msra.mxu0 0
        %2254 = vmatprep.subr.bf16.mxu0 0
        %2255 = vmatpush1.bf16.msra.mxu0 0
        %2256 = vmatprep.subr.bf16.mxu0 0
        %2257 = vmatpush1.bf16.msra.mxu0 0
        %2258 = vmatprep.subr.bf16.mxu0 0
        %2259 = vmatpush1.bf16.msra.mxu0 0
        %2260 = vmatprep.subr.bf16.mxu0 0
        %2261 = vmatpush1.bf16.msra.mxu0 0
        %2262 = vmatprep.subr.bf16.mxu0 0
        %2263 = vmatpush1.bf16.msra.mxu0 0
        %2264 = vmatprep.subr.bf16.mxu0 0
        %2265 = vmatpush1.bf16.msra.mxu0 0
        %2266 = vmatprep.subr.bf16.mxu0 0
        %2267 = vmatpush1.bf16.msra.mxu0 0
        %2268 = vmatprep.subr.bf16.mxu0 0
        %2269 = vmatpush1.bf16.msra.mxu0 0
        %2270 = vmatprep.subr.bf16.mxu0 0
        %2271 = vmatpush1.bf16.msra.mxu0 0
        %2272 = vmatprep.mubr.bf16.mxu0 0
        %2273 = vmatmul.mubr.bf16.gmra.mrb[0].mxu0 %v2238
        %v2274 = vpop.f32.mrb[0].mxu0
        %v2275 = vadd.f32 %v2210, %v2274
        %v2276 = vpop.f32.mrb[0].mxu0
        %v2277 = vpop.f32.mrb[0].mxu0
        %v2278 = vpop.f32.mrb[0].mxu0
        %2279 = vdwg.mxu0
        %v2280 = vadd.f32 %v2141, %v2275
        %v2281 = vsel %vm610, %v2280, 0.0
        %2282 = vadd.xlane.f32.xlu0 %v2281
        %v2283 = vpop.xlane.xlu0 %2282
        %v2284 = vmul.f32 %v2283, %v1667
        %v2285 = vsub.f32 %v2280, %v2284
        %v2286 = vmul.f32 %v2285, %v2285
        %v2287 = vsel %vm610, %v2286, 0.0
        %2288 = vadd.xlane.f32.xlu0 %v2287
        %v2289 = vpop.xlane.xlu0 %2288
        %v2290 = vmul.f32 %v2289, %v1667
        %v2291 = vadd.f32 %v2290, 1e-05
        %v2292 = vrsqrt.pop %v2291
        %v2293 = vmul.f32 %v2285, %v2292
        %v2294 = vlaneseq
        %v2295 = vshrl.u32 %v2294, 7
        %v2296 = vsub.s32 2, %v2295
        %v2297 = vrot.slane %v524, %v2296
        %v2298 = vmul.f32 %v2293, %v2297
        %v2299 = vlaneseq
        %v2300 = vshrl.u32 %v2299, 7
        %v2301 = vsub.s32 5, %v2300
        %v2302 = vrot.slane %v524, %v2301
        %v2303 = vadd.f32 %v2298, %v2302
        %s2304 = scalar_lea.vmem %s4, 192
        %v2305 = vld [vmem:[%s2304] sm:$0xf]
        %v2306 = vld [vmem:[%s2304 + $0x4] sm:$0xf]
        %v2307 = vld [vmem:[%s2304 + $0x8] sm:$0xf]
        %v2308 = vld [vmem:[%s2304 + $0xc] sm:$0xf]
        %v2309 = vld [vmem:[%s2304 + $0x10] sm:$0xf]
        %v2310 = vld [vmem:[%s2304 + $0x14] sm:$0xf]
        %v2311 = vld [vmem:[%s2304 + $0x18] sm:$0xf]
        %v2312 = vld [vmem:[%s2304 + $0x1c] sm:$0xf]
        %v2313 = vld [vmem:[%s2304 + $0x20] sm:$0xf]
        %v2314 = vld [vmem:[%s2304 + $0x24] sm:$0xf]
        %v2315 = vld [vmem:[%s2304 + $0x28] sm:$0xf]
        %v2316 = vld [vmem:[%s2304 + $0x2c] sm:$0xf]
        %v2317 = vld [vmem:[%s2304 + $0x30] sm:$0xf]
        %v2318 = vld [vmem:[%s2304 + $0x34] sm:$0xf]
        %v2319 = vld [vmem:[%s2304 + $0x38] sm:$0xf]
        %v2320 = vld [vmem:[%s2304 + $0x3c] sm:$0xf]
        %v2321 = vld [vmem:[%s2304 + $0x40] sm:$0xf]
        %v2322 = vld [vmem:[%s2304 + $0x44] sm:$0xf]
        %v2323 = vld [vmem:[%s2304 + $0x48] sm:$0xf]
        %v2324 = vld [vmem:[%s2304 + $0x4c] sm:$0xf]
        %v2325 = vld [vmem:[%s2304 + $0x50] sm:$0xf]
        %v2326 = vld [vmem:[%s2304 + $0x54] sm:$0xf]
        %v2327 = vld [vmem:[%s2304 + $0x58] sm:$0xf]
        %v2328 = vld [vmem:[%s2304 + $0x5c] sm:$0xf]
        %v2329 = vld [vmem:[%s2304 + $0x60] sm:$0xf]
        %v2330 = vld [vmem:[%s2304 + $0x64] sm:$0xf]
        %v2331 = vld [vmem:[%s2304 + $0x68] sm:$0xf]
        %v2332 = vld [vmem:[%s2304 + $0x6c] sm:$0xf]
        %v2333 = vld [vmem:[%s2304 + $0x70] sm:$0xf]
        %v2334 = vld [vmem:[%s2304 + $0x74] sm:$0xf]
        %v2335 = vld [vmem:[%s2304 + $0x78] sm:$0xf]
        %v2336 = vld [vmem:[%s2304 + $0x7c] sm:$0xf]
        %v2337 = vld [vmem:[%s2304 + $0x80] sm:$0xf]
        %v2338 = vld [vmem:[%s2304 + $0x84] sm:$0xf]
        %v2339 = vld [vmem:[%s2304 + $0x88] sm:$0xf]
        %v2340 = vld [vmem:[%s2304 + $0x8c] sm:$0xf]
        %v2341 = vld [vmem:[%s2304 + $0x90] sm:$0xf]
        %v2342 = vld [vmem:[%s2304 + $0x94] sm:$0xf]
        %v2343 = vld [vmem:[%s2304 + $0x98] sm:$0xf]
        %v2344 = vld [vmem:[%s2304 + $0x9c] sm:$0xf]
        %v2345 = vld [vmem:[%s2304 + $0xa0] sm:$0xf]
        %v2346 = vld [vmem:[%s2304 + $0xa4] sm:$0xf]
        %v2347 = vld [vmem:[%s2304 + $0xa8] sm:$0xf]
        %v2348 = vld [vmem:[%s2304 + $0xac] sm:$0xf]
        %v2349 = vld [vmem:[%s2304 + $0xb0] sm:$0xf]
        %v2350 = vld [vmem:[%s2304 + $0xb4] sm:$0xf]
        %v2351 = vld [vmem:[%s2304 + $0xb8] sm:$0xf]
        %v2352 = vld [vmem:[%s2304 + $0xbc] sm:$0xf]
        %s2353 = scalar_lea.vmem %s5, 12
        %v2354 = vld [vmem:[%s2353] sm:$0x1]
        %v2355 = vld [vmem:[%s2353 + $0x1] sm:$0x1]
        %v2356 = vld [vmem:[%s2353 + $0x2] sm:$0x1]
        %v2357 = vld [vmem:[%s2353 + $0x3] sm:$0x1]
        %v2358 = vld [vmem:[%s2353 + $0x4] sm:$0x1]
        %v2359 = vld [vmem:[%s2353 + $0x5] sm:$0x1]
        %v2360 = vld [vmem:[%s2353 + $0x6] sm:$0x1]
        %v2361 = vld [vmem:[%s2353 + $0x7] sm:$0x1]
        %v2362 = vld [vmem:[%s2353 + $0x8] sm:$0x1]
        %v2363 = vld [vmem:[%s2353 + $0x9] sm:$0x1]
        %v2364 = vld [vmem:[%s2353 + $0xa] sm:$0x1]
        %v2365 = vld [vmem:[%s2353 + $0xb] sm:$0x1]
        %s2366 = scalar_lea.vmem %s6, 16
        %v2367 = vld [vmem:[%s2366] sm:$0xf]
        %v2368 = vld [vmem:[%s2366 + $0x4] sm:$0xf]
        %v2369 = vld [vmem:[%s2366 + $0x8] sm:$0xf]
        %v2370 = vld [vmem:[%s2366 + $0xc] sm:$0xf]
        %s2371 = scalar_lea.vmem %s7, 1
        %v2372 = vld [vmem:[%s2371] sm:$0x1]
        %s2373 = scalar_lea.vmem %s8, 32
        %v2374 = vld [vmem:[%s2373] sm:$0xf]
        %v2375 = vld [vmem:[%s2373 + $0x4] sm:$0xf]
        %v2376 = vld [vmem:[%s2373 + $0x8] sm:$0xf]
        %v2377 = vld [vmem:[%s2373 + $0xc] sm:$0xf]
        %v2378 = vld [vmem:[%s2373 + $0x10] sm:$0xf]
        %v2379 = vld [vmem:[%s2373 + $0x14] sm:$0xf]
        %v2380 = vld [vmem:[%s2373 + $0x18] sm:$0xf]
        %v2381 = vld [vmem:[%s2373 + $0x1c] sm:$0xf]
        %s2382 = scalar_lea.vmem %s9, 1
        %v2383 = vld [vmem:[%s2382] sm:$0x1]
        %s2384 = scalar_lea.vmem %s10, 8
        %v2385 = vld [vmem:[%s2384] sm:$0x3f]
        %v2386 = vpack.c.bf16 %v2303, %v2303
        %v2399 = vlaneseq
        %v2400 = vshrl.u32 %v2399, 7
        %v2401 = vsub.s32 0, %v2400
        %v2402 = vrot.slane %v2354, %v2401
        %v2403 = vlaneseq
        %v2404 = vshrl.u32 %v2403, 7
        %v2405 = vsub.s32 0, %v2404
        %v2406 = vrot.slane %v2355, %v2405
        %v2407 = vlaneseq
        %v2408 = vshrl.u32 %v2407, 7
        %v2409 = vsub.s32 0, %v2408
        %v2410 = vrot.slane %v2356, %v2409
        %v2411 = vlaneseq
        %v2412 = vshrl.u32 %v2411, 7
        %v2413 = vsub.s32 0, %v2412
        %v2414 = vrot.slane %v2357, %v2413
        %v2415 = vlaneseq
        %v2416 = vshrl.u32 %v2415, 7
        %v2417 = vsub.s32 0, %v2416
        %v2418 = vrot.slane %v2358, %v2417
        %v2419 = vlaneseq
        %v2420 = vshrl.u32 %v2419, 7
        %v2421 = vsub.s32 0, %v2420
        %v2422 = vrot.slane %v2359, %v2421
        %v2423 = vlaneseq
        %v2424 = vshrl.u32 %v2423, 7
        %v2425 = vsub.s32 0, %v2424
        %v2426 = vrot.slane %v2360, %v2425
        %v2427 = vlaneseq
        %v2428 = vshrl.u32 %v2427, 7
        %v2429 = vsub.s32 0, %v2428
        %v2430 = vrot.slane %v2361, %v2429
        %v2431 = vlaneseq
        %v2432 = vshrl.u32 %v2431, 7
        %v2433 = vsub.s32 0, %v2432
        %v2434 = vrot.slane %v2362, %v2433
        %v2435 = vlaneseq
        %v2436 = vshrl.u32 %v2435, 7
        %v2437 = vsub.s32 0, %v2436
        %v2438 = vrot.slane %v2363, %v2437
        %v2439 = vlaneseq
        %v2440 = vshrl.u32 %v2439, 7
        %v2441 = vsub.s32 0, %v2440
        %v2442 = vrot.slane %v2364, %v2441
        %v2443 = vlaneseq
        %v2444 = vshrl.u32 %v2443, 7
        %v2445 = vsub.s32 0, %v2444
        %v2446 = vrot.slane %v2365, %v2445
        %v2463 = vunpack.c.l.b16 %v2305
        %v2464 = vunpack.c.l.b16 %v2306
        %v2465 = vunpack.c.l.b16 %v2307
        %v2466 = vunpack.c.l.b16 %v2308
        %v2467 = vpack.c.b16 %v2464, %v2463
        %v2468 = vpack.c.b16 %v2466, %v2465
        %v2472 = vsel %vm610, %v2386, 0
        %2474 = vmatprep.subr.bf16.mxu0 0
        %2475 = vmatpush1.bf16.msra.mxu0 %v2467
        %2476 = vmatprep.subr.bf16.mxu0 0
        %2477 = vmatpush1.bf16.msra.mxu0 %v2468
        %2478 = vmatprep.subr.bf16.mxu0 0
        %2479 = vmatpush1.bf16.msra.mxu0 0
        %2480 = vmatprep.subr.bf16.mxu0 0
        %2481 = vmatpush1.bf16.msra.mxu0 0
        %2482 = vmatprep.subr.bf16.mxu0 0
        %2483 = vmatpush1.bf16.msra.mxu0 0
        %2484 = vmatprep.subr.bf16.mxu0 0
        %2485 = vmatpush1.bf16.msra.mxu0 0
        %2486 = vmatprep.subr.bf16.mxu0 0
        %2487 = vmatpush1.bf16.msra.mxu0 0
        %2488 = vmatprep.subr.bf16.mxu0 0
        %2489 = vmatpush1.bf16.msra.mxu0 0
        %2490 = vmatprep.subr.bf16.mxu0 0
        %2491 = vmatpush1.bf16.msra.mxu0 0
        %2492 = vmatprep.subr.bf16.mxu0 0
        %2493 = vmatpush1.bf16.msra.mxu0 0
        %2494 = vmatprep.subr.bf16.mxu0 0
        %2495 = vmatpush1.bf16.msra.mxu0 0
        %2496 = vmatprep.subr.bf16.mxu0 0
        %2497 = vmatpush1.bf16.msra.mxu0 0
        %2498 = vmatprep.subr.bf16.mxu0 0
        %2499 = vmatpush1.bf16.msra.mxu0 0
        %2500 = vmatprep.subr.bf16.mxu0 0
        %2501 = vmatpush1.bf16.msra.mxu0 0
        %2502 = vmatprep.subr.bf16.mxu0 0
        %2503 = vmatpush1.bf16.msra.mxu0 0
        %2504 = vmatprep.subr.bf16.mxu0 0
        %2505 = vmatpush1.bf16.msra.mxu0 0
        %2506 = vmatprep.mubr.bf16.mxu0 0
        %2507 = vmatmul.mubr.bf16.gmra.mrb[0].mxu0 %v2472
        %v2508 = vpop.f32.mrb[0].mxu0
        %v2509 = vadd.f32 %v2402, %v2508
        %v2510 = vpop.f32.mrb[0].mxu0
        %v2511 = vpop.f32.mrb[0].mxu0
        %v2512 = vpop.f32.mrb[0].mxu0
        %2513 = vdwg.mxu0
        %v2518 = vunpack.c.l.b16 %v2309
        %v2519 = vunpack.c.l.b16 %v2310
        %v2520 = vunpack.c.l.b16 %v2311
        %v2521 = vunpack.c.l.b16 %v2312
        %v2522 = vpack.c.b16 %v2519, %v2518
        %v2523 = vpack.c.b16 %v2521, %v2520
        %2526 = vmatprep.subr.bf16.mxu0 0
        %2527 = vmatpush1.bf16.msra.mxu0 %v2522
        %2528 = vmatprep.subr.bf16.mxu0 0
        %2529 = vmatpush1.bf16.msra.mxu0 %v2523
        %2530 = vmatprep.subr.bf16.mxu0 0
        %2531 = vmatpush1.bf16.msra.mxu0 0
        %2532 = vmatprep.subr.bf16.mxu0 0
        %2533 = vmatpush1.bf16.msra.mxu0 0
        %2534 = vmatprep.subr.bf16.mxu0 0
        %2535 = vmatpush1.bf16.msra.mxu0 0
        %2536 = vmatprep.subr.bf16.mxu0 0
        %2537 = vmatpush1.bf16.msra.mxu0 0
        %2538 = vmatprep.subr.bf16.mxu0 0
        %2539 = vmatpush1.bf16.msra.mxu0 0
        %2540 = vmatprep.subr.bf16.mxu0 0
        %2541 = vmatpush1.bf16.msra.mxu0 0
        %2542 = vmatprep.subr.bf16.mxu0 0
        %2543 = vmatpush1.bf16.msra.mxu0 0
        %2544 = vmatprep.subr.bf16.mxu0 0
        %2545 = vmatpush1.bf16.msra.mxu0 0
        %2546 = vmatprep.subr.bf16.mxu0 0
        %2547 = vmatpush1.bf16.msra.mxu0 0
        %2548 = vmatprep.subr.bf16.mxu0 0
        %2549 = vmatpush1.bf16.msra.mxu0 0
        %2550 = vmatprep.subr.bf16.mxu0 0
        %2551 = vmatpush1.bf16.msra.mxu0 0
        %2552 = vmatprep.subr.bf16.mxu0 0
        %2553 = vmatpush1.bf16.msra.mxu0 0
        %2554 = vmatprep.subr.bf16.mxu0 0
        %2555 = vmatpush1.bf16.msra.mxu0 0
        %2556 = vmatprep.subr.bf16.mxu0 0
        %2557 = vmatpush1.bf16.msra.mxu0 0
        %2558 = vmatprep.mubr.bf16.mxu0 0
        %2559 = vmatmul.mubr.bf16.gmra.mrb[0].mxu0 %v2472
        %v2560 = vpop.f32.mrb[0].mxu0
        %v2561 = vadd.f32 %v2406, %v2560
        %v2562 = vpop.f32.mrb[0].mxu0
        %v2563 = vpop.f32.mrb[0].mxu0
        %v2564 = vpop.f32.mrb[0].mxu0
        %2565 = vdwg.mxu0
        %v2570 = vunpack.c.l.b16 %v2313
        %v2571 = vunpack.c.l.b16 %v2314
        %v2572 = vunpack.c.l.b16 %v2315
        %v2573 = vunpack.c.l.b16 %v2316
        %v2574 = vpack.c.b16 %v2571, %v2570
        %v2575 = vpack.c.b16 %v2573, %v2572
        %2578 = vmatprep.subr.bf16.mxu0 0
        %2579 = vmatpush1.bf16.msra.mxu0 %v2574
        %2580 = vmatprep.subr.bf16.mxu0 0
        %2581 = vmatpush1.bf16.msra.mxu0 %v2575
        %2582 = vmatprep.subr.bf16.mxu0 0
        %2583 = vmatpush1.bf16.msra.mxu0 0
        %2584 = vmatprep.subr.bf16.mxu0 0
        %2585 = vmatpush1.bf16.msra.mxu0 0
        %2586 = vmatprep.subr.bf16.mxu0 0
        %2587 = vmatpush1.bf16.msra.mxu0 0
        %2588 = vmatprep.subr.bf16.mxu0 0
        %2589 = vmatpush1.bf16.msra.mxu0 0
        %2590 = vmatprep.subr.bf16.mxu0 0
        %2591 = vmatpush1.bf16.msra.mxu0 0
        %2592 = vmatprep.subr.bf16.mxu0 0
        %2593 = vmatpush1.bf16.msra.mxu0 0
        %2594 = vmatprep.subr.bf16.mxu0 0
        %2595 = vmatpush1.bf16.msra.mxu0 0
        %2596 = vmatprep.subr.bf16.mxu0 0
        %2597 = vmatpush1.bf16.msra.mxu0 0
        %2598 = vmatprep.subr.bf16.mxu0 0
        %2599 = vmatpush1.bf16.msra.mxu0 0
        %2600 = vmatprep.subr.bf16.mxu0 0
        %2601 = vmatpush1.bf16.msra.mxu0 0
        %2602 = vmatprep.subr.bf16.mxu0 0
        %2603 = vmatpush1.bf16.msra.mxu0 0
        %2604 = vmatprep.subr.bf16.mxu0 0
        %2605 = vmatpush1.bf16.msra.mxu0 0
        %2606 = vmatprep.subr.bf16.mxu0 0
        %2607 = vmatpush1.bf16.msra.mxu0 0
        %2608 = vmatprep.subr.bf16.mxu0 0
        %2609 = vmatpush1.bf16.msra.mxu0 0
        %2610 = vmatprep.mubr.bf16.mxu0 0
        %2611 = vmatmul.mubr.bf16.gmra.mrb[0].mxu0 %v2472
        %v2612 = vpop.f32.mrb[0].mxu0
        %v2613 = vadd.f32 %v2410, %v2612
        %v2614 = vpop.f32.mrb[0].mxu0
        %v2615 = vpop.f32.mrb[0].mxu0
        %v2616 = vpop.f32.mrb[0].mxu0
        %2617 = vdwg.mxu0
        %v2622 = vunpack.c.l.b16 %v2317
        %v2623 = vunpack.c.l.b16 %v2318
        %v2624 = vunpack.c.l.b16 %v2319
        %v2625 = vunpack.c.l.b16 %v2320
        %v2626 = vpack.c.b16 %v2623, %v2622
        %v2627 = vpack.c.b16 %v2625, %v2624
        %2630 = vmatprep.subr.bf16.mxu0 0
        %2631 = vmatpush1.bf16.msra.mxu0 %v2626
        %2632 = vmatprep.subr.bf16.mxu0 0
        %2633 = vmatpush1.bf16.msra.mxu0 %v2627
        %2634 = vmatprep.subr.bf16.mxu0 0
        %2635 = vmatpush1.bf16.msra.mxu0 0
        %2636 = vmatprep.subr.bf16.mxu0 0
        %2637 = vmatpush1.bf16.msra.mxu0 0
        %2638 = vmatprep.subr.bf16.mxu0 0
        %2639 = vmatpush1.bf16.msra.mxu0 0
        %2640 = vmatprep.subr.bf16.mxu0 0
        %2641 = vmatpush1.bf16.msra.mxu0 0
        %2642 = vmatprep.subr.bf16.mxu0 0
        %2643 = vmatpush1.bf16.msra.mxu0 0
        %2644 = vmatprep.subr.bf16.mxu0 0
        %2645 = vmatpush1.bf16.msra.mxu0 0
        %2646 = vmatprep.subr.bf16.mxu0 0
        %2647 = vmatpush1.bf16.msra.mxu0 0
        %2648 = vmatprep.subr.bf16.mxu0 0
        %2649 = vmatpush1.bf16.msra.mxu0 0
        %2650 = vmatprep.subr.bf16.mxu0 0
        %2651 = vmatpush1.bf16.msra.mxu0 0
        %2652 = vmatprep.subr.bf16.mxu0 0
        %2653 = vmatpush1.bf16.msra.mxu0 0
        %2654 = vmatprep.subr.bf16.mxu0 0
        %2655 = vmatpush1.bf16.msra.mxu0 0
        %2656 = vmatprep.subr.bf16.mxu0 0
        %2657 = vmatpush1.bf16.msra.mxu0 0
        %2658 = vmatprep.subr.bf16.mxu0 0
        %2659 = vmatpush1.bf16.msra.mxu0 0
        %2660 = vmatprep.subr.bf16.mxu0 0
        %2661 = vmatpush1.bf16.msra.mxu0 0
        %2662 = vmatprep.mubr.bf16.mxu0 0
        %2663 = vmatmul.mubr.bf16.gmra.mrb[0].mxu0 %v2472
        %v2664 = vpop.f32.mrb[0].mxu0
        %v2665 = vadd.f32 %v2414, %v2664
        %v2666 = vpop.f32.mrb[0].mxu0
        %v2667 = vpop.f32.mrb[0].mxu0
        %v2668 = vpop.f32.mrb[0].mxu0
        %2669 = vdwg.mxu0
        %v2674 = vunpack.c.l.b16 %v2321
        %v2675 = vunpack.c.l.b16 %v2322
        %v2676 = vunpack.c.l.b16 %v2323
        %v2677 = vunpack.c.l.b16 %v2324
        %v2678 = vpack.c.b16 %v2675, %v2674
        %v2679 = vpack.c.b16 %v2677, %v2676
        %2682 = vmatprep.subr.bf16.mxu0 0
        %2683 = vmatpush1.bf16.msra.mxu0 %v2678
        %2684 = vmatprep.subr.bf16.mxu0 0
        %2685 = vmatpush1.bf16.msra.mxu0 %v2679
        %2686 = vmatprep.subr.bf16.mxu0 0
        %2687 = vmatpush1.bf16.msra.mxu0 0
        %2688 = vmatprep.subr.bf16.mxu0 0
        %2689 = vmatpush1.bf16.msra.mxu0 0
        %2690 = vmatprep.subr.bf16.mxu0 0
        %2691 = vmatpush1.bf16.msra.mxu0 0
        %2692 = vmatprep.subr.bf16.mxu0 0
        %2693 = vmatpush1.bf16.msra.mxu0 0
        %2694 = vmatprep.subr.bf16.mxu0 0
        %2695 = vmatpush1.bf16.msra.mxu0 0
        %2696 = vmatprep.subr.bf16.mxu0 0
        %2697 = vmatpush1.bf16.msra.mxu0 0
        %2698 = vmatprep.subr.bf16.mxu0 0
        %2699 = vmatpush1.bf16.msra.mxu0 0
        %2700 = vmatprep.subr.bf16.mxu0 0
        %2701 = vmatpush1.bf16.msra.mxu0 0
        %2702 = vmatprep.subr.bf16.mxu0 0
        %2703 = vmatpush1.bf16.msra.mxu0 0
        %2704 = vmatprep.subr.bf16.mxu0 0
        %2705 = vmatpush1.bf16.msra.mxu0 0
        %2706 = vmatprep.subr.bf16.mxu0 0
        %2707 = vmatpush1.bf16.msra.mxu0 0
        %2708 = vmatprep.subr.bf16.mxu0 0
        %2709 = vmatpush1.bf16.msra.mxu0 0
        %2710 = vmatprep.subr.bf16.mxu0 0
        %2711 = vmatpush1.bf16.msra.mxu0 0
        %2712 = vmatprep.subr.bf16.mxu0 0
        %2713 = vmatpush1.bf16.msra.mxu0 0
        %2714 = vmatprep.mubr.bf16.mxu0 0
        %2715 = vmatmul.mubr.bf16.gmra.mrb[0].mxu0 %v2472
        %v2716 = vpop.f32.mrb[0].mxu0
        %v2717 = vadd.f32 %v2418, %v2716
        %v2718 = vpop.f32.mrb[0].mxu0
        %v2719 = vpop.f32.mrb[0].mxu0
        %v2720 = vpop.f32.mrb[0].mxu0
        %2721 = vdwg.mxu0
        %v2726 = vunpack.c.l.b16 %v2325
        %v2727 = vunpack.c.l.b16 %v2326
        %v2728 = vunpack.c.l.b16 %v2327
        %v2729 = vunpack.c.l.b16 %v2328
        %v2730 = vpack.c.b16 %v2727, %v2726
        %v2731 = vpack.c.b16 %v2729, %v2728
        %2734 = vmatprep.subr.bf16.mxu0 0
        %2735 = vmatpush1.bf16.msra.mxu0 %v2730
        %2736 = vmatprep.subr.bf16.mxu0 0
        %2737 = vmatpush1.bf16.msra.mxu0 %v2731
        %2738 = vmatprep.subr.bf16.mxu0 0
        %2739 = vmatpush1.bf16.msra.mxu0 0
        %2740 = vmatprep.subr.bf16.mxu0 0
        %2741 = vmatpush1.bf16.msra.mxu0 0
        %2742 = vmatprep.subr.bf16.mxu0 0
        %2743 = vmatpush1.bf16.msra.mxu0 0
        %2744 = vmatprep.subr.bf16.mxu0 0
        %2745 = vmatpush1.bf16.msra.mxu0 0
        %2746 = vmatprep.subr.bf16.mxu0 0
        %2747 = vmatpush1.bf16.msra.mxu0 0
        %2748 = vmatprep.subr.bf16.mxu0 0
        %2749 = vmatpush1.bf16.msra.mxu0 0
        %2750 = vmatprep.subr.bf16.mxu0 0
        %2751 = vmatpush1.bf16.msra.mxu0 0
        %2752 = vmatprep.subr.bf16.mxu0 0
        %2753 = vmatpush1.bf16.msra.mxu0 0
        %2754 = vmatprep.subr.bf16.mxu0 0
        %2755 = vmatpush1.bf16.msra.mxu0 0
        %2756 = vmatprep.subr.bf16.mxu0 0
        %2757 = vmatpush1.bf16.msra.mxu0 0
        %2758 = vmatprep.subr.bf16.mxu0 0
        %2759 = vmatpush1.bf16.msra.mxu0 0
        %2760 = vmatprep.subr.bf16.mxu0 0
        %2761 = vmatpush1.bf16.msra.mxu0 0
        %2762 = vmatprep.subr.bf16.mxu0 0
        %2763 = vmatpush1.bf16.msra.mxu0 0
        %2764 = vmatprep.subr.bf16.mxu0 0
        %2765 = vmatpush1.bf16.msra.mxu0 0
        %2766 = vmatprep.mubr.bf16.mxu0 0
        %2767 = vmatmul.mubr.bf16.gmra.mrb[0].mxu0 %v2472
        %v2768 = vpop.f32.mrb[0].mxu0
        %v2769 = vadd.f32 %v2422, %v2768
        %v2770 = vpop.f32.mrb[0].mxu0
        %v2771 = vpop.f32.mrb[0].mxu0
        %v2772 = vpop.f32.mrb[0].mxu0
        %2773 = vdwg.mxu0
        %v2778 = vunpack.c.l.b16 %v2329
        %v2779 = vunpack.c.l.b16 %v2330
        %v2780 = vunpack.c.l.b16 %v2331
        %v2781 = vunpack.c.l.b16 %v2332
        %v2782 = vpack.c.b16 %v2779, %v2778
        %v2783 = vpack.c.b16 %v2781, %v2780
        %2786 = vmatprep.subr.bf16.mxu0 0
        %2787 = vmatpush1.bf16.msra.mxu0 %v2782
        %2788 = vmatprep.subr.bf16.mxu0 0
        %2789 = vmatpush1.bf16.msra.mxu0 %v2783
        %2790 = vmatprep.subr.bf16.mxu0 0
        %2791 = vmatpush1.bf16.msra.mxu0 0
        %2792 = vmatprep.subr.bf16.mxu0 0
        %2793 = vmatpush1.bf16.msra.mxu0 0
        %2794 = vmatprep.subr.bf16.mxu0 0
        %2795 = vmatpush1.bf16.msra.mxu0 0
        %2796 = vmatprep.subr.bf16.mxu0 0
        %2797 = vmatpush1.bf16.msra.mxu0 0
        %2798 = vmatprep.subr.bf16.mxu0 0
        %2799 = vmatpush1.bf16.msra.mxu0 0
        %2800 = vmatprep.subr.bf16.mxu0 0
        %2801 = vmatpush1.bf16.msra.mxu0 0
        %2802 = vmatprep.subr.bf16.mxu0 0
        %2803 = vmatpush1.bf16.msra.mxu0 0
        %2804 = vmatprep.subr.bf16.mxu0 0
        %2805 = vmatpush1.bf16.msra.mxu0 0
        %2806 = vmatprep.subr.bf16.mxu0 0
        %2807 = vmatpush1.bf16.msra.mxu0 0
        %2808 = vmatprep.subr.bf16.mxu0 0
        %2809 = vmatpush1.bf16.msra.mxu0 0
        %2810 = vmatprep.subr.bf16.mxu0 0
        %2811 = vmatpush1.bf16.msra.mxu0 0
        %2812 = vmatprep.subr.bf16.mxu0 0
        %2813 = vmatpush1.bf16.msra.mxu0 0
        %2814 = vmatprep.subr.bf16.mxu0 0
        %2815 = vmatpush1.bf16.msra.mxu0 0
        %2816 = vmatprep.subr.bf16.mxu0 0
        %2817 = vmatpush1.bf16.msra.mxu0 0
        %2818 = vmatprep.mubr.bf16.mxu0 0
        %2819 = vmatmul.mubr.bf16.gmra.mrb[0].mxu0 %v2472
        %v2820 = vpop.f32.mrb[0].mxu0
        %v2821 = vadd.f32 %v2426, %v2820
        %v2822 = vpop.f32.mrb[0].mxu0
        %v2823 = vpop.f32.mrb[0].mxu0
        %v2824 = vpop.f32.mrb[0].mxu0
        %2825 = vdwg.mxu0
        %v2830 = vunpack.c.l.b16 %v2333
        %v2831 = vunpack.c.l.b16 %v2334
        %v2832 = vunpack.c.l.b16 %v2335
        %v2833 = vunpack.c.l.b16 %v2336
        %v2834 = vpack.c.b16 %v2831, %v2830
        %v2835 = vpack.c.b16 %v2833, %v2832
        %2838 = vmatprep.subr.bf16.mxu0 0
        %2839 = vmatpush1.bf16.msra.mxu0 %v2834
        %2840 = vmatprep.subr.bf16.mxu0 0
        %2841 = vmatpush1.bf16.msra.mxu0 %v2835
        %2842 = vmatprep.subr.bf16.mxu0 0
        %2843 = vmatpush1.bf16.msra.mxu0 0
        %2844 = vmatprep.subr.bf16.mxu0 0
        %2845 = vmatpush1.bf16.msra.mxu0 0
        %2846 = vmatprep.subr.bf16.mxu0 0
        %2847 = vmatpush1.bf16.msra.mxu0 0
        %2848 = vmatprep.subr.bf16.mxu0 0
        %2849 = vmatpush1.bf16.msra.mxu0 0
        %2850 = vmatprep.subr.bf16.mxu0 0
        %2851 = vmatpush1.bf16.msra.mxu0 0
        %2852 = vmatprep.subr.bf16.mxu0 0
        %2853 = vmatpush1.bf16.msra.mxu0 0
        %2854 = vmatprep.subr.bf16.mxu0 0
        %2855 = vmatpush1.bf16.msra.mxu0 0
        %2856 = vmatprep.subr.bf16.mxu0 0
        %2857 = vmatpush1.bf16.msra.mxu0 0
        %2858 = vmatprep.subr.bf16.mxu0 0
        %2859 = vmatpush1.bf16.msra.mxu0 0
        %2860 = vmatprep.subr.bf16.mxu0 0
        %2861 = vmatpush1.bf16.msra.mxu0 0
        %2862 = vmatprep.subr.bf16.mxu0 0
        %2863 = vmatpush1.bf16.msra.mxu0 0
        %2864 = vmatprep.subr.bf16.mxu0 0
        %2865 = vmatpush1.bf16.msra.mxu0 0
        %2866 = vmatprep.subr.bf16.mxu0 0
        %2867 = vmatpush1.bf16.msra.mxu0 0
        %2868 = vmatprep.subr.bf16.mxu0 0
        %2869 = vmatpush1.bf16.msra.mxu0 0
        %2870 = vmatprep.mubr.bf16.mxu0 0
        %2871 = vmatmul.mubr.bf16.gmra.mrb[0].mxu0 %v2472
        %v2872 = vpop.f32.mrb[0].mxu0
        %v2873 = vadd.f32 %v2430, %v2872
        %v2874 = vpop.f32.mrb[0].mxu0
        %v2875 = vpop.f32.mrb[0].mxu0
        %v2876 = vpop.f32.mrb[0].mxu0
        %2877 = vdwg.mxu0
        %v2882 = vunpack.c.l.b16 %v2337
        %v2883 = vunpack.c.l.b16 %v2338
        %v2884 = vunpack.c.l.b16 %v2339
        %v2885 = vunpack.c.l.b16 %v2340
        %v2886 = vpack.c.b16 %v2883, %v2882
        %v2887 = vpack.c.b16 %v2885, %v2884
        %2890 = vmatprep.subr.bf16.mxu0 0
        %2891 = vmatpush1.bf16.msra.mxu0 %v2886
        %2892 = vmatprep.subr.bf16.mxu0 0
        %2893 = vmatpush1.bf16.msra.mxu0 %v2887
        %2894 = vmatprep.subr.bf16.mxu0 0
        %2895 = vmatpush1.bf16.msra.mxu0 0
        %2896 = vmatprep.subr.bf16.mxu0 0
        %2897 = vmatpush1.bf16.msra.mxu0 0
        %2898 = vmatprep.subr.bf16.mxu0 0
        %2899 = vmatpush1.bf16.msra.mxu0 0
        %2900 = vmatprep.subr.bf16.mxu0 0
        %2901 = vmatpush1.bf16.msra.mxu0 0
        %2902 = vmatprep.subr.bf16.mxu0 0
        %2903 = vmatpush1.bf16.msra.mxu0 0
        %2904 = vmatprep.subr.bf16.mxu0 0
        %2905 = vmatpush1.bf16.msra.mxu0 0
        %2906 = vmatprep.subr.bf16.mxu0 0
        %2907 = vmatpush1.bf16.msra.mxu0 0
        %2908 = vmatprep.subr.bf16.mxu0 0
        %2909 = vmatpush1.bf16.msra.mxu0 0
        %2910 = vmatprep.subr.bf16.mxu0 0
        %2911 = vmatpush1.bf16.msra.mxu0 0
        %2912 = vmatprep.subr.bf16.mxu0 0
        %2913 = vmatpush1.bf16.msra.mxu0 0
        %2914 = vmatprep.subr.bf16.mxu0 0
        %2915 = vmatpush1.bf16.msra.mxu0 0
        %2916 = vmatprep.subr.bf16.mxu0 0
        %2917 = vmatpush1.bf16.msra.mxu0 0
        %2918 = vmatprep.subr.bf16.mxu0 0
        %2919 = vmatpush1.bf16.msra.mxu0 0
        %2920 = vmatprep.subr.bf16.mxu0 0
        %2921 = vmatpush1.bf16.msra.mxu0 0
        %2922 = vmatprep.mubr.bf16.mxu0 0
        %2923 = vmatmul.mubr.bf16.gmra.mrb[0].mxu0 %v2472
        %v2924 = vpop.f32.mrb[0].mxu0
        %v2925 = vadd.f32 %v2434, %v2924
        %v2926 = vpop.f32.mrb[0].mxu0
        %v2927 = vpop.f32.mrb[0].mxu0
        %v2928 = vpop.f32.mrb[0].mxu0
        %2929 = vdwg.mxu0
        %v2934 = vunpack.c.l.b16 %v2341
        %v2935 = vunpack.c.l.b16 %v2342
        %v2936 = vunpack.c.l.b16 %v2343
        %v2937 = vunpack.c.l.b16 %v2344
        %v2938 = vpack.c.b16 %v2935, %v2934
        %v2939 = vpack.c.b16 %v2937, %v2936
        %2942 = vmatprep.subr.bf16.mxu0 0
        %2943 = vmatpush1.bf16.msra.mxu0 %v2938
        %2944 = vmatprep.subr.bf16.mxu0 0
        %2945 = vmatpush1.bf16.msra.mxu0 %v2939
        %2946 = vmatprep.subr.bf16.mxu0 0
        %2947 = vmatpush1.bf16.msra.mxu0 0
        %2948 = vmatprep.subr.bf16.mxu0 0
        %2949 = vmatpush1.bf16.msra.mxu0 0
        %2950 = vmatprep.subr.bf16.mxu0 0
        %2951 = vmatpush1.bf16.msra.mxu0 0
        %2952 = vmatprep.subr.bf16.mxu0 0
        %2953 = vmatpush1.bf16.msra.mxu0 0
        %2954 = vmatprep.subr.bf16.mxu0 0
        %2955 = vmatpush1.bf16.msra.mxu0 0
        %2956 = vmatprep.subr.bf16.mxu0 0
        %2957 = vmatpush1.bf16.msra.mxu0 0
        %2958 = vmatprep.subr.bf16.mxu0 0
        %2959 = vmatpush1.bf16.msra.mxu0 0
        %2960 = vmatprep.subr.bf16.mxu0 0
        %2961 = vmatpush1.bf16.msra.mxu0 0
        %2962 = vmatprep.subr.bf16.mxu0 0
        %2963 = vmatpush1.bf16.msra.mxu0 0
        %2964 = vmatprep.subr.bf16.mxu0 0
        %2965 = vmatpush1.bf16.msra.mxu0 0
        %2966 = vmatprep.subr.bf16.mxu0 0
        %2967 = vmatpush1.bf16.msra.mxu0 0
        %2968 = vmatprep.subr.bf16.mxu0 0
        %2969 = vmatpush1.bf16.msra.mxu0 0
        %2970 = vmatprep.subr.bf16.mxu0 0
        %2971 = vmatpush1.bf16.msra.mxu0 0
        %2972 = vmatprep.subr.bf16.mxu0 0
        %2973 = vmatpush1.bf16.msra.mxu0 0
        %2974 = vmatprep.mubr.bf16.mxu0 0
        %2975 = vmatmul.mubr.bf16.gmra.mrb[0].mxu0 %v2472
        %v2976 = vpop.f32.mrb[0].mxu0
        %v2977 = vadd.f32 %v2438, %v2976
        %v2978 = vpop.f32.mrb[0].mxu0
        %v2979 = vpop.f32.mrb[0].mxu0
        %v2980 = vpop.f32.mrb[0].mxu0
        %2981 = vdwg.mxu0
        %v2986 = vunpack.c.l.b16 %v2345
        %v2987 = vunpack.c.l.b16 %v2346
        %v2988 = vunpack.c.l.b16 %v2347
        %v2989 = vunpack.c.l.b16 %v2348
        %v2990 = vpack.c.b16 %v2987, %v2986
        %v2991 = vpack.c.b16 %v2989, %v2988
        %2994 = vmatprep.subr.bf16.mxu0 0
        %2995 = vmatpush1.bf16.msra.mxu0 %v2990
        %2996 = vmatprep.subr.bf16.mxu0 0
        %2997 = vmatpush1.bf16.msra.mxu0 %v2991
        %2998 = vmatprep.subr.bf16.mxu0 0
        %2999 = vmatpush1.bf16.msra.mxu0 0
        %3000 = vmatprep.subr.bf16.mxu0 0
        %3001 = vmatpush1.bf16.msra.mxu0 0
        %3002 = vmatprep.subr.bf16.mxu0 0
        %3003 = vmatpush1.bf16.msra.mxu0 0
        %3004 = vmatprep.subr.bf16.mxu0 0
        %3005 = vmatpush1.bf16.msra.mxu0 0
        %3006 = vmatprep.subr.bf16.mxu0 0
        %3007 = vmatpush1.bf16.msra.mxu0 0
        %3008 = vmatprep.subr.bf16.mxu0 0
        %3009 = vmatpush1.bf16.msra.mxu0 0
        %3010 = vmatprep.subr.bf16.mxu0 0
        %3011 = vmatpush1.bf16.msra.mxu0 0
        %3012 = vmatprep.subr.bf16.mxu0 0
        %3013 = vmatpush1.bf16.msra.mxu0 0
        %3014 = vmatprep.subr.bf16.mxu0 0
        %3015 = vmatpush1.bf16.msra.mxu0 0
        %3016 = vmatprep.subr.bf16.mxu0 0
        %3017 = vmatpush1.bf16.msra.mxu0 0
        %3018 = vmatprep.subr.bf16.mxu0 0
        %3019 = vmatpush1.bf16.msra.mxu0 0
        %3020 = vmatprep.subr.bf16.mxu0 0
        %3021 = vmatpush1.bf16.msra.mxu0 0
        %3022 = vmatprep.subr.bf16.mxu0 0
        %3023 = vmatpush1.bf16.msra.mxu0 0
        %3024 = vmatprep.subr.bf16.mxu0 0
        %3025 = vmatpush1.bf16.msra.mxu0 0
        %3026 = vmatprep.mubr.bf16.mxu0 0
        %3027 = vmatmul.mubr.bf16.gmra.mrb[0].mxu0 %v2472
        %v3028 = vpop.f32.mrb[0].mxu0
        %v3029 = vadd.f32 %v2442, %v3028
        %v3030 = vpop.f32.mrb[0].mxu0
        %v3031 = vpop.f32.mrb[0].mxu0
        %v3032 = vpop.f32.mrb[0].mxu0
        %3033 = vdwg.mxu0
        %v3038 = vunpack.c.l.b16 %v2349
        %v3039 = vunpack.c.l.b16 %v2350
        %v3040 = vunpack.c.l.b16 %v2351
        %v3041 = vunpack.c.l.b16 %v2352
        %v3042 = vpack.c.b16 %v3039, %v3038
        %v3043 = vpack.c.b16 %v3041, %v3040
        %3046 = vmatprep.subr.bf16.mxu0 0
        %3047 = vmatpush1.bf16.msra.mxu0 %v3042
        %3048 = vmatprep.subr.bf16.mxu0 0
        %3049 = vmatpush1.bf16.msra.mxu0 %v3043
        %3050 = vmatprep.subr.bf16.mxu0 0
        %3051 = vmatpush1.bf16.msra.mxu0 0
        %3052 = vmatprep.subr.bf16.mxu0 0
        %3053 = vmatpush1.bf16.msra.mxu0 0
        %3054 = vmatprep.subr.bf16.mxu0 0
        %3055 = vmatpush1.bf16.msra.mxu0 0
        %3056 = vmatprep.subr.bf16.mxu0 0
        %3057 = vmatpush1.bf16.msra.mxu0 0
        %3058 = vmatprep.subr.bf16.mxu0 0
        %3059 = vmatpush1.bf16.msra.mxu0 0
        %3060 = vmatprep.subr.bf16.mxu0 0
        %3061 = vmatpush1.bf16.msra.mxu0 0
        %3062 = vmatprep.subr.bf16.mxu0 0
        %3063 = vmatpush1.bf16.msra.mxu0 0
        %3064 = vmatprep.subr.bf16.mxu0 0
        %3065 = vmatpush1.bf16.msra.mxu0 0
        %3066 = vmatprep.subr.bf16.mxu0 0
        %3067 = vmatpush1.bf16.msra.mxu0 0
        %3068 = vmatprep.subr.bf16.mxu0 0
        %3069 = vmatpush1.bf16.msra.mxu0 0
        %3070 = vmatprep.subr.bf16.mxu0 0
        %3071 = vmatpush1.bf16.msra.mxu0 0
        %3072 = vmatprep.subr.bf16.mxu0 0
        %3073 = vmatpush1.bf16.msra.mxu0 0
        %3074 = vmatprep.subr.bf16.mxu0 0
        %3075 = vmatpush1.bf16.msra.mxu0 0
        %3076 = vmatprep.subr.bf16.mxu0 0
        %3077 = vmatpush1.bf16.msra.mxu0 0
        %3078 = vmatprep.mubr.bf16.mxu0 0
        %3079 = vmatmul.mubr.bf16.gmra.mrb[0].mxu0 %v2472
        %v3080 = vpop.f32.mrb[0].mxu0
        %v3081 = vadd.f32 %v2446, %v3080
        %v3082 = vpop.f32.mrb[0].mxu0
        %v3083 = vpop.f32.mrb[0].mxu0
        %v3084 = vpop.f32.mrb[0].mxu0
        %3085 = vdwg.mxu0
        %v3086 = vpack.c.bf16 %v2509, %v2509
        %v3087 = vpack.c.bf16 %v2561, %v2561
        %v3088 = vpack.c.bf16 %v2613, %v2613
        %v3089 = vpack.c.bf16 %v2665, %v2665
        %v3090 = vpack.c.bf16 %v2717, %v2717
        %v3091 = vpack.c.bf16 %v2769, %v2769
        %v3092 = vpack.c.bf16 %v2821, %v2821
        %v3093 = vpack.c.bf16 %v2873, %v2873
        %v3095 = vsel %vm610, %v3086, 0
        %v3098 = vsel %vm610, %v3090, 0
        %3100 = vmatprep.subr.bf16.mxu0 0
        %3101 = vmatpush1.bf16.xpose.msra.mxu0 %v3098
        %3102 = vmatprep.subr.bf16.mxu0 0
        %3103 = vmatpush1.bf16.xpose.msra.mxu0 0
        %3104 = vmatprep.subr.bf16.mxu0 0
        %3105 = vmatpush1.bf16.xpose.msra.mxu0 0
        %3106 = vmatprep.subr.bf16.mxu0 0
        %3107 = vmatpush1.bf16.xpose.msra.mxu0 0
        %3108 = vmatprep.subr.bf16.mxu0 0
        %3109 = vmatpush1.bf16.xpose.msra.mxu0 0
        %3110 = vmatprep.subr.bf16.mxu0 0
        %3111 = vmatpush1.bf16.xpose.msra.mxu0 0
        %3112 = vmatprep.subr.bf16.mxu0 0
        %3113 = vmatpush1.bf16.xpose.msra.mxu0 0
        %3114 = vmatprep.subr.bf16.mxu0 0
        %3115 = vmatpush1.bf16.xpose.msra.mxu0 0
        %3116 = vmatprep.subr.bf16.mxu0 0
        %3117 = vmatpush1.bf16.xpose.msra.mxu0 0
        %3118 = vmatprep.subr.bf16.mxu0 0
        %3119 = vmatpush1.bf16.xpose.msra.mxu0 0
        %3120 = vmatprep.subr.bf16.mxu0 0
        %3121 = vmatpush1.bf16.xpose.msra.mxu0 0
        %3122 = vmatprep.subr.bf16.mxu0 0
        %3123 = vmatpush1.bf16.xpose.msra.mxu0 0
        %3124 = vmatprep.subr.bf16.mxu0 0
        %3125 = vmatpush1.bf16.xpose.msra.mxu0 0
        %3126 = vmatprep.subr.bf16.mxu0 0
        %3127 = vmatpush1.bf16.xpose.msra.mxu0 0
        %3128 = vmatprep.subr.bf16.mxu0 0
        %3129 = vmatpush1.bf16.xpose.msra.mxu0 0
        %3130 = vmatprep.subr.bf16.mxu0 0
        %3131 = vmatpush1.bf16.xpose.msra.mxu0 0
        %3132 = vmatprep.mubr.bf16.mxu0 0
        %3133 = vmatmul.mubr.bf16.gmra.mrb[0].mxu0 %v3095
        %v3134 = vpop.f32.mrb[0].mxu0
        %v3135 = vadd.f32 %v446, %v3134
        %v3136 = vpop.f32.mrb[0].mxu0
        %v3137 = vpop.f32.mrb[0].mxu0
        %v3138 = vpop.f32.mrb[0].mxu0
        %3139 = vdwg.mxu0
        %v3141 = vsel %vm610, %v3087, 0
        %v3144 = vsel %vm610, %v3091, 0
        %3146 = vmatprep.subr.bf16.mxu0 0
        %3147 = vmatpush1.bf16.xpose.msra.mxu0 %v3144
        %3148 = vmatprep.subr.bf16.mxu0 0
        %3149 = vmatpush1.bf16.xpose.msra.mxu0 0
        %3150 = vmatprep.subr.bf16.mxu0 0
        %3151 = vmatpush1.bf16.xpose.msra.mxu0 0
        %3152 = vmatprep.subr.bf16.mxu0 0
        %3153 = vmatpush1.bf16.xpose.msra.mxu0 0
        %3154 = vmatprep.subr.bf16.mxu0 0
        %3155 = vmatpush1.bf16.xpose.msra.mxu0 0
        %3156 = vmatprep.subr.bf16.mxu0 0
        %3157 = vmatpush1.bf16.xpose.msra.mxu0 0
        %3158 = vmatprep.subr.bf16.mxu0 0
        %3159 = vmatpush1.bf16.xpose.msra.mxu0 0
        %3160 = vmatprep.subr.bf16.mxu0 0
        %3161 = vmatpush1.bf16.xpose.msra.mxu0 0
        %3162 = vmatprep.subr.bf16.mxu0 0
        %3163 = vmatpush1.bf16.xpose.msra.mxu0 0
        %3164 = vmatprep.subr.bf16.mxu0 0
        %3165 = vmatpush1.bf16.xpose.msra.mxu0 0
        %3166 = vmatprep.subr.bf16.mxu0 0
        %3167 = vmatpush1.bf16.xpose.msra.mxu0 0
        %3168 = vmatprep.subr.bf16.mxu0 0
        %3169 = vmatpush1.bf16.xpose.msra.mxu0 0
        %3170 = vmatprep.subr.bf16.mxu0 0
        %3171 = vmatpush1.bf16.xpose.msra.mxu0 0
        %3172 = vmatprep.subr.bf16.mxu0 0
        %3173 = vmatpush1.bf16.xpose.msra.mxu0 0
        %3174 = vmatprep.subr.bf16.mxu0 0
        %3175 = vmatpush1.bf16.xpose.msra.mxu0 0
        %3176 = vmatprep.subr.bf16.mxu0 0
        %3177 = vmatpush1.bf16.xpose.msra.mxu0 0
        %3178 = vmatprep.mubr.bf16.mxu0 0
        %3179 = vmatmul.mubr.bf16.gmra.mrb[0].mxu0 %v3141
        %v3180 = vpop.f32.mrb[0].mxu0
        %v3181 = vadd.f32 %v446, %v3180
        %v3182 = vpop.f32.mrb[0].mxu0
        %v3183 = vpop.f32.mrb[0].mxu0
        %v3184 = vpop.f32.mrb[0].mxu0
        %3185 = vdwg.mxu0
        %v3187 = vsel %vm610, %v3088, 0
        %v3190 = vsel %vm610, %v3092, 0
        %3192 = vmatprep.subr.bf16.mxu0 0
        %3193 = vmatpush1.bf16.xpose.msra.mxu0 %v3190
        %3194 = vmatprep.subr.bf16.mxu0 0
        %3195 = vmatpush1.bf16.xpose.msra.mxu0 0
        %3196 = vmatprep.subr.bf16.mxu0 0
        %3197 = vmatpush1.bf16.xpose.msra.mxu0 0
        %3198 = vmatprep.subr.bf16.mxu0 0
        %3199 = vmatpush1.bf16.xpose.msra.mxu0 0
        %3200 = vmatprep.subr.bf16.mxu0 0
        %3201 = vmatpush1.bf16.xpose.msra.mxu0 0
        %3202 = vmatprep.subr.bf16.mxu0 0
        %3203 = vmatpush1.bf16.xpose.msra.mxu0 0
        %3204 = vmatprep.subr.bf16.mxu0 0
        %3205 = vmatpush1.bf16.xpose.msra.mxu0 0
        %3206 = vmatprep.subr.bf16.mxu0 0
        %3207 = vmatpush1.bf16.xpose.msra.mxu0 0
        %3208 = vmatprep.subr.bf16.mxu0 0
        %3209 = vmatpush1.bf16.xpose.msra.mxu0 0
        %3210 = vmatprep.subr.bf16.mxu0 0
        %3211 = vmatpush1.bf16.xpose.msra.mxu0 0
        %3212 = vmatprep.subr.bf16.mxu0 0
        %3213 = vmatpush1.bf16.xpose.msra.mxu0 0
        %3214 = vmatprep.subr.bf16.mxu0 0
        %3215 = vmatpush1.bf16.xpose.msra.mxu0 0
        %3216 = vmatprep.subr.bf16.mxu0 0
        %3217 = vmatpush1.bf16.xpose.msra.mxu0 0
        %3218 = vmatprep.subr.bf16.mxu0 0
        %3219 = vmatpush1.bf16.xpose.msra.mxu0 0
        %3220 = vmatprep.subr.bf16.mxu0 0
        %3221 = vmatpush1.bf16.xpose.msra.mxu0 0
        %3222 = vmatprep.subr.bf16.mxu0 0
        %3223 = vmatpush1.bf16.xpose.msra.mxu0 0
        %3224 = vmatprep.mubr.bf16.mxu0 0
        %3225 = vmatmul.mubr.bf16.gmra.mrb[0].mxu0 %v3187
        %v3226 = vpop.f32.mrb[0].mxu0
        %v3227 = vadd.f32 %v446, %v3226
        %v3228 = vpop.f32.mrb[0].mxu0
        %v3229 = vpop.f32.mrb[0].mxu0
        %v3230 = vpop.f32.mrb[0].mxu0
        %3231 = vdwg.mxu0
        %v3233 = vsel %vm610, %v3089, 0
        %v3236 = vsel %vm610, %v3093, 0
        %3238 = vmatprep.subr.bf16.mxu0 0
        %3239 = vmatpush1.bf16.xpose.msra.mxu0 %v3236
        %3240 = vmatprep.subr.bf16.mxu0 0
        %3241 = vmatpush1.bf16.xpose.msra.mxu0 0
        %3242 = vmatprep.subr.bf16.mxu0 0
        %3243 = vmatpush1.bf16.xpose.msra.mxu0 0
        %3244 = vmatprep.subr.bf16.mxu0 0
        %3245 = vmatpush1.bf16.xpose.msra.mxu0 0
        %3246 = vmatprep.subr.bf16.mxu0 0
        %3247 = vmatpush1.bf16.xpose.msra.mxu0 0
        %3248 = vmatprep.subr.bf16.mxu0 0
        %3249 = vmatpush1.bf16.xpose.msra.mxu0 0
        %3250 = vmatprep.subr.bf16.mxu0 0
        %3251 = vmatpush1.bf16.xpose.msra.mxu0 0
        %3252 = vmatprep.subr.bf16.mxu0 0
        %3253 = vmatpush1.bf16.xpose.msra.mxu0 0
        %3254 = vmatprep.subr.bf16.mxu0 0
        %3255 = vmatpush1.bf16.xpose.msra.mxu0 0
        %3256 = vmatprep.subr.bf16.mxu0 0
        %3257 = vmatpush1.bf16.xpose.msra.mxu0 0
        %3258 = vmatprep.subr.bf16.mxu0 0
        %3259 = vmatpush1.bf16.xpose.msra.mxu0 0
        %3260 = vmatprep.subr.bf16.mxu0 0
        %3261 = vmatpush1.bf16.xpose.msra.mxu0 0
        %3262 = vmatprep.subr.bf16.mxu0 0
        %3263 = vmatpush1.bf16.xpose.msra.mxu0 0
        %3264 = vmatprep.subr.bf16.mxu0 0
        %3265 = vmatpush1.bf16.xpose.msra.mxu0 0
        %3266 = vmatprep.subr.bf16.mxu0 0
        %3267 = vmatpush1.bf16.xpose.msra.mxu0 0
        %3268 = vmatprep.subr.bf16.mxu0 0
        %3269 = vmatpush1.bf16.xpose.msra.mxu0 0
        %3270 = vmatprep.mubr.bf16.mxu0 0
        %3271 = vmatmul.mubr.bf16.gmra.mrb[0].mxu0 %v3233
        %v3272 = vpop.f32.mrb[0].mxu0
        %v3273 = vadd.f32 %v446, %v3272
        %v3274 = vpop.f32.mrb[0].mxu0
        %v3275 = vpop.f32.mrb[0].mxu0
        %v3276 = vpop.f32.mrb[0].mxu0
        %3277 = vdwg.mxu0
        %v3278 = vsel %vm1418, %v3135, -inf
        %3279 = vmax.xlane.f32.xlu0 %v3278
        %v3280 = vpop.xlane.xlu0 %3279
        %v3281 = vsel %vm1418, %v3181, -inf
        %3282 = vmax.xlane.f32.xlu0 %v3281
        %v3283 = vpop.xlane.xlu0 %3282
        %v3284 = vsel %vm1418, %v3227, -inf
        %3285 = vmax.xlane.f32.xlu0 %v3284
        %v3286 = vpop.xlane.xlu0 %3285
        %v3287 = vsel %vm1418, %v3273, -inf
        %3288 = vmax.xlane.f32.xlu0 %v3287
        %v3289 = vpop.xlane.xlu0 %3288
        %v3290 = vsub.f32 %v3135, %v3280
        %v3291 = vsub.f32 %v3181, %v3283
        %v3292 = vsub.f32 %v3227, %v3286
        %v3293 = vsub.f32 %v3273, %v3289
        %v3294 = vmul.f32 %v3290, 1.442695
        %v3295 = vpow.pop %v3294
        %v3296 = vmul.f32 %v3291, 1.442695
        %v3297 = vpow.pop %v3296
        %v3298 = vmul.f32 %v3292, 1.442695
        %v3299 = vpow.pop %v3298
        %v3300 = vmul.f32 %v3293, 1.442695
        %v3301 = vpow.pop %v3300
        %v3302 = vsel %vm1418, %v3295, 0.0
        %3303 = vadd.xlane.f32.xlu0 %v3302
        %v3304 = vpop.xlane.xlu0 %3303
        %v3305 = vsel %vm1418, %v3297, 0.0
        %3306 = vadd.xlane.f32.xlu0 %v3305
        %v3307 = vpop.xlane.xlu0 %3306
        %v3308 = vsel %vm1418, %v3299, 0.0
        %3309 = vadd.xlane.f32.xlu0 %v3308
        %v3310 = vpop.xlane.xlu0 %3309
        %v3311 = vsel %vm1418, %v3301, 0.0
        %3312 = vadd.xlane.f32.xlu0 %v3311
        %v3313 = vpop.xlane.xlu0 %3312
        %v3314 = vrcp.pop %v3304
        %v3315 = vrcp.pop %v3307
        %v3316 = vrcp.pop %v3310
        %v3317 = vrcp.pop %v3313
        %v3318 = vmul.f32 %v3295, %v3314
        %v3319 = vmul.f32 %v3297, %v3315
        %v3320 = vmul.f32 %v3299, %v3316
        %v3321 = vmul.f32 %v3301, %v3317
        %v3322 = vpack.c.bf16 %v3318, %v3318
        %v3323 = vpack.c.bf16 %v3319, %v3319
        %v3324 = vpack.c.bf16 %v3320, %v3320
        %v3325 = vpack.c.bf16 %v3321, %v3321
        %v3326 = vpack.c.bf16 %v2925, %v2925
        %v3327 = vpack.c.bf16 %v2977, %v2977
        %v3328 = vpack.c.bf16 %v3029, %v3029
        %v3329 = vpack.c.bf16 %v3081, %v3081
        %v3331 = vsel %vm1418, %v3322, 0
        %v3334 = vsel %vm1474, %v3326, 0
        %3336 = vmatprep.subr.bf16.mxu0 0
        %3337 = vmatpush1.bf16.msra.mxu0 %v3334
        %3338 = vmatprep.subr.bf16.mxu0 0
        %3339 = vmatpush1.bf16.msra.mxu0 0
        %3340 = vmatprep.subr.bf16.mxu0 0
        %3341 = vmatpush1.bf16.msra.mxu0 0
        %3342 = vmatprep.subr.bf16.mxu0 0
        %3343 = vmatpush1.bf16.msra.mxu0 0
        %3344 = vmatprep.subr.bf16.mxu0 0
        %3345 = vmatpush1.bf16.msra.mxu0 0
        %3346 = vmatprep.subr.bf16.mxu0 0
        %3347 = vmatpush1.bf16.msra.mxu0 0
        %3348 = vmatprep.subr.bf16.mxu0 0
        %3349 = vmatpush1.bf16.msra.mxu0 0
        %3350 = vmatprep.subr.bf16.mxu0 0
        %3351 = vmatpush1.bf16.msra.mxu0 0
        %3352 = vmatprep.subr.bf16.mxu0 0
        %3353 = vmatpush1.bf16.msra.mxu0 0
        %3354 = vmatprep.subr.bf16.mxu0 0
        %3355 = vmatpush1.bf16.msra.mxu0 0
        %3356 = vmatprep.subr.bf16.mxu0 0
        %3357 = vmatpush1.bf16.msra.mxu0 0
        %3358 = vmatprep.subr.bf16.mxu0 0
        %3359 = vmatpush1.bf16.msra.mxu0 0
        %3360 = vmatprep.subr.bf16.mxu0 0
        %3361 = vmatpush1.bf16.msra.mxu0 0
        %3362 = vmatprep.subr.bf16.mxu0 0
        %3363 = vmatpush1.bf16.msra.mxu0 0
        %3364 = vmatprep.subr.bf16.mxu0 0
        %3365 = vmatpush1.bf16.msra.mxu0 0
        %3366 = vmatprep.subr.bf16.mxu0 0
        %3367 = vmatpush1.bf16.msra.mxu0 0
        %3368 = vmatprep.mubr.bf16.mxu0 0
        %3369 = vmatmul.mubr.bf16.gmra.mrb[0].mxu0 %v3331
        %v3370 = vpop.f32.mrb[0].mxu0
        %v3371 = vadd.f32 0.0, %v3370
        %v3372 = vpop.f32.mrb[0].mxu0
        %v3373 = vpop.f32.mrb[0].mxu0
        %v3374 = vpop.f32.mrb[0].mxu0
        %3375 = vdwg.mxu0
        %v3377 = vsel %vm1418, %v3323, 0
        %v3380 = vsel %vm1474, %v3327, 0
        %3382 = vmatprep.subr.bf16.mxu0 0
        %3383 = vmatpush1.bf16.msra.mxu0 %v3380
        %3384 = vmatprep.subr.bf16.mxu0 0
        %3385 = vmatpush1.bf16.msra.mxu0 0
        %3386 = vmatprep.subr.bf16.mxu0 0
        %3387 = vmatpush1.bf16.msra.mxu0 0
        %3388 = vmatprep.subr.bf16.mxu0 0
        %3389 = vmatpush1.bf16.msra.mxu0 0
        %3390 = vmatprep.subr.bf16.mxu0 0
        %3391 = vmatpush1.bf16.msra.mxu0 0
        %3392 = vmatprep.subr.bf16.mxu0 0
        %3393 = vmatpush1.bf16.msra.mxu0 0
        %3394 = vmatprep.subr.bf16.mxu0 0
        %3395 = vmatpush1.bf16.msra.mxu0 0
        %3396 = vmatprep.subr.bf16.mxu0 0
        %3397 = vmatpush1.bf16.msra.mxu0 0
        %3398 = vmatprep.subr.bf16.mxu0 0
        %3399 = vmatpush1.bf16.msra.mxu0 0
        %3400 = vmatprep.subr.bf16.mxu0 0
        %3401 = vmatpush1.bf16.msra.mxu0 0
        %3402 = vmatprep.subr.bf16.mxu0 0
        %3403 = vmatpush1.bf16.msra.mxu0 0
        %3404 = vmatprep.subr.bf16.mxu0 0
        %3405 = vmatpush1.bf16.msra.mxu0 0
        %3406 = vmatprep.subr.bf16.mxu0 0
        %3407 = vmatpush1.bf16.msra.mxu0 0
        %3408 = vmatprep.subr.bf16.mxu0 0
        %3409 = vmatpush1.bf16.msra.mxu0 0
        %3410 = vmatprep.subr.bf16.mxu0 0
        %3411 = vmatpush1.bf16.msra.mxu0 0
        %3412 = vmatprep.subr.bf16.mxu0 0
        %3413 = vmatpush1.bf16.msra.mxu0 0
        %3414 = vmatprep.mubr.bf16.mxu0 0
        %3415 = vmatmul.mubr.bf16.gmra.mrb[0].mxu0 %v3377
        %v3416 = vpop.f32.mrb[0].mxu0
        %v3417 = vadd.f32 0.0, %v3416
        %v3418 = vpop.f32.mrb[0].mxu0
        %v3419 = vpop.f32.mrb[0].mxu0
        %v3420 = vpop.f32.mrb[0].mxu0
        %3421 = vdwg.mxu0
        %v3423 = vsel %vm1418, %v3324, 0
        %v3426 = vsel %vm1474, %v3328, 0
        %3428 = vmatprep.subr.bf16.mxu0 0
        %3429 = vmatpush1.bf16.msra.mxu0 %v3426
        %3430 = vmatprep.subr.bf16.mxu0 0
        %3431 = vmatpush1.bf16.msra.mxu0 0
        %3432 = vmatprep.subr.bf16.mxu0 0
        %3433 = vmatpush1.bf16.msra.mxu0 0
        %3434 = vmatprep.subr.bf16.mxu0 0
        %3435 = vmatpush1.bf16.msra.mxu0 0
        %3436 = vmatprep.subr.bf16.mxu0 0
        %3437 = vmatpush1.bf16.msra.mxu0 0
        %3438 = vmatprep.subr.bf16.mxu0 0
        %3439 = vmatpush1.bf16.msra.mxu0 0
        %3440 = vmatprep.subr.bf16.mxu0 0
        %3441 = vmatpush1.bf16.msra.mxu0 0
        %3442 = vmatprep.subr.bf16.mxu0 0
        %3443 = vmatpush1.bf16.msra.mxu0 0
        %3444 = vmatprep.subr.bf16.mxu0 0
        %3445 = vmatpush1.bf16.msra.mxu0 0
        %3446 = vmatprep.subr.bf16.mxu0 0
        %3447 = vmatpush1.bf16.msra.mxu0 0
        %3448 = vmatprep.subr.bf16.mxu0 0
        %3449 = vmatpush1.bf16.msra.mxu0 0
        %3450 = vmatprep.subr.bf16.mxu0 0
        %3451 = vmatpush1.bf16.msra.mxu0 0
        %3452 = vmatprep.subr.bf16.mxu0 0
        %3453 = vmatpush1.bf16.msra.mxu0 0
        %3454 = vmatprep.subr.bf16.mxu0 0
        %3455 = vmatpush1.bf16.msra.mxu0 0
        %3456 = vmatprep.subr.bf16.mxu0 0
        %3457 = vmatpush1.bf16.msra.mxu0 0
        %3458 = vmatprep.subr.bf16.mxu0 0
        %3459 = vmatpush1.bf16.msra.mxu0 0
        %3460 = vmatprep.mubr.bf16.mxu0 0
        %3461 = vmatmul.mubr.bf16.gmra.mrb[0].mxu0 %v3423
        %v3462 = vpop.f32.mrb[0].mxu0
        %v3463 = vadd.f32 0.0, %v3462
        %v3464 = vpop.f32.mrb[0].mxu0
        %v3465 = vpop.f32.mrb[0].mxu0
        %v3466 = vpop.f32.mrb[0].mxu0
        %3467 = vdwg.mxu0
        %v3469 = vsel %vm1418, %v3325, 0
        %v3472 = vsel %vm1474, %v3329, 0
        %3474 = vmatprep.subr.bf16.mxu0 0
        %3475 = vmatpush1.bf16.msra.mxu0 %v3472
        %3476 = vmatprep.subr.bf16.mxu0 0
        %3477 = vmatpush1.bf16.msra.mxu0 0
        %3478 = vmatprep.subr.bf16.mxu0 0
        %3479 = vmatpush1.bf16.msra.mxu0 0
        %3480 = vmatprep.subr.bf16.mxu0 0
        %3481 = vmatpush1.bf16.msra.mxu0 0
        %3482 = vmatprep.subr.bf16.mxu0 0
        %3483 = vmatpush1.bf16.msra.mxu0 0
        %3484 = vmatprep.subr.bf16.mxu0 0
        %3485 = vmatpush1.bf16.msra.mxu0 0
        %3486 = vmatprep.subr.bf16.mxu0 0
        %3487 = vmatpush1.bf16.msra.mxu0 0
        %3488 = vmatprep.subr.bf16.mxu0 0
        %3489 = vmatpush1.bf16.msra.mxu0 0
        %3490 = vmatprep.subr.bf16.mxu0 0
        %3491 = vmatpush1.bf16.msra.mxu0 0
        %3492 = vmatprep.subr.bf16.mxu0 0
        %3493 = vmatpush1.bf16.msra.mxu0 0
        %3494 = vmatprep.subr.bf16.mxu0 0
        %3495 = vmatpush1.bf16.msra.mxu0 0
        %3496 = vmatprep.subr.bf16.mxu0 0
        %3497 = vmatpush1.bf16.msra.mxu0 0
        %3498 = vmatprep.subr.bf16.mxu0 0
        %3499 = vmatpush1.bf16.msra.mxu0 0
        %3500 = vmatprep.subr.bf16.mxu0 0
        %3501 = vmatpush1.bf16.msra.mxu0 0
        %3502 = vmatprep.subr.bf16.mxu0 0
        %3503 = vmatpush1.bf16.msra.mxu0 0
        %3504 = vmatprep.subr.bf16.mxu0 0
        %3505 = vmatpush1.bf16.msra.mxu0 0
        %3506 = vmatprep.mubr.bf16.mxu0 0
        %3507 = vmatmul.mubr.bf16.gmra.mrb[0].mxu0 %v3469
        %v3508 = vpop.f32.mrb[0].mxu0
        %v3509 = vadd.f32 0.0, %v3508
        %v3510 = vpop.f32.mrb[0].mxu0
        %v3511 = vpop.f32.mrb[0].mxu0
        %v3512 = vpop.f32.mrb[0].mxu0
        %3513 = vdwg.mxu0
        %v3514 = vsel %vm610, %v3371, 0.0
        %v3515 = vsel %vm610, %v3417, 0.0
        %v3516 = vadd.f32 %v3514, %v3515
        %v3517 = vsel %vm610, %v3463, 0.0
        %v3518 = vadd.f32 %v3516, %v3517
        %v3519 = vsel %vm610, %v3509, 0.0
        %v3520 = vadd.f32 %v3518, %v3519
        %v3521 = vadd.f32 %v2303, %v3520
        %v3522 = vsel %vm610, %v3521, 0.0
        %3523 = vadd.xlane.f32.xlu0 %v3522
        %v3524 = vpop.xlane.xlu0 %3523
        %v3525 = vmul.f32 %v3524, %v1667
        %v3526 = vsub.f32 %v3521, %v3525
        %v3527 = vmul.f32 %v3526, %v3526
        %v3528 = vsel %vm610, %v3527, 0.0
        %3529 = vadd.xlane.f32.xlu0 %v3528
        %v3530 = vpop.xlane.xlu0 %3529
        %v3531 = vmul.f32 %v3530, %v1667
        %v3532 = vadd.f32 %v3531, 1e-05
        %v3533 = vrsqrt.pop %v3532
        %v3534 = vmul.f32 %v3526, %v3533
        %v3535 = vlaneseq
        %v3536 = vshrl.u32 %v3535, 7
        %v3537 = vsub.s32 0, %v3536
        %v3538 = vrot.slane %v2385, %v3537
        %v3539 = vmul.f32 %v3534, %v3538
        %v3540 = vlaneseq
        %v3541 = vshrl.u32 %v3540, 7
        %v3542 = vsub.s32 3, %v3541
        %v3543 = vrot.slane %v2385, %v3542
        %v3544 = vadd.f32 %v3539, %v3543
        %s3545 = scalar_lea.vmem %s429, 32
        %v3546 = vld [vmem:[%s3545] sm:$0xf]
        %v3547 = vld [vmem:[%s3545 + $0x4] sm:$0xf]
        %v3548 = vld [vmem:[%s3545 + $0x8] sm:$0xf]
        %v3549 = vld [vmem:[%s3545 + $0xc] sm:$0xf]
        %s3550 = scalar_lea.vmem %s429, 48
        %v3551 = vld [vmem:[%s3550] sm:$0xf]
        %v3552 = vld [vmem:[%s3550 + $0x4] sm:$0xf]
        %v3553 = vld [vmem:[%s3550 + $0x8] sm:$0xf]
        %v3554 = vld [vmem:[%s3550 + $0xc] sm:$0xf]
        %v3555 = vpack.c.bf16 %v3544, %v3544
        %v3557 = vsel %vm610, %v3555, 0
        %v3560 = vsel %vm610, %v3546, 0
        %3562 = vmatprep.subr.bf16.mxu0 0
        %3563 = vmatpush1.bf16.xpose.msra.mxu0 %v3560
        %3564 = vmatprep.subr.bf16.mxu0 0
        %3565 = vmatpush1.bf16.xpose.msra.mxu0 0
        %3566 = vmatprep.subr.bf16.mxu0 0
        %3567 = vmatpush1.bf16.xpose.msra.mxu0 0
        %3568 = vmatprep.subr.bf16.mxu0 0
        %3569 = vmatpush1.bf16.xpose.msra.mxu0 0
        %3570 = vmatprep.subr.bf16.mxu0 0
        %3571 = vmatpush1.bf16.xpose.msra.mxu0 0
        %3572 = vmatprep.subr.bf16.mxu0 0
        %3573 = vmatpush1.bf16.xpose.msra.mxu0 0
        %3574 = vmatprep.subr.bf16.mxu0 0
        %3575 = vmatpush1.bf16.xpose.msra.mxu0 0
        %3576 = vmatprep.subr.bf16.mxu0 0
        %3577 = vmatpush1.bf16.xpose.msra.mxu0 0
        %3578 = vmatprep.subr.bf16.mxu0 0
        %3579 = vmatpush1.bf16.xpose.msra.mxu0 0
        %3580 = vmatprep.subr.bf16.mxu0 0
        %3581 = vmatpush1.bf16.xpose.msra.mxu0 0
        %3582 = vmatprep.subr.bf16.mxu0 0
        %3583 = vmatpush1.bf16.xpose.msra.mxu0 0
        %3584 = vmatprep.subr.bf16.mxu0 0
        %3585 = vmatpush1.bf16.xpose.msra.mxu0 0
        %3586 = vmatprep.subr.bf16.mxu0 0
        %3587 = vmatpush1.bf16.xpose.msra.mxu0 0
        %3588 = vmatprep.subr.bf16.mxu0 0
        %3589 = vmatpush1.bf16.xpose.msra.mxu0 0
        %3590 = vmatprep.subr.bf16.mxu0 0
        %3591 = vmatpush1.bf16.xpose.msra.mxu0 0
        %3592 = vmatprep.subr.bf16.mxu0 0
        %3593 = vmatpush1.bf16.xpose.msra.mxu0 0
        %3594 = vmatprep.mubr.bf16.mxu0 0
        %3595 = vmatmul.mubr.bf16.gmra.mrb[0].mxu0 %v3557
        %v3596 = vpop.f32.mrb[0].mxu0
        %v3597 = vadd.f32 %v1702, %v3596
        %v3598 = vpop.f32.mrb[0].mxu0
        %v3599 = vpop.f32.mrb[0].mxu0
        %v3600 = vpop.f32.mrb[0].mxu0
        %3601 = vdwg.mxu0
        %v3603 = vsel %vm610, %v3547, 0
        %3605 = vmatprep.subr.bf16.mxu0 0
        %3606 = vmatpush1.bf16.xpose.msra.mxu0 %v3603
        %3607 = vmatprep.subr.bf16.mxu0 0
        %3608 = vmatpush1.bf16.xpose.msra.mxu0 0
        %3609 = vmatprep.subr.bf16.mxu0 0
        %3610 = vmatpush1.bf16.xpose.msra.mxu0 0
        %3611 = vmatprep.subr.bf16.mxu0 0
        %3612 = vmatpush1.bf16.xpose.msra.mxu0 0
        %3613 = vmatprep.subr.bf16.mxu0 0
        %3614 = vmatpush1.bf16.xpose.msra.mxu0 0
        %3615 = vmatprep.subr.bf16.mxu0 0
        %3616 = vmatpush1.bf16.xpose.msra.mxu0 0
        %3617 = vmatprep.subr.bf16.mxu0 0
        %3618 = vmatpush1.bf16.xpose.msra.mxu0 0
        %3619 = vmatprep.subr.bf16.mxu0 0
        %3620 = vmatpush1.bf16.xpose.msra.mxu0 0
        %3621 = vmatprep.subr.bf16.mxu0 0
        %3622 = vmatpush1.bf16.xpose.msra.mxu0 0
        %3623 = vmatprep.subr.bf16.mxu0 0
        %3624 = vmatpush1.bf16.xpose.msra.mxu0 0
        %3625 = vmatprep.subr.bf16.mxu0 0
        %3626 = vmatpush1.bf16.xpose.msra.mxu0 0
        %3627 = vmatprep.subr.bf16.mxu0 0
        %3628 = vmatpush1.bf16.xpose.msra.mxu0 0
        %3629 = vmatprep.subr.bf16.mxu0 0
        %3630 = vmatpush1.bf16.xpose.msra.mxu0 0
        %3631 = vmatprep.subr.bf16.mxu0 0
        %3632 = vmatpush1.bf16.xpose.msra.mxu0 0
        %3633 = vmatprep.subr.bf16.mxu0 0
        %3634 = vmatpush1.bf16.xpose.msra.mxu0 0
        %3635 = vmatprep.subr.bf16.mxu0 0
        %3636 = vmatpush1.bf16.xpose.msra.mxu0 0
        %3637 = vmatprep.mubr.bf16.mxu0 0
        %3638 = vmatmul.mubr.bf16.gmra.mrb[0].mxu0 %v3557
        %v3639 = vpop.f32.mrb[0].mxu0
        %v3640 = vadd.f32 %v1702, %v3639
        %v3641 = vpop.f32.mrb[0].mxu0
        %v3642 = vpop.f32.mrb[0].mxu0
        %v3643 = vpop.f32.mrb[0].mxu0
        %3644 = vdwg.mxu0
        %v3646 = vsel %vm610, %v3548, 0
        %3648 = vmatprep.subr.bf16.mxu0 0
        %3649 = vmatpush1.bf16.xpose.msra.mxu0 %v3646
        %3650 = vmatprep.subr.bf16.mxu0 0
        %3651 = vmatpush1.bf16.xpose.msra.mxu0 0
        %3652 = vmatprep.subr.bf16.mxu0 0
        %3653 = vmatpush1.bf16.xpose.msra.mxu0 0
        %3654 = vmatprep.subr.bf16.mxu0 0
        %3655 = vmatpush1.bf16.xpose.msra.mxu0 0
        %3656 = vmatprep.subr.bf16.mxu0 0
        %3657 = vmatpush1.bf16.xpose.msra.mxu0 0
        %3658 = vmatprep.subr.bf16.mxu0 0
        %3659 = vmatpush1.bf16.xpose.msra.mxu0 0
        %3660 = vmatprep.subr.bf16.mxu0 0
        %3661 = vmatpush1.bf16.xpose.msra.mxu0 0
        %3662 = vmatprep.subr.bf16.mxu0 0
        %3663 = vmatpush1.bf16.xpose.msra.mxu0 0
        %3664 = vmatprep.subr.bf16.mxu0 0
        %3665 = vmatpush1.bf16.xpose.msra.mxu0 0
        %3666 = vmatprep.subr.bf16.mxu0 0
        %3667 = vmatpush1.bf16.xpose.msra.mxu0 0
        %3668 = vmatprep.subr.bf16.mxu0 0
        %3669 = vmatpush1.bf16.xpose.msra.mxu0 0
        %3670 = vmatprep.subr.bf16.mxu0 0
        %3671 = vmatpush1.bf16.xpose.msra.mxu0 0
        %3672 = vmatprep.subr.bf16.mxu0 0
        %3673 = vmatpush1.bf16.xpose.msra.mxu0 0
        %3674 = vmatprep.subr.bf16.mxu0 0
        %3675 = vmatpush1.bf16.xpose.msra.mxu0 0
        %3676 = vmatprep.subr.bf16.mxu0 0
        %3677 = vmatpush1.bf16.xpose.msra.mxu0 0
        %3678 = vmatprep.subr.bf16.mxu0 0
        %3679 = vmatpush1.bf16.xpose.msra.mxu0 0
        %3680 = vmatprep.mubr.bf16.mxu0 0
        %3681 = vmatmul.mubr.bf16.gmra.mrb[0].mxu0 %v3557
        %v3682 = vpop.f32.mrb[0].mxu0
        %v3683 = vadd.f32 %v1702, %v3682
        %v3684 = vpop.f32.mrb[0].mxu0
        %v3685 = vpop.f32.mrb[0].mxu0
        %v3686 = vpop.f32.mrb[0].mxu0
        %3687 = vdwg.mxu0
        %v3689 = vsel %vm610, %v3549, 0
        %3691 = vmatprep.subr.bf16.mxu0 0
        %3692 = vmatpush1.bf16.xpose.msra.mxu0 %v3689
        %3693 = vmatprep.subr.bf16.mxu0 0
        %3694 = vmatpush1.bf16.xpose.msra.mxu0 0
        %3695 = vmatprep.subr.bf16.mxu0 0
        %3696 = vmatpush1.bf16.xpose.msra.mxu0 0
        %3697 = vmatprep.subr.bf16.mxu0 0
        %3698 = vmatpush1.bf16.xpose.msra.mxu0 0
        %3699 = vmatprep.subr.bf16.mxu0 0
        %3700 = vmatpush1.bf16.xpose.msra.mxu0 0
        %3701 = vmatprep.subr.bf16.mxu0 0
        %3702 = vmatpush1.bf16.xpose.msra.mxu0 0
        %3703 = vmatprep.subr.bf16.mxu0 0
        %3704 = vmatpush1.bf16.xpose.msra.mxu0 0
        %3705 = vmatprep.subr.bf16.mxu0 0
        %3706 = vmatpush1.bf16.xpose.msra.mxu0 0
        %3707 = vmatprep.subr.bf16.mxu0 0
        %3708 = vmatpush1.bf16.xpose.msra.mxu0 0
        %3709 = vmatprep.subr.bf16.mxu0 0
        %3710 = vmatpush1.bf16.xpose.msra.mxu0 0
        %3711 = vmatprep.subr.bf16.mxu0 0
        %3712 = vmatpush1.bf16.xpose.msra.mxu0 0
        %3713 = vmatprep.subr.bf16.mxu0 0
        %3714 = vmatpush1.bf16.xpose.msra.mxu0 0
        %3715 = vmatprep.subr.bf16.mxu0 0
        %3716 = vmatpush1.bf16.xpose.msra.mxu0 0
        %3717 = vmatprep.subr.bf16.mxu0 0
        %3718 = vmatpush1.bf16.xpose.msra.mxu0 0
        %3719 = vmatprep.subr.bf16.mxu0 0
        %3720 = vmatpush1.bf16.xpose.msra.mxu0 0
        %3721 = vmatprep.subr.bf16.mxu0 0
        %3722 = vmatpush1.bf16.xpose.msra.mxu0 0
        %3723 = vmatprep.mubr.bf16.mxu0 0
        %3724 = vmatmul.mubr.bf16.gmra.mrb[0].mxu0 %v3557
        %v3725 = vpop.f32.mrb[0].mxu0
        %v3726 = vadd.f32 %v1702, %v3725
        %v3727 = vpop.f32.mrb[0].mxu0
        %v3728 = vpop.f32.mrb[0].mxu0
        %v3729 = vpop.f32.mrb[0].mxu0
        %3730 = vdwg.mxu0
        %v3731 = vsel %vm1418, %v3597, -inf
        %3732 = vmax.xlane.f32.xlu0 %v3731
        %v3733 = vpop.xlane.xlu0 %3732
        %v3734 = vsel %vm1418, %v3640, -inf
        %3735 = vmax.xlane.f32.xlu0 %v3734
        %v3736 = vpop.xlane.xlu0 %3735
        %v3737 = vsel %vm1418, %v3683, -inf
        %3738 = vmax.xlane.f32.xlu0 %v3737
        %v3739 = vpop.xlane.xlu0 %3738
        %v3740 = vsel %vm1418, %v3726, -inf
        %3741 = vmax.xlane.f32.xlu0 %v3740
        %v3742 = vpop.xlane.xlu0 %3741
        %v3743 = vsub.f32 %v3597, %v3733
        %v3744 = vsub.f32 %v3640, %v3736
        %v3745 = vsub.f32 %v3683, %v3739
        %v3746 = vsub.f32 %v3726, %v3742
        %v3747 = vmul.f32 %v3743, 1.442695
        %v3748 = vpow.pop %v3747
        %v3749 = vmul.f32 %v3744, 1.442695
        %v3750 = vpow.pop %v3749
        %v3751 = vmul.f32 %v3745, 1.442695
        %v3752 = vpow.pop %v3751
        %v3753 = vmul.f32 %v3746, 1.442695
        %v3754 = vpow.pop %v3753
        %v3755 = vsel %vm1418, %v3748, 0.0
        %3756 = vadd.xlane.f32.xlu0 %v3755
        %v3757 = vpop.xlane.xlu0 %3756
        %v3758 = vsel %vm1418, %v3750, 0.0
        %3759 = vadd.xlane.f32.xlu0 %v3758
        %v3760 = vpop.xlane.xlu0 %3759
        %v3761 = vsel %vm1418, %v3752, 0.0
        %3762 = vadd.xlane.f32.xlu0 %v3761
        %v3763 = vpop.xlane.xlu0 %3762
        %v3764 = vsel %vm1418, %v3754, 0.0
        %3765 = vadd.xlane.f32.xlu0 %v3764
        %v3766 = vpop.xlane.xlu0 %3765
        %v3767 = vrcp.pop %v3757
        %v3768 = vrcp.pop %v3760
        %v3769 = vrcp.pop %v3763
        %v3770 = vrcp.pop %v3766
        %v3771 = vmul.f32 %v3748, %v3767
        %v3772 = vmul.f32 %v3750, %v3768
        %v3773 = vmul.f32 %v3752, %v3769
        %v3774 = vmul.f32 %v3754, %v3770
        %v3775 = vpack.c.bf16 %v3771, %v3771
        %v3776 = vpack.c.bf16 %v3772, %v3772
        %v3777 = vpack.c.bf16 %v3773, %v3773
        %v3778 = vpack.c.bf16 %v3774, %v3774
        %v3780 = vsel %vm1418, %v3775, 0
        %v3783 = vsel %vm1474, %v3551, 0
        %3785 = vmatprep.subr.bf16.mxu0 0
        %3786 = vmatpush1.bf16.msra.mxu0 %v3783
        %3787 = vmatprep.subr.bf16.mxu0 0
        %3788 = vmatpush1.bf16.msra.mxu0 0
        %3789 = vmatprep.subr.bf16.mxu0 0
        %3790 = vmatpush1.bf16.msra.mxu0 0
        %3791 = vmatprep.subr.bf16.mxu0 0
        %3792 = vmatpush1.bf16.msra.mxu0 0
        %3793 = vmatprep.subr.bf16.mxu0 0
        %3794 = vmatpush1.bf16.msra.mxu0 0
        %3795 = vmatprep.subr.bf16.mxu0 0
        %3796 = vmatpush1.bf16.msra.mxu0 0
        %3797 = vmatprep.subr.bf16.mxu0 0
        %3798 = vmatpush1.bf16.msra.mxu0 0
        %3799 = vmatprep.subr.bf16.mxu0 0
        %3800 = vmatpush1.bf16.msra.mxu0 0
        %3801 = vmatprep.subr.bf16.mxu0 0
        %3802 = vmatpush1.bf16.msra.mxu0 0
        %3803 = vmatprep.subr.bf16.mxu0 0
        %3804 = vmatpush1.bf16.msra.mxu0 0
        %3805 = vmatprep.subr.bf16.mxu0 0
        %3806 = vmatpush1.bf16.msra.mxu0 0
        %3807 = vmatprep.subr.bf16.mxu0 0
        %3808 = vmatpush1.bf16.msra.mxu0 0
        %3809 = vmatprep.subr.bf16.mxu0 0
        %3810 = vmatpush1.bf16.msra.mxu0 0
        %3811 = vmatprep.subr.bf16.mxu0 0
        %3812 = vmatpush1.bf16.msra.mxu0 0
        %3813 = vmatprep.subr.bf16.mxu0 0
        %3814 = vmatpush1.bf16.msra.mxu0 0
        %3815 = vmatprep.subr.bf16.mxu0 0
        %3816 = vmatpush1.bf16.msra.mxu0 0
        %3817 = vmatprep.mubr.bf16.mxu0 0
        %3818 = vmatmul.mubr.bf16.gmra.mrb[0].mxu0 %v3780
        %v3819 = vpop.f32.mrb[0].mxu0
        %v3820 = vadd.f32 0.0, %v3819
        %v3821 = vpop.f32.mrb[0].mxu0
        %v3822 = vpop.f32.mrb[0].mxu0
        %v3823 = vpop.f32.mrb[0].mxu0
        %3824 = vdwg.mxu0
        %v3826 = vsel %vm1418, %v3776, 0
        %v3829 = vsel %vm1474, %v3552, 0
        %3831 = vmatprep.subr.bf16.mxu0 0
        %3832 = vmatpush1.bf16.msra.mxu0 %v3829
        %3833 = vmatprep.subr.bf16.mxu0 0
        %3834 = vmatpush1.bf16.msra.mxu0 0
        %3835 = vmatprep.subr.bf16.mxu0 0
        %3836 = vmatpush1.bf16.msra.mxu0 0
        %3837 = vmatprep.subr.bf16.mxu0 0
        %3838 = vmatpush1.bf16.msra.mxu0 0
        %3839 = vmatprep.subr.bf16.mxu0 0
        %3840 = vmatpush1.bf16.msra.mxu0 0
        %3841 = vmatprep.subr.bf16.mxu0 0
        %3842 = vmatpush1.bf16.msra.mxu0 0
        %3843 = vmatprep.subr.bf16.mxu0 0
        %3844 = vmatpush1.bf16.msra.mxu0 0
        %3845 = vmatprep.subr.bf16.mxu0 0
        %3846 = vmatpush1.bf16.msra.mxu0 0
        %3847 = vmatprep.subr.bf16.mxu0 0
        %3848 = vmatpush1.bf16.msra.mxu0 0
        %3849 = vmatprep.subr.bf16.mxu0 0
        %3850 = vmatpush1.bf16.msra.mxu0 0
        %3851 = vmatprep.subr.bf16.mxu0 0
        %3852 = vmatpush1.bf16.msra.mxu0 0
        %3853 = vmatprep.subr.bf16.mxu0 0
        %3854 = vmatpush1.bf16.msra.mxu0 0
        %3855 = vmatprep.subr.bf16.mxu0 0
        %3856 = vmatpush1.bf16.msra.mxu0 0
        %3857 = vmatprep.subr.bf16.mxu0 0
        %3858 = vmatpush1.bf16.msra.mxu0 0
        %3859 = vmatprep.subr.bf16.mxu0 0
        %3860 = vmatpush1.bf16.msra.mxu0 0
        %3861 = vmatprep.subr.bf16.mxu0 0
        %3862 = vmatpush1.bf16.msra.mxu0 0
        %3863 = vmatprep.mubr.bf16.mxu0 0
        %3864 = vmatmul.mubr.bf16.gmra.mrb[0].mxu0 %v3826
        %v3865 = vpop.f32.mrb[0].mxu0
        %v3866 = vadd.f32 0.0, %v3865
        %v3867 = vpop.f32.mrb[0].mxu0
        %v3868 = vpop.f32.mrb[0].mxu0
        %v3869 = vpop.f32.mrb[0].mxu0
        %3870 = vdwg.mxu0
        %v3872 = vsel %vm1418, %v3777, 0
        %v3875 = vsel %vm1474, %v3553, 0
        %3877 = vmatprep.subr.bf16.mxu0 0
        %3878 = vmatpush1.bf16.msra.mxu0 %v3875
        %3879 = vmatprep.subr.bf16.mxu0 0
        %3880 = vmatpush1.bf16.msra.mxu0 0
        %3881 = vmatprep.subr.bf16.mxu0 0
        %3882 = vmatpush1.bf16.msra.mxu0 0
        %3883 = vmatprep.subr.bf16.mxu0 0
        %3884 = vmatpush1.bf16.msra.mxu0 0
        %3885 = vmatprep.subr.bf16.mxu0 0
        %3886 = vmatpush1.bf16.msra.mxu0 0
        %3887 = vmatprep.subr.bf16.mxu0 0
        %3888 = vmatpush1.bf16.msra.mxu0 0
        %3889 = vmatprep.subr.bf16.mxu0 0
        %3890 = vmatpush1.bf16.msra.mxu0 0
        %3891 = vmatprep.subr.bf16.mxu0 0
        %3892 = vmatpush1.bf16.msra.mxu0 0
        %3893 = vmatprep.subr.bf16.mxu0 0
        %3894 = vmatpush1.bf16.msra.mxu0 0
        %3895 = vmatprep.subr.bf16.mxu0 0
        %3896 = vmatpush1.bf16.msra.mxu0 0
        %3897 = vmatprep.subr.bf16.mxu0 0
        %3898 = vmatpush1.bf16.msra.mxu0 0
        %3899 = vmatprep.subr.bf16.mxu0 0
        %3900 = vmatpush1.bf16.msra.mxu0 0
        %3901 = vmatprep.subr.bf16.mxu0 0
        %3902 = vmatpush1.bf16.msra.mxu0 0
        %3903 = vmatprep.subr.bf16.mxu0 0
        %3904 = vmatpush1.bf16.msra.mxu0 0
        %3905 = vmatprep.subr.bf16.mxu0 0
        %3906 = vmatpush1.bf16.msra.mxu0 0
        %3907 = vmatprep.subr.bf16.mxu0 0
        %3908 = vmatpush1.bf16.msra.mxu0 0
        %3909 = vmatprep.mubr.bf16.mxu0 0
        %3910 = vmatmul.mubr.bf16.gmra.mrb[0].mxu0 %v3872
        %v3911 = vpop.f32.mrb[0].mxu0
        %v3912 = vadd.f32 0.0, %v3911
        %v3913 = vpop.f32.mrb[0].mxu0
        %v3914 = vpop.f32.mrb[0].mxu0
        %v3915 = vpop.f32.mrb[0].mxu0
        %3916 = vdwg.mxu0
        %v3918 = vsel %vm1418, %v3778, 0
        %v3921 = vsel %vm1474, %v3554, 0
        %3923 = vmatprep.subr.bf16.mxu0 0
        %3924 = vmatpush1.bf16.msra.mxu0 %v3921
        %3925 = vmatprep.subr.bf16.mxu0 0
        %3926 = vmatpush1.bf16.msra.mxu0 0
        %3927 = vmatprep.subr.bf16.mxu0 0
        %3928 = vmatpush1.bf16.msra.mxu0 0
        %3929 = vmatprep.subr.bf16.mxu0 0
        %3930 = vmatpush1.bf16.msra.mxu0 0
        %3931 = vmatprep.subr.bf16.mxu0 0
        %3932 = vmatpush1.bf16.msra.mxu0 0
        %3933 = vmatprep.subr.bf16.mxu0 0
        %3934 = vmatpush1.bf16.msra.mxu0 0
        %3935 = vmatprep.subr.bf16.mxu0 0
        %3936 = vmatpush1.bf16.msra.mxu0 0
        %3937 = vmatprep.subr.bf16.mxu0 0
        %3938 = vmatpush1.bf16.msra.mxu0 0
        %3939 = vmatprep.subr.bf16.mxu0 0
        %3940 = vmatpush1.bf16.msra.mxu0 0
        %3941 = vmatprep.subr.bf16.mxu0 0
        %3942 = vmatpush1.bf16.msra.mxu0 0
        %3943 = vmatprep.subr.bf16.mxu0 0
        %3944 = vmatpush1.bf16.msra.mxu0 0
        %3945 = vmatprep.subr.bf16.mxu0 0
        %3946 = vmatpush1.bf16.msra.mxu0 0
        %3947 = vmatprep.subr.bf16.mxu0 0
        %3948 = vmatpush1.bf16.msra.mxu0 0
        %3949 = vmatprep.subr.bf16.mxu0 0
        %3950 = vmatpush1.bf16.msra.mxu0 0
        %3951 = vmatprep.subr.bf16.mxu0 0
        %3952 = vmatpush1.bf16.msra.mxu0 0
        %3953 = vmatprep.subr.bf16.mxu0 0
        %3954 = vmatpush1.bf16.msra.mxu0 0
        %3955 = vmatprep.mubr.bf16.mxu0 0
        %3956 = vmatmul.mubr.bf16.gmra.mrb[0].mxu0 %v3918
        %v3957 = vpop.f32.mrb[0].mxu0
        %v3958 = vadd.f32 0.0, %v3957
        %v3959 = vpop.f32.mrb[0].mxu0
        %v3960 = vpop.f32.mrb[0].mxu0
        %v3961 = vpop.f32.mrb[0].mxu0
        %3962 = vdwg.mxu0
        %v3963 = vsel %vm610, %v3820, 0.0
        %v3964 = vsel %vm610, %v3866, 0.0
        %v3965 = vadd.f32 %v3963, %v3964
        %v3966 = vsel %vm610, %v3912, 0.0
        %v3967 = vadd.f32 %v3965, %v3966
        %v3968 = vsel %vm610, %v3958, 0.0
        %v3969 = vadd.f32 %v3967, %v3968
        %v3970 = vadd.f32 %v3544, %v3969
        %v3971 = vsel %vm610, %v3970, 0.0
        %3972 = vadd.xlane.f32.xlu0 %v3971
        %v3973 = vpop.xlane.xlu0 %3972
        %v3974 = vmul.f32 %v3973, %v1667
        %v3975 = vsub.f32 %v3970, %v3974
        %v3976 = vmul.f32 %v3975, %v3975
        %v3977 = vsel %vm610, %v3976, 0.0
        %3978 = vadd.xlane.f32.xlu0 %v3977
        %v3979 = vpop.xlane.xlu0 %3978
        %v3980 = vmul.f32 %v3979, %v1667
        %v3981 = vadd.f32 %v3980, 1e-05
        %v3982 = vrsqrt.pop %v3981
        %v3983 = vmul.f32 %v3975, %v3982
        %v3984 = vlaneseq
        %v3985 = vshrl.u32 %v3984, 7
        %v3986 = vsub.s32 1, %v3985
        %v3987 = vrot.slane %v2385, %v3986
        %v3988 = vmul.f32 %v3983, %v3987
        %v3989 = vlaneseq
        %v3990 = vshrl.u32 %v3989, 7
        %v3991 = vsub.s32 4, %v3990
        %v3992 = vrot.slane %v2385, %v3991
        %v3993 = vadd.f32 %v3988, %v3992
        %v3994 = vpack.c.bf16 %v3993, %v3993
        %v3996 = vlaneseq
        %v3997 = vshrl.u32 %v3996, 7
        %v3998 = vsub.s32 0, %v3997
        %v3999 = vrot.slane %v2372, %v3998
        %v4005 = vunpack.c.l.b16 %v2367
        %v4006 = vunpack.c.l.b16 %v2368
        %v4007 = vunpack.c.l.b16 %v2369
        %v4008 = vunpack.c.l.b16 %v2370
        %v4009 = vpack.c.b16 %v4006, %v4005
        %v4010 = vpack.c.b16 %v4008, %v4007
        %v4014 = vsel %vm610, %v3994, 0
        %4016 = vmatprep.subr.bf16.mxu0 0
        %4017 = vmatpush1.bf16.msra.mxu0 %v4009
        %4018 = vmatprep.subr.bf16.mxu0 0
        %4019 = vmatpush1.bf16.msra.mxu0 %v4010
        %4020 = vmatprep.subr.bf16.mxu0 0
        %4021 = vmatpush1.bf16.msra.mxu0 0
        %4022 = vmatprep.subr.bf16.mxu0 0
        %4023 = vmatpush1.bf16.msra.mxu0 0
        %4024 = vmatprep.subr.bf16.mxu0 0
        %4025 = vmatpush1.bf16.msra.mxu0 0
        %4026 = vmatprep.subr.bf16.mxu0 0
        %4027 = vmatpush1.bf16.msra.mxu0 0
        %4028 = vmatprep.subr.bf16.mxu0 0
        %4029 = vmatpush1.bf16.msra.mxu0 0
        %4030 = vmatprep.subr.bf16.mxu0 0
        %4031 = vmatpush1.bf16.msra.mxu0 0
        %4032 = vmatprep.subr.bf16.mxu0 0
        %4033 = vmatpush1.bf16.msra.mxu0 0
        %4034 = vmatprep.subr.bf16.mxu0 0
        %4035 = vmatpush1.bf16.msra.mxu0 0
        %4036 = vmatprep.subr.bf16.mxu0 0
        %4037 = vmatpush1.bf16.msra.mxu0 0
        %4038 = vmatprep.subr.bf16.mxu0 0
        %4039 = vmatpush1.bf16.msra.mxu0 0
        %4040 = vmatprep.subr.bf16.mxu0 0
        %4041 = vmatpush1.bf16.msra.mxu0 0
        %4042 = vmatprep.subr.bf16.mxu0 0
        %4043 = vmatpush1.bf16.msra.mxu0 0
        %4044 = vmatprep.subr.bf16.mxu0 0
        %4045 = vmatpush1.bf16.msra.mxu0 0
        %4046 = vmatprep.subr.bf16.mxu0 0
        %4047 = vmatpush1.bf16.msra.mxu0 0
        %4048 = vmatprep.mubr.bf16.mxu0 0
        %4049 = vmatmul.mubr.bf16.gmra.mrb[0].mxu0 %v4014
        %v4050 = vpop.f32.mrb[0].mxu0
        %v4051 = vadd.f32 %v3999, %v4050
        %v4052 = vpop.f32.mrb[0].mxu0
        %v4053 = vpop.f32.mrb[0].mxu0
        %v4054 = vpop.f32.mrb[0].mxu0
        %4055 = vdwg.mxu0
        %v4056 = vmax.f32 %v4051, 0.0
        %v4057 = vpack.c.bf16 %v4056, %v4056
        %v4059 = vlaneseq
        %v4060 = vshrl.u32 %v4059, 7
        %v4061 = vsub.s32 0, %v4060
        %v4062 = vrot.slane %v2383, %v4061
        %v4072 = vunpack.c.l.b16 %v2374
        %v4073 = vunpack.c.l.b16 %v2375
        %v4074 = vunpack.c.l.b16 %v2376
        %v4075 = vunpack.c.l.b16 %v2377
        %v4076 = vunpack.c.l.b16 %v2378
        %v4077 = vunpack.c.l.b16 %v2379
        %v4078 = vunpack.c.l.b16 %v2380
        %v4079 = vunpack.c.l.b16 %v2381
        %v4080 = vpack.c.b16 %v4073, %v4072
        %v4081 = vpack.c.b16 %v4075, %v4074
        %v4082 = vpack.c.b16 %v4077, %v4076
        %v4083 = vpack.c.b16 %v4079, %v4078
        %v4089 = vsel %vm2236, %v4057, 0
        %4091 = vmatprep.subr.bf16.mxu0 0
        %4092 = vmatpush1.bf16.msra.mxu0 %v4080
        %4093 = vmatprep.subr.bf16.mxu0 0
        %4094 = vmatpush1.bf16.msra.mxu0 %v4081
        %4095 = vmatprep.subr.bf16.mxu0 0
        %4096 = vmatpush1.bf16.msra.mxu0 %v4082
        %4097 = vmatprep.subr.bf16.mxu0 0
        %4098 = vmatpush1.bf16.msra.mxu0 %v4083
        %4099 = vmatprep.subr.bf16.mxu0 0
        %4100 = vmatpush1.bf16.msra.mxu0 0
        %4101 = vmatprep.subr.bf16.mxu0 0
        %4102 = vmatpush1.bf16.msra.mxu0 0
        %4103 = vmatprep.subr.bf16.mxu0 0
        %4104 = vmatpush1.bf16.msra.mxu0 0
        %4105 = vmatprep.subr.bf16.mxu0 0
        %4106 = vmatpush1.bf16.msra.mxu0 0
        %4107 = vmatprep.subr.bf16.mxu0 0
        %4108 = vmatpush1.bf16.msra.mxu0 0
        %4109 = vmatprep.subr.bf16.mxu0 0
        %4110 = vmatpush1.bf16.msra.mxu0 0
        %4111 = vmatprep.subr.bf16.mxu0 0
        %4112 = vmatpush1.bf16.msra.mxu0 0
        %4113 = vmatprep.subr.bf16.mxu0 0
        %4114 = vmatpush1.bf16.msra.mxu0 0
        %4115 = vmatprep.subr.bf16.mxu0 0
        %4116 = vmatpush1.bf16.msra.mxu0 0
        %4117 = vmatprep.subr.bf16.mxu0 0
        %4118 = vmatpush1.bf16.msra.mxu0 0
        %4119 = vmatprep.subr.bf16.mxu0 0
        %4120 = vmatpush1.bf16.msra.mxu0 0
        %4121 = vmatprep.subr.bf16.mxu0 0
        %4122 = vmatpush1.bf16.msra.mxu0 0
        %4123 = vmatprep.mubr.bf16.mxu0 0
        %4124 = vmatmul.mubr.bf16.gmra.mrb[0].mxu0 %v4089
        %v4125 = vpop.f32.mrb[0].mxu0
        %v4126 = vadd.f32 %v4062, %v4125
        %v4127 = vpop.f32.mrb[0].mxu0
        %v4128 = vpop.f32.mrb[0].mxu0
        %v4129 = vpop.f32.mrb[0].mxu0
        %4130 = vdwg.mxu0
        %v4131 = vadd.f32 %v3993, %v4126
        %v4132 = vsel %vm610, %v4131, 0.0
        %4133 = vadd.xlane.f32.xlu0 %v4132
        %v4134 = vpop.xlane.xlu0 %4133
        %v4135 = vmul.f32 %v4134, %v1667
        %v4136 = vsub.f32 %v4131, %v4135
        %v4137 = vmul.f32 %v4136, %v4136
        %v4138 = vsel %vm610, %v4137, 0.0
        %4139 = vadd.xlane.f32.xlu0 %v4138
        %v4140 = vpop.xlane.xlu0 %4139
        %v4141 = vmul.f32 %v4140, %v1667
        %v4142 = vadd.f32 %v4141, 1e-05
        %v4143 = vrsqrt.pop %v4142
        %v4144 = vmul.f32 %v4136, %v4143
        %v4145 = vlaneseq
        %v4146 = vshrl.u32 %v4145, 7
        %v4147 = vsub.s32 2, %v4146
        %v4148 = vrot.slane %v2385, %v4147
        %v4149 = vmul.f32 %v4144, %v4148
        %v4150 = vlaneseq
        %v4151 = vshrl.u32 %v4150, 7
        %v4152 = vsub.s32 5, %v4151
        %v4153 = vrot.slane %v2385, %v4152
        %v4154 = vadd.f32 %v4149, %v4153
        %4155 = vst.msk [vmem:[%s414] sm:$0xff] %vm610, %v4154
        %s4156 = sand.u32 %s284, 1
        %s4157 = scalar_lea.sflag [#allocation3], %s4156
        %s4158 = sand.u32 %s284, 1
        %s4159 = smul.addr %s4158, 8
        %s4160 = scalar_lea.vmem [#allocation2], %s4159
        // Predicated region
        $region65: #{transformer_decoder.1} parent=63 // pred_check
          %p4161 = pneg %p294
        $region66: #{transformer_decoder.1} parent=63 // pred_check_branch
          %4163 = sbr.rel (%p4161) target = $region68
        $region67: #{transformer_decoder.1} parent=63 // pred_region
          %s4165 = ssub.s32 128, 128
          %4166 = vsyncadd %s4157, %s4165
          %s4167 = smul.addr %s25, 128
          %s4168 = scalar_lea.hbm %s11, %s4167
          %s4170 = sshll.u32 %s4160, 4
          %s4171 = int_to_ptr.vmem [resolvable:$true] %s4170
          %4173 = dma.vmem_to_hbm [thread:$0]  %s4171, 128, %s4168, %s4157
        $region68: #{transformer_decoder.1} parent=63 // pred_fallthru
          _
      $region64: #{transformer_decoder.1} parent=5 // pred_fallthru
        _
      %p4174 = scmp.le.s32.totalorder 2, %s20
      // Predicated region
      $region69: #{transformer_decoder.1} parent=5 // pred_check
        %p4175 = pneg %p4174
      $region70: #{transformer_decoder.1} parent=5 // pred_check_branch
        %4177 = sbr.rel (%p4175) target = $region72
      $region71: #{transformer_decoder.1} parent=5 // pred_region
        %s4178 = ssub.s32 %s20, 2
        // Predicated region
        $region73: #{transformer_decoder.1} parent=71 // pred_check
          %p4179 = pneg %p300
        $region74: #{transformer_decoder.1} parent=71 // pred_check_branch
          %4181 = sbr.rel (%p4179) target = $region76
        $region75: #{transformer_decoder.1} parent=71 // pred_region
          %s4182 = sand.u32 %s285, 1
          %s4183 = scalar_lea.sflag [#allocation3], %s4182
          %s4184 = sand.u32 %s285, 1
          %s4185 = smul.addr %s4184, 8
          %s4186 = scalar_lea.vmem [#allocation2], %s4185
          %4187 = dma.done %s4183, 128
        $region76: #{transformer_decoder.1} parent=71 // pred_fallthru
          _
      $region72: #{transformer_decoder.1} parent=5 // pred_fallthru
        _
    $region6: #{transformer_decoder.1} parent=1 // loop_footer
      %s24 = sadd.s32 1, %s20
    $region7: #{transformer_decoder.1} parent=1 // loop_footer_branch
      %19 = sbr.rel target = $region3
    $region8: #{transformer_decoder.1} parent=1 // loop_exit
      _
    %4188 = vsyncpa [#allocation3], 1
    %s4189 = scalar_lea.sflag [#allocation3], 1
    %4190 = vsyncpa %s4189, 1

</llo_original>
